<compile_context>
chip_gen: v7x
topology: tpu7x:2x2x1
jax: 0.10.0
libtpu: 0.0.40
codegen_flags: <defaults>
</compile_context>

<pallas_src>
import numpy as np
import jax
import jax.numpy as jnp
from jax import lax
from jax.experimental import pallas as pl
from jax.experimental.pallas import tpu as pltpu

WEATHER_KERNEL_1 = 8     # mid channels
WEATHER_KERNEL_2 = 12    # out channels
SEQ_LEN = 26
C_IN = 6

# Stage-1 window layout: (start position, #windows) for each branch's k=3 conv.
_BRANCH_WINDOWS = ((0, 11), (13, 3), (18, 2), (22, 2))
_N_WIN = sum(n for _, n in _BRANCH_WINDOWS)          # 18
_F_IN = C_IN * SEQ_LEN                               # 156
_F_H1 = _N_WIN * WEATHER_KERNEL_1                    # 144
_F_O2 = 5 * WEATHER_KERNEL_2                         # 60
_CHUNK = 512                                         # in-kernel row chunk


def _round_up(n, m):
    return ((n + m - 1) // m) * m


def _choose_batch_tile(B, b_tile):
    """Pick the batch tile.

    - B <= 1024: one full-array block (block dims == array dims, no (8,128)
      divisibility questions, negligible work anyway).
    - B  > 1024: a multiple of _CHUNK, capped at ~B/2 so the 1-D grid has at
      least 2 steps (lets dimension_semantics=('parallel',) use both v7x
      TensorCores) and at b_tile so per-step VMEM stays bounded.
    """
    if B <= 2 * _CHUNK:
        return B
    cap = (B // 2) // _CHUNK * _CHUNK
    return max(_CHUNK, min(_round_up(b_tile, _CHUNK), cap))


# --------------------------------- kernel -----------------------------------
def _weather_kernel(x_ref, w1_ref, b1_ref, w2_ref, b2_ref, o_ref):
    c2 = WEATHER_KERNEL_2
    bt = x_ref.shape[0]
    bc = _CHUNK if bt % _CHUNK == 0 else bt          # chunk rows (static)
    n_chunks = bt // bc

    def do_chunk(start, size):
        xc = x_ref[pl.ds(start, size), :]                            # (bc,156) bf16
        # stage 1: bf16 x bf16 -> f32 accumulate, bias + tanh in f32.
        z1 = jnp.dot(xc, w1_ref[...], preferred_element_type=jnp.float32)
        h1 = jnp.tanh(z1 + b1_ref[...])                              # (bc,144) f32
        # TODO(synk): on v6e/v7x the tanh could run in bf16 on the EUP; kept
        # f32 so the identical kernel is also accurate/legal on v5e.
        # stage 2: cast activations to bf16 for a single-pass MXU matmul.
        z2 = jnp.dot(h1.astype(jnp.bfloat16), w2_ref[...],
                     preferred_element_type=jnp.float32)
        o2 = jnp.tanh(z2 + b2_ref[...])                              # (bc,60) f32
        # Branch 13's final AvgPool(2,2): mean of its two tanh'ed conv2 windows.
        w13 = 0.5 * (o2[:, 0:c2] + o2[:, c2:2 * c2])                 # (bc,12)
        # Per-branch sub-slice stores directly into the (4, bt, 12) block.
        o_ref[0, pl.ds(start, size), :] = w13
        o_ref[1, pl.ds(start, size), :] = o2[:, 2 * c2:3 * c2]
        o_ref[2, pl.ds(start, size), :] = o2[:, 3 * c2:4 * c2]
        o_ref[3, pl.ds(start, size), :] = o2[:, 4 * c2:5 * c2]

    if n_chunks == 1:
        do_chunk(0, bt)
    else:
        def body(c, carry):
            do_chunk(pl.multiple_of(c * bc, bc), bc)
            return carry
        lax.fori_loop(0, n_chunks, body, 0)


# -------------------------------- wrapper -----------------------------------
def weather_inputs_forward(weather_ncw, packed, *, b_tile=4096):
    """weather_ncw: (B, 6, 26) in PyTorch NCW layout.  Returns (4, B, 12) f32."""
    w1, b1, w2, b2 = packed
    B = weather_ncw.shape[0]
    # Free, contiguous reshape (feature index = c*26 + pos); bf16 input stream.
    x = weather_ncw.reshape(B, _F_IN).astype(jnp.bfloat16)
    bt = _choose_batch_tile(B, b_tile)
    grid = (pl.cdiv(B, bt),)

    out = pl.pallas_call(
        _weather_kernel,
        out_shape=jax.ShapeDtypeStruct((4, B, WEATHER_KERNEL_2), jnp.float32),
        grid_spec=pltpu.PrefetchScalarGridSpec(
            num_scalar_prefetch=0,
            grid=grid,
            in_specs=[
                pl.BlockSpec((bt, _F_IN), lambda i: (i, 0)),         # bf16
                pl.BlockSpec((_F_IN, _F_H1), lambda i: (0, 0)),      # W1 bf16
                pl.BlockSpec((1, _F_H1), lambda i: (0, 0)),          # b1 f32
                pl.BlockSpec((_F_H1, _F_O2), lambda i: (0, 0)),      # W2 bf16
                pl.BlockSpec((1, _F_O2), lambda i: (0, 0)),          # b2 f32
            ],
            out_specs=pl.BlockSpec((4, bt, WEATHER_KERNEL_2),
                                   lambda i: (0, i, 0)),
        ),
        compiler_params=pltpu.CompilerParams(
            dimension_semantics=("parallel",),
            # > v5e's 16 MiB / v6e-v7x's 32 MiB default scoped limits, well
            # under v7x's 64 MiB physical VMEM (usage at bt=4096 is ~24 MiB).
            vmem_limit_bytes=48 << 20),
    )(x, w1, b1, w2, b2)
    return out


# -------------------- host-side weight packing (one time) -------------------
def pack_params(params):
    """Fold the 8 Conv1d layers + AvgPools into 2 dense matmuls.

    Returns (W1 bf16, b1 f32, W2 bf16, b2 f32)."""
    p = [(np.asarray(w, np.float32), np.asarray(b, np.float32).reshape(-1))
         for (w, b) in params]
    (w1, b1), (w2, b2), (w3, b3), (w4, b4), \
        (w5, b5), (w6, b6), (w7, b7), (w8, b8) = p
    c1, c2 = WEATHER_KERNEL_1, WEATHER_KERNEL_2
    win_off = np.cumsum([0] + [n for _, n in _BRANCH_WINDOWS])  # [0,11,14,16,18]

    # ---- stage 1: four first-layer k=3 convs as one (156, 144) matrix.
    W1 = np.zeros((_F_IN, _F_H1), np.float32)
    B1 = np.zeros((_F_H1,), np.float32)
    g = 0
    for (w, b), (start, n) in zip(((w1, b1), (w3, b3), (w5, b5), (w7, b7)),
                                  _BRANCH_WINDOWS):
        for wi in range(n):
            cols = slice(g * c1, (g + 1) * c1)
            for k in range(w.shape[0]):                       # k = 3
                rows = np.arange(C_IN) * SEQ_LEN + (start + wi + k)
                W1[rows, cols] += w[k]                        # (6, 8) block
            B1[cols] = b
            g += 1

    # ---- stage 2: AvgPool(2,2) + second conv fused into (144, 60).
    # Output column blocks: [b13 win0 | b13 win1 | b5 | b4_1 | b4_2].
    W2 = np.zeros((_F_H1, _F_O2), np.float32)
    B2 = np.zeros((_F_O2,), np.float32)
    # Branch 13: o2[s] = sum_k 0.5*(h1[2(s+k)] + h1[2(s+k)+1]) @ w2[k] + b2.
    # (s = 0, 1 only; s = 2 is dropped by the final AvgPool.)
    for s in range(2):
        cols = slice(s * c2, (s + 1) * c2)
        for k in range(3):
            for j in (2 * (s + k), 2 * (s + k) + 1):
                W2[j * c1:(j + 1) * c1, cols] += 0.5 * w2[k]
        B2[cols] = b2
    # k=1 branches: o = 0.5*(h1[g0] + h1[g0+1]) @ w + b.
    for bi, (wk, bk, g0) in enumerate(((w4, b4, win_off[1]),
                                       (w6, b6, win_off[2]),
                                       (w8, b8, win_off[3]))):
        cols = slice((2 + bi) * c2, (3 + bi) * c2)
        for j in (g0, g0 + 1):
            W2[j * c1:(j + 1) * c1, cols] += 0.5 * wk[0]
        B2[cols] = bk

    return (jnp.asarray(W1, dtype=jnp.bfloat16),
            jnp.asarray(B1, dtype=jnp.float32).reshape(1, -1),
            jnp.asarray(W2, dtype=jnp.bfloat16),
            jnp.asarray(B2, dtype=jnp.float32).reshape(1, -1))


# ------------------------- deterministic parameters -------------------------
def init_params(key):
    # PyTorch Conv1d shapes (out, in, k) -> stored here as (k, in, out) ("WIO").
    conv_shapes = [
        (6, WEATHER_KERNEL_1, 3),                  # conv1
        (WEATHER_KERNEL_1, WEATHER_KERNEL_2, 3),   # conv2
        (6, WEATHER_KERNEL_1, 3),                  # conv3
        (WEATHER_KERNEL_1, WEATHER_KERNEL_2, 1),   # conv4
        (6, WEATHER_KERNEL_1, 3),                  # conv5
        (WEATHER_KERNEL_1, WEATHER_KERNEL_2, 1),   # conv6
        (6, WEATHER_KERNEL_1, 3),                  # conv7
        (WEATHER_KERNEL_1, WEATHER_KERNEL_2, 1),   # conv8
    ]
    params = []
    for i, (cin, cout, k) in enumerate(conv_shapes):
        kw, kb = jax.random.split(jax.random.fold_in(key, i))
        bound = 1.0 / float(np.sqrt(cin * k))      # PyTorch default uniform bound
        w = jax.random.uniform(kw, (k, cin, cout), jnp.float32, -bound, bound)
        b = jax.random.uniform(kb, (1, cout), jnp.float32, -bound, bound)
        params.append((w, b))
    return params


# -------------------------- pure-JAX reference check ------------------------
def _ref_conv(x, w, b):
    y = lax.conv_general_dilated(x, w, window_strides=(1,), padding='VALID',
                                 dimension_numbers=('NWC', 'WIO', 'NWC'))
    return jnp.tanh(y + b)


def _ref_pool(x):
    return lax.reduce_window(x, 0.0, lax.add, (1, 2, 1), (1, 2, 1), 'VALID') * 0.5


def weather_inputs_reference(weather_ncw, params):
    x = jnp.transpose(weather_ncw.astype(jnp.float32), (0, 2, 1))
    (w1, b1), (w2, b2), (w3, b3), (w4, b4), \
        (w5, b5), (w6, b6), (w7, b7), (w8, b8) = params
    o13 = _ref_pool(_ref_conv(_ref_pool(_ref_conv(x[:, 0:13], w1, b1)), w2, b2))[:, 0, :]
    o5 = _ref_conv(_ref_pool(_ref_conv(x[:, 13:18], w3, b3)), w4, b4)[:, 0, :]
    o41 = _ref_conv(_ref_pool(_ref_conv(x[:, 18:22], w5, b5)), w6, b6)[:, 0, :]
    o42 = _ref_conv(_ref_pool(_ref_conv(x[:, 22:26], w7, b7)), w8, b8)[:, 0, :]
    return jnp.stack([o13, o5, o41, o42], axis=0)


# ----------------------------------- main ------------------------------------
if __name__ == "__main__":
    key = jax.random.PRNGKey(0)
    pkey, dkey = jax.random.split(key)
    params = init_params(pkey)
    packed = pack_params(params)

    # 2176: multi-step grid, 512-row inner chunking, partial final block.
    # 1000: single full-array block with a non-multiple-of-8 batch.
    #    5: tiny batch (block dims == array dims).
    for B in (2176, 1000, 5):
        weather = jax.random.normal(jax.random.fold_in(dkey, B),
                                    (B, C_IN, SEQ_LEN), jnp.bfloat16)  # NCW
        out = jax.block_until_ready(weather_inputs_forward(weather, packed))
        ref = weather_inputs_reference(weather, params)
        assert out.shape == (4, B, WEATHER_KERNEL_2)
        assert out.dtype == jnp.float32
        # bf16 matmul operands -> relaxed tolerance (outputs are tanh-bounded).
        np.testing.assert_allclose(np.asarray(out), np.asarray(ref),
                                   atol=3e-2, rtol=3e-2)
    print("KERNEL_OK")
</pallas_src>

<mosaic_0001>
module attributes {stable_mosaic.version = 11 : i64} {
  func.func @_weather_kernel(%arg0: i32, %arg1: memref<1024x156xbf16, #tpu.memory_space<vmem>>, %arg2: memref<156x144xbf16, #tpu.memory_space<vmem>>, %arg3: memref<1x144xf32, #tpu.memory_space<vmem>>, %arg4: memref<144x60xbf16, #tpu.memory_space<vmem>>, %arg5: memref<1x60xf32, #tpu.memory_space<vmem>>, %arg6: memref<4x1024x12xf32, #tpu.memory_space<vmem>>) attributes {dimension_semantics = [#tpu.dimension_semantics<parallel>], iteration_bounds = array<i64: 3>, scalar_prefetch = 0 : i64, scratch_operands = 0 : i64, tpu.core_type = #tpu.core_type<tc>, window_params = [{transform_indices = @transform_0, window_bounds = array<i64: 1024, 156>}, {pipeline_mode = #tpu.pipeline_mode<synchronous>, transform_indices = @transform_1, window_bounds = array<i64: 156, 144>}, {pipeline_mode = #tpu.pipeline_mode<synchronous>, transform_indices = @transform_2, window_bounds = array<i64: 1, 144>}, {pipeline_mode = #tpu.pipeline_mode<synchronous>, transform_indices = @transform_3, window_bounds = array<i64: 144, 60>}, {pipeline_mode = #tpu.pipeline_mode<synchronous>, transform_indices = @transform_4, window_bounds = array<i64: 1, 60>}, {transform_indices = @transform_5, window_bounds = array<i64: 4, 1024, 12>}]} {
    %c0_i32 = arith.constant 0 : i32
    %c2_i32 = arith.constant 2 : i32
    %0 = arith.addi %c0_i32, %c2_i32 : i32
    %c1_i32 = arith.constant 1 : i32
    scf.for %arg7 = %c0_i32 to %0 step %c1_i32  : i32 {
      %c512_i32 = arith.constant 512 : i32
      %1 = arith.muli %arg7, %c512_i32 : i32
      %2 = tpu.assume_multiple %1, 512 : i32
      %3 = arith.index_cast %2 : i32 to index
      %c0 = arith.constant 0 : index
      %4 = vector.load %arg1[%3, %c0] : memref<1024x156xbf16, #tpu.memory_space<vmem>>, vector<512x156xbf16>
      %c0_1 = arith.constant 0 : index
      %c0_2 = arith.constant 0 : index
      %5 = vector.load %arg2[%c0_1, %c0_2] : memref<156x144xbf16, #tpu.memory_space<vmem>>, vector<156x144xbf16>
      %cst = arith.constant dense<0.000000e+00> : vector<512x144xf32>
      %6 = tpu.matmul %4, %5, %cst {dimension_numbers = #tpu.dot_dimension_numbers<[1], [0], [0], [1], [0, 0, 1, 1], [], []>} : vector<512x156xbf16>, vector<156x144xbf16>, vector<512x144xf32> -> vector<512x144xf32>
      %c0_3 = arith.constant 0 : index
      %c0_4 = arith.constant 0 : index
      %7 = vector.load %arg3[%c0_3, %c0_4] : memref<1x144xf32, #tpu.memory_space<vmem>>, vector<1x144xf32>
      %8 = vector.broadcast %7 : vector<1x144xf32> to vector<512x144xf32>
      %9 = arith.addf %6, %8 : vector<512x144xf32>
      %10 = math.tanh %9 : vector<512x144xf32>
      %11 = arith.truncf %10 : vector<512x144xf32> to vector<512x144xbf16>
      %c0_5 = arith.constant 0 : index
      %c0_6 = arith.constant 0 : index
      %12 = vector.load %arg4[%c0_5, %c0_6] : memref<144x60xbf16, #tpu.memory_space<vmem>>, vector<144x60xbf16>
      %cst_7 = arith.constant dense<0.000000e+00> : vector<512x60xf32>
      %13 = tpu.matmul %11, %12, %cst_7 {dimension_numbers = #tpu.dot_dimension_numbers<[1], [0], [0], [1], [0, 0, 1, 1], [], []>} : vector<512x144xbf16>, vector<144x60xbf16>, vector<512x60xf32> -> vector<512x60xf32>
      %c0_8 = arith.constant 0 : index
      %c0_9 = arith.constant 0 : index
      %14 = vector.load %arg5[%c0_8, %c0_9] : memref<1x60xf32, #tpu.memory_space<vmem>>, vector<1x60xf32>
      %15 = vector.broadcast %14 : vector<1x60xf32> to vector<512x60xf32>
      %16 = arith.addf %13, %15 : vector<512x60xf32>
      %17 = math.tanh %16 : vector<512x60xf32>
      %18 = vector.extract_strided_slice %17 {offsets = [0, 0], sizes = [512, 12], strides = [1, 1]} : vector<512x60xf32> to vector<512x12xf32>
      %19 = vector.extract_strided_slice %17 {offsets = [0, 12], sizes = [512, 12], strides = [1, 1]} : vector<512x60xf32> to vector<512x12xf32>
      %20 = arith.addf %18, %19 : vector<512x12xf32>
      %cst_10 = arith.constant 5.000000e-01 : f32
      %21 = vector.broadcast %cst_10 : f32 to vector<512x12xf32>
      %22 = arith.mulf %21, %20 : vector<512x12xf32>
      %c0_11 = arith.constant 0 : index
      %23 = arith.index_cast %2 : i32 to index
      %c0_12 = arith.constant 0 : index
      %24 = vector.load %arg6[%c0_11, %23, %c0_12] : memref<4x1024x12xf32, #tpu.memory_space<vmem>>, vector<1x512x12xf32>
      %25 = vector.shape_cast %24 : vector<1x512x12xf32> to vector<512x12xf32>
      %26 = vector.shape_cast %22 : vector<512x12xf32> to vector<1x512x12xf32>
      tpu.vector_store %arg6[%c0_11, %23, %c0_12], %26 {strides = array<i32>} : memref<4x1024x12xf32, #tpu.memory_space<vmem>>, vector<1x512x12xf32>,
      %27 = vector.extract_strided_slice %17 {offsets = [0, 24], sizes = [512, 12], strides = [1, 1]} : vector<512x60xf32> to vector<512x12xf32>
      %c1 = arith.constant 1 : index
      %28 = arith.index_cast %2 : i32 to index
      %c0_13 = arith.constant 0 : index
      %29 = vector.load %arg6[%c1, %28, %c0_13] : memref<4x1024x12xf32, #tpu.memory_space<vmem>>, vector<1x512x12xf32>
      %30 = vector.shape_cast %29 : vector<1x512x12xf32> to vector<512x12xf32>
      %31 = vector.shape_cast %27 : vector<512x12xf32> to vector<1x512x12xf32>
      tpu.vector_store %arg6[%c1, %28, %c0_13], %31 {strides = array<i32>} : memref<4x1024x12xf32, #tpu.memory_space<vmem>>, vector<1x512x12xf32>,
      %32 = vector.extract_strided_slice %17 {offsets = [0, 36], sizes = [512, 12], strides = [1, 1]} : vector<512x60xf32> to vector<512x12xf32>
      %c2 = arith.constant 2 : index
      %33 = arith.index_cast %2 : i32 to index
      %c0_14 = arith.constant 0 : index
      %34 = vector.load %arg6[%c2, %33, %c0_14] : memref<4x1024x12xf32, #tpu.memory_space<vmem>>, vector<1x512x12xf32>
      %35 = vector.shape_cast %34 : vector<1x512x12xf32> to vector<512x12xf32>
      %36 = vector.shape_cast %32 : vector<512x12xf32> to vector<1x512x12xf32>
      tpu.vector_store %arg6[%c2, %33, %c0_14], %36 {strides = array<i32>} : memref<4x1024x12xf32, #tpu.memory_space<vmem>>, vector<1x512x12xf32>,
      %37 = vector.extract_strided_slice %17 {offsets = [0, 48], sizes = [512, 12], strides = [1, 1]} : vector<512x60xf32> to vector<512x12xf32>
      %c3 = arith.constant 3 : index
      %38 = arith.index_cast %2 : i32 to index
      %c0_15 = arith.constant 0 : index
      %39 = vector.load %arg6[%c3, %38, %c0_15] : memref<4x1024x12xf32, #tpu.memory_space<vmem>>, vector<1x512x12xf32>
      %40 = vector.shape_cast %39 : vector<1x512x12xf32> to vector<512x12xf32>
      %41 = vector.shape_cast %37 : vector<512x12xf32> to vector<1x512x12xf32>
      tpu.vector_store %arg6[%c3, %38, %c0_15], %41 {strides = array<i32>} : memref<4x1024x12xf32, #tpu.memory_space<vmem>>, vector<1x512x12xf32>,
    }
    %c2_i32_0 = arith.constant 2 : i32
    return
  }
  func.func @transform_0(%arg0: i32) -> (i32, i32) {
    %c0_i32 = arith.constant 0 : i32
    %c0_i32_0 = arith.constant 0 : i32
    return %arg0, %c0_i32 : i32, i32
  }
  func.func @transform_1(%arg0: i32) -> (i32, i32) {
    %c0_i32 = arith.constant 0 : i32
    %c0_i32_0 = arith.constant 0 : i32
    %c0_i32_1 = arith.constant 0 : i32
    return %c0_i32, %c0_i32_0 : i32, i32
  }
  func.func @transform_2(%arg0: i32) -> (i32, i32) {
    %c0_i32 = arith.constant 0 : i32
    %c0_i32_0 = arith.constant 0 : i32
    %c0_i32_1 = arith.constant 0 : i32
    return %c0_i32, %c0_i32_0 : i32, i32
  }
  func.func @transform_3(%arg0: i32) -> (i32, i32) {
    %c0_i32 = arith.constant 0 : i32
    %c0_i32_0 = arith.constant 0 : i32
    %c0_i32_1 = arith.constant 0 : i32
    return %c0_i32, %c0_i32_0 : i32, i32
  }
  func.func @transform_4(%arg0: i32) -> (i32, i32) {
    %c0_i32 = arith.constant 0 : i32
    %c0_i32_0 = arith.constant 0 : i32
    %c0_i32_1 = arith.constant 0 : i32
    return %c0_i32, %c0_i32_0 : i32, i32
  }
  func.func @transform_5(%arg0: i32) -> (i32, i32, i32) {
    %c0_i32 = arith.constant 0 : i32
    %c0_i32_0 = arith.constant 0 : i32
    %c0_i32_1 = arith.constant 0 : i32
    return %c0_i32, %arg0, %c0_i32_0 : i32, i32, i32
  }
}

</mosaic_0001>

<llo_original>
// kernel: tpu_custom_call.1
$region0: #{tpu_custom_call.1}
  #allocation0 [shape = 'u32[]', space=smem, size = 0x4, offset = 0x4, fixed_abs, tag = 'smem constant byte address 0x4 - core index']
  #allocation1 [shape = 'u32[144,128]{1,0:T(1,128)}', space=vmem, size = 0x12000, scoped, tag = 'internal scratch']
  %s0 = inlined_call_operand.vmem [shape: bf16[2176,156], index: 0, kind: input, shape index: {}]
  %s1 = inlined_call_operand.vmem [shape: bf16[156,144], index: 1, kind: input, shape index: {}]
  %s2 = inlined_call_operand.hbm [shape: f32[1,144], index: 2, kind: input, shape index: {}]
  %s3 = inlined_call_operand.vmem [shape: bf16[144,60], index: 3, kind: input, shape index: {}]
  %s4 = inlined_call_operand.hbm [shape: f32[1,60], index: 4, kind: input, shape index: {}]
  %s5 = inlined_call_operand.vmem [shape: f32[4,2176,12], index: 5, kind: output, shape index: {}]
  %s6 = sld [smem:[#allocation0]]
  $region116: #{tpu_custom_call.1} parent=0
    _
  %s8 = ssub.s32 1, %s6
  %s9 = scalar_select 0, %s8, %s6
  $region1: #{tpu_custom_call.1} parent=0
    #allocation2 [shape = 'u8[1024]{0}', space=vmem, size = 0x400, scoped, tag = 'input window, operand 2, single buffered']
    #allocation3 [shape = 's32[2]{0}', space=sflag, size = 0x8, scoped, tag = 'scoped memory for tpu_custom_call.1']
    #allocation4 [shape = 'u8[512]{0}', space=vmem, size = 0x400, scoped, tag = 'input window, operand 4, single buffered']
    #allocation5 [shape = 's32[1]{0}', space=sflag, size = 0x4, scoped, tag = 'scoped memory for tpu_custom_call.1']
    #allocation6 [shape = 'u8[4194304]{0}', space=vmem, size = 0x400000, scoped, tag = 'output window, operand 0']
    %10 = vsyncpa [#allocation3], 0
    %11 = vsyncpa [#allocation5], 0
    loop: start=0, step=1, limit=5
    $region2: #{tpu_custom_call.1} parent=1 // loop_pre_header
      _
    $region3: #{tpu_custom_call.1} parent=1 // loop_header
      %s13 = sphi 0, %s17
      %p14 = scmp.ge.s32.totalorder %s13, 5
      %s23 = sphi 0, %s25
      %s26 = sphi 0, %s23
      %s27 = sphi 0, %s26
      %s43 = sphi 0, %s27
      %s47 = sphi 0, %s47
      %s49 = sphi 0, %s47
      %s50 = sphi 0, %s49
      %s64 = sphi 0, %s50
      %s68 = sphi 0, %s68
      %s70 = sphi 0, %s68
      %s71 = sphi 0, %s70
      %s85 = sphi 0, %s71
      %s89 = sphi 0, %s89
      %s91 = sphi 0, %s89
      %s92 = sphi 0, %s91
      %s106 = sphi 0, %s92
      %s110 = sphi 0, %s110
      %s112 = sphi 0, %s110
      %s113 = sphi 0, %s112
      %s127 = sphi 0, %s113
      %s133 = sphi 0, %s135
      %s136 = sphi 0, %s133
      %s137 = sphi 0, %s136
      %s153 = sphi 0, %s137
    $region4: #{tpu_custom_call.1} parent=1 // loop_header_branch
      %16 = sbr.rel (%p14) target = $region8
    $region5: #{tpu_custom_call.1} parent=1 // loop_body
      %s18 = ssub.s32 %s13, 1
      %s19 = ssub.s32 %s13, 2
      %s20 = sadd.s32 %s13, 1
      %s21 = ssub.s32 %s13, %s20
      %p22 = scmp.eq.s32.totalorder %s21, 0
      %s24 = sadd.s32 %s23, 1
      %s25 = scalar_select %p22, %s23, %s24
      %p28 = pneg %p22
      %p29 = scmp.eq.s32.totalorder %s13, 2
      %p30 = por %p28, %p29
      %p31 = scmp.ne.s32.totalorder %s23, %s26
      %p32 = scmp.eq.s32.totalorder %s13, 0
      %p33 = por %p31, %p32
      %p34 = scmp.ne.s32.totalorder %s23, %s26
      %p35 = scmp.eq.s32.totalorder %s18, 2
      %p36 = por %p34, %p35
      %p37 = scmp.ne.s32.totalorder %s26, %s27
      %p38 = scmp.eq.s32.totalorder %s18, 0
      %p39 = por %p37, %p38
      %p40 = scmp.ne.s32.totalorder %s26, %s27
      %p41 = scmp.eq.s32.totalorder %s19, 2
      %p42 = por %p40, %p41
      %p44 = scmp.ne.s32.totalorder %s27, %s43
      %p45 = scmp.eq.s32.totalorder %s19, 0
      %p46 = por %p44, %p45
      %s48 = sadd.s32 %s47, 1
      %p51 = scmp.eq.s32.totalorder %s13, 2
      %p52 = scmp.ne.s32.totalorder %s47, %s49
      %p53 = scmp.eq.s32.totalorder %s13, 0
      %p54 = por %p52, %p53
      %p55 = scmp.ne.s32.totalorder %s47, %s49
      %p56 = scmp.eq.s32.totalorder %s18, 2
      %p57 = por %p55, %p56
      %p58 = scmp.ne.s32.totalorder %s49, %s50
      %p59 = scmp.eq.s32.totalorder %s18, 0
      %p60 = por %p58, %p59
      %p61 = scmp.ne.s32.totalorder %s49, %s50
      %p62 = scmp.eq.s32.totalorder %s19, 2
      %p63 = por %p61, %p62
      %p65 = scmp.ne.s32.totalorder %s50, %s64
      %p66 = scmp.eq.s32.totalorder %s19, 0
      %p67 = por %p65, %p66
      %s69 = sadd.s32 %s68, 1
      %p72 = scmp.eq.s32.totalorder %s13, 2
      %p73 = scmp.ne.s32.totalorder %s68, %s70
      %p74 = scmp.eq.s32.totalorder %s13, 0
      %p75 = por %p73, %p74
      %p76 = scmp.ne.s32.totalorder %s68, %s70
      %p77 = scmp.eq.s32.totalorder %s18, 2
      %p78 = por %p76, %p77
      %p79 = scmp.ne.s32.totalorder %s70, %s71
      %p80 = scmp.eq.s32.totalorder %s18, 0
      %p81 = por %p79, %p80
      %p82 = scmp.ne.s32.totalorder %s70, %s71
      %p83 = scmp.eq.s32.totalorder %s19, 2
      %p84 = por %p82, %p83
      %p86 = scmp.ne.s32.totalorder %s71, %s85
      %p87 = scmp.eq.s32.totalorder %s19, 0
      %p88 = por %p86, %p87
      %s90 = sadd.s32 %s89, 1
      %p93 = scmp.eq.s32.totalorder %s13, 2
      %p94 = scmp.ne.s32.totalorder %s89, %s91
      %p95 = scmp.eq.s32.totalorder %s13, 0
      %p96 = por %p94, %p95
      %p97 = scmp.ne.s32.totalorder %s89, %s91
      %p98 = scmp.eq.s32.totalorder %s18, 2
      %p99 = por %p97, %p98
      %p100 = scmp.ne.s32.totalorder %s91, %s92
      %p101 = scmp.eq.s32.totalorder %s18, 0
      %p102 = por %p100, %p101
      %p103 = scmp.ne.s32.totalorder %s91, %s92
      %p104 = scmp.eq.s32.totalorder %s19, 2
      %p105 = por %p103, %p104
      %p107 = scmp.ne.s32.totalorder %s92, %s106
      %p108 = scmp.eq.s32.totalorder %s19, 0
      %p109 = por %p107, %p108
      %s111 = sadd.s32 %s110, 1
      %p114 = scmp.eq.s32.totalorder %s13, 2
      %p115 = scmp.ne.s32.totalorder %s110, %s112
      %p116 = scmp.eq.s32.totalorder %s13, 0
      %p117 = por %p115, %p116
      %p118 = scmp.ne.s32.totalorder %s110, %s112
      %p119 = scmp.eq.s32.totalorder %s18, 2
      %p120 = por %p118, %p119
      %p121 = scmp.ne.s32.totalorder %s112, %s113
      %p122 = scmp.eq.s32.totalorder %s18, 0
      %p123 = por %p121, %p122
      %p124 = scmp.ne.s32.totalorder %s112, %s113
      %p125 = scmp.eq.s32.totalorder %s19, 2
      %p126 = por %p124, %p125
      %p128 = scmp.ne.s32.totalorder %s113, %s127
      %p129 = scmp.eq.s32.totalorder %s19, 0
      %p130 = por %p128, %p129
      %s131 = ssub.s32 %s13, %s20
      %p132 = scmp.eq.s32.totalorder %s131, 0
      %s134 = sadd.s32 %s133, 1
      %s135 = scalar_select %p132, %s133, %s134
      %p138 = pneg %p132
      %p139 = scmp.eq.s32.totalorder %s13, 2
      %p140 = por %p138, %p139
      %p141 = scmp.ne.s32.totalorder %s133, %s136
      %p142 = scmp.eq.s32.totalorder %s13, 0
      %p143 = por %p141, %p142
      %p144 = scmp.ne.s32.totalorder %s133, %s136
      %p145 = scmp.eq.s32.totalorder %s18, 2
      %p146 = por %p144, %p145
      %p147 = scmp.ne.s32.totalorder %s136, %s137
      %p148 = scmp.eq.s32.totalorder %s18, 0
      %p149 = por %p147, %p148
      %p150 = scmp.ne.s32.totalorder %s136, %s137
      %p151 = scmp.eq.s32.totalorder %s19, 2
      %p152 = por %p150, %p151
      %p154 = scmp.ne.s32.totalorder %s137, %s153
      %p155 = scmp.eq.s32.totalorder %s19, 0
      %p156 = por %p154, %p155
      %p157 = scmp.le.s32.totalorder 1, %s13
      %p158 = scmp.lt.s32.totalorder %s13, 4
      %p159 = pnand %p157, %p158
      %p160 = pneg %p159
      // Predicated region
      $region9: #{tpu_custom_call.1} parent=5 // pred_check
        _
      $region10: #{tpu_custom_call.1} parent=5 // pred_check_branch
        %162 = sbr.rel (%p159) target = $region12
      $region11: #{tpu_custom_call.1} parent=5 // pred_region
        %s163 = ssub.s32 %s13, 1
        // Predicated region
        $region13: #{tpu_custom_call.1} parent=11 // pred_check
          %p164 = pneg %p60
        $region14: #{tpu_custom_call.1} parent=11 // pred_check_branch
          %166 = sbr.rel (%p164) target = $region16
        $region15: #{tpu_custom_call.1} parent=11 // pred_region
          _
        $region16: #{tpu_custom_call.1} parent=11 // pred_fallthru
          _
        // Predicated region
        $region17: #{tpu_custom_call.1} parent=11 // pred_check
          %p167 = pneg %p81
        $region18: #{tpu_custom_call.1} parent=11 // pred_check_branch
          %169 = sbr.rel (%p167) target = $region20
        $region19: #{tpu_custom_call.1} parent=11 // pred_region
          %s171 = ssub.s32 32, 32
          %172 = vsyncadd [#allocation3], %s171
          %s174 = sshll.u32 [#allocation2], 4
          %s175 = int_to_ptr.vmem [resolvable:$true] %s174
          %177 = dma.hbm_to_vmem [thread:$0]  %s2, 32, %s175, [#allocation3]
        $region20: #{tpu_custom_call.1} parent=11 // pred_fallthru
          _
        // Predicated region
        $region21: #{tpu_custom_call.1} parent=11 // pred_check
          %p178 = pneg %p102
        $region22: #{tpu_custom_call.1} parent=11 // pred_check_branch
          %180 = sbr.rel (%p178) target = $region24
        $region23: #{tpu_custom_call.1} parent=11 // pred_region
          _
        $region24: #{tpu_custom_call.1} parent=11 // pred_fallthru
          _
        // Predicated region
        $region25: #{tpu_custom_call.1} parent=11 // pred_check
          %p181 = pneg %p123
        $region26: #{tpu_custom_call.1} parent=11 // pred_check_branch
          %183 = sbr.rel (%p181) target = $region28
        $region27: #{tpu_custom_call.1} parent=11 // pred_region
          %s185 = ssub.s32 16, 16
          %186 = vsyncadd [#allocation5], %s185
          %s188 = sshll.u32 [#allocation4], 4
          %s189 = int_to_ptr.vmem [resolvable:$true] %s188
          %191 = dma.hbm_to_vmem [thread:$0]  %s4, 16, %s189, [#allocation5]
        $region28: #{tpu_custom_call.1} parent=11 // pred_fallthru
          _
      $region12: #{tpu_custom_call.1} parent=5 // pred_fallthru
        _
      %p192 = scmp.lt.s32.totalorder %s13, 3
      // Predicated region
      $region29: #{tpu_custom_call.1} parent=5 // pred_check
        %p193 = pneg %p192
      $region30: #{tpu_custom_call.1} parent=5 // pred_check_branch
        %195 = sbr.rel (%p193) target = $region32
      $region31: #{tpu_custom_call.1} parent=5 // pred_region
        // Predicated region
        $region33: #{tpu_custom_call.1} parent=31 // pred_check
          %p196 = pneg %p33
        $region34: #{tpu_custom_call.1} parent=31 // pred_check_branch
          %198 = sbr.rel (%p196) target = $region36
        $region35: #{tpu_custom_call.1} parent=31 // pred_region
          %s199 = smul.u32 128, %s13
          %s200 = ssub.s32 272, %s199
          %p201 = scmp.lt.s32.totalorder %s200, 128
          %s202 = scalar_select %p201, %s200, 128
          %s203 = smul.u32 64, %s202
          %s204 = smul.u32 %s203, 2
          %p205 = scmp.lt.s32.totalorder %s199, 271
          %s206 = scalar_select %p205, %s199, 271
          %s207 = smul.addr %s206, 2
          %s208 = smul.addr %s207, 4
          %s209 = scalar_lea.vmem %s0, %s208
          %s210 = smul.u32 128, %s13
          %s211 = ssub.s32 272, %s210
          %p212 = scmp.lt.s32.totalorder %s211, 128
          %s213 = scalar_select %p212, %s211, 128
          %s214 = smul.u32 64, %s213
          %s215 = smul.u32 %s214, 2
        $region36: #{tpu_custom_call.1} parent=31 // pred_fallthru
          _
      $region32: #{tpu_custom_call.1} parent=5 // pred_fallthru
        _
      %p216 = scmp.le.s32.totalorder 1, %s13
      %p217 = scmp.lt.s32.totalorder %s13, 4
      %p218 = pnand %p216, %p217
      %p219 = pneg %p218
      // Predicated region
      $region37: #{tpu_custom_call.1} parent=5 // pred_check
        _
      $region38: #{tpu_custom_call.1} parent=5 // pred_check_branch
        %221 = sbr.rel (%p218) target = $region40
      $region39: #{tpu_custom_call.1} parent=5 // pred_region
        %s222 = ssub.s32 %s13, 1
        // Predicated region
        $region41: #{tpu_custom_call.1} parent=39 // pred_check
          %p223 = pneg %p81
        $region42: #{tpu_custom_call.1} parent=39 // pred_check_branch
          %225 = sbr.rel (%p223) target = $region44
        $region43: #{tpu_custom_call.1} parent=39 // pred_region
          %226 = dma.done [#allocation3], 32
        $region44: #{tpu_custom_call.1} parent=39 // pred_fallthru
          _
        // Predicated region
        $region45: #{tpu_custom_call.1} parent=39 // pred_check
          %p227 = pneg %p123
        $region46: #{tpu_custom_call.1} parent=39 // pred_check_branch
          %229 = sbr.rel (%p227) target = $region48
        $region47: #{tpu_custom_call.1} parent=39 // pred_region
          %230 = dma.done [#allocation5], 16
        $region48: #{tpu_custom_call.1} parent=39 // pred_fallthru
          _
        %s231 = smul.u32 128, %s18
        %s232 = ssub.s32 272, %s231
        %p233 = scmp.lt.s32.totalorder %s232, 128
        %s234 = scalar_select %p233, %s232, 128
        %s235 = smul.u32 64, %s234
        %s236 = smul.u32 %s235, 2
        %p237 = scmp.lt.s32.totalorder %s231, 271
        %s238 = scalar_select %p237, %s231, 271
        %s239 = smul.addr %s238, 2
        %s240 = smul.addr %s239, 4
        %s241 = scalar_lea.vmem %s0, %s240
        %p242 = pneg %p39
        %p243 = pneg %p36
        %p244 = pneg %p60
        %p245 = pneg %p57
        %p246 = pneg %p81
        %p247 = pneg %p78
        %p248 = pneg %p102
        %p249 = pneg %p99
        %p250 = pneg %p123
        %p251 = pneg %p120
        %p252 = pneg %p149
        %p253 = pneg %p146
        %s254 = sand.u32 %s136, 1
        %s255 = sand.u32 %s136, 1
        %s256 = smul.addr %s255, 4096
        %s257 = scalar_lea.vmem [#allocation6], %s256
        %s258 = smul.u32 128, %s18
        %s259 = ssub.s32 272, %s258
        %p260 = scmp.lt.s32.totalorder %s259, 128
        %s261 = scalar_select %p260, %s259, 128
        %s262 = smul.u32 64, %s261
        %s263 = smul.u32 %s262, 2
        %p264 = scmp.lt.s32.totalorder %s258, 271
        %s265 = scalar_select %p264, %s258, 271
        %s266 = smul.addr %s265, 2
        %s267 = smul.addr %s266, 4
        %s268 = scalar_lea.vmem %s0, %s267
        %s269 = smul.u32 128, %s18
        %s270 = ssub.s32 272, %s269
        %p271 = scmp.lt.s32.totalorder %s270, 128
        %s272 = scalar_select %p271, %s270, 128
        %s273 = smul.u32 64, %s272
        %s274 = smul.u32 %s273, 2
        %s275 = smul.u32 128, %s18
        %s276 = ssub.s32 272, %s275
        %p277 = scmp.lt.s32.totalorder %s276, 128
        %s278 = scalar_select %p277, %s276, 128
        %s279 = smul.u32 512, %s278
        loop: start=0, step=1, limit=2
        $region49: #{tpu_custom_call.1} parent=39 // loop_pre_header
          _
        $region50: #{tpu_custom_call.1} parent=39 // loop_header
          %s282 = sphi 0, %s286
          %p283 = scmp.ge.s32.totalorder %s282, 2
        $region51: #{tpu_custom_call.1} parent=39 // loop_header_branch
          %285 = sbr.rel (%p283) target = $region55
        $region52: #{tpu_custom_call.1} parent=39 // loop_body
          %s287 = smul.u32 %s282, 512
          %s288 = sshra.s32 %s287, 3
          %s289 = sand.u32 %s287, 7
          %s290 = smul.u32 %s288, 2
          %s291 = smul.addr %s290, 4
          %s292 = scalar_lea.vmem %s268, %s291
          %v293 = vld [vmem:[%s292] sm:$0xff]
          %v294 = vld [vmem:[%s292 + $0x8] sm:$0xff]
          %v295 = vld [vmem:[%s292 + $0x10] sm:$0xff]
          %v296 = vld [vmem:[%s292 + $0x18] sm:$0xff]
          %v297 = vld [vmem:[%s292 + $0x20] sm:$0xff]
          %v298 = vld [vmem:[%s292 + $0x28] sm:$0xff]
          %v299 = vld [vmem:[%s292 + $0x30] sm:$0xff]
          %v300 = vld [vmem:[%s292 + $0x38] sm:$0xff]
          %v301 = vld [vmem:[%s292 + $0x40] sm:$0xff]
          %v302 = vld [vmem:[%s292 + $0x48] sm:$0xff]
          %v303 = vld [vmem:[%s292 + $0x50] sm:$0xff]
          %v304 = vld [vmem:[%s292 + $0x58] sm:$0xff]
          %v305 = vld [vmem:[%s292 + $0x60] sm:$0xff]
          %v306 = vld [vmem:[%s292 + $0x68] sm:$0xff]
          %v307 = vld [vmem:[%s292 + $0x70] sm:$0xff]
          %v308 = vld [vmem:[%s292 + $0x78] sm:$0xff]
          %v309 = vld [vmem:[%s292 + $0x80] sm:$0xff]
          %v310 = vld [vmem:[%s292 + $0x88] sm:$0xff]
          %v311 = vld [vmem:[%s292 + $0x90] sm:$0xff]
          %v312 = vld [vmem:[%s292 + $0x98] sm:$0xff]
          %v313 = vld [vmem:[%s292 + $0xa0] sm:$0xff]
          %v314 = vld [vmem:[%s292 + $0xa8] sm:$0xff]
          %v315 = vld [vmem:[%s292 + $0xb0] sm:$0xff]
          %v316 = vld [vmem:[%s292 + $0xb8] sm:$0xff]
          %v317 = vld [vmem:[%s292 + $0xc0] sm:$0xff]
          %v318 = vld [vmem:[%s292 + $0xc8] sm:$0xff]
          %v319 = vld [vmem:[%s292 + $0xd0] sm:$0xff]
          %v320 = vld [vmem:[%s292 + $0xd8] sm:$0xff]
          %v321 = vld [vmem:[%s292 + $0xe0] sm:$0xff]
          %v322 = vld [vmem:[%s292 + $0xe8] sm:$0xff]
          %v323 = vld [vmem:[%s292 + $0xf0] sm:$0xff]
          %v324 = vld [vmem:[%s292 + $0xf8] sm:$0xff]
          %v325 = vld [vmem:[%s292 + $0x100] sm:$0xff]
          %v326 = vld [vmem:[%s292 + $0x108] sm:$0xff]
          %v327 = vld [vmem:[%s292 + $0x110] sm:$0xff]
          %v328 = vld [vmem:[%s292 + $0x118] sm:$0xff]
          %v329 = vld [vmem:[%s292 + $0x120] sm:$0xff]
          %v330 = vld [vmem:[%s292 + $0x128] sm:$0xff]
          %v331 = vld [vmem:[%s292 + $0x130] sm:$0xff]
          %v332 = vld [vmem:[%s292 + $0x138] sm:$0xff]
          %v333 = vld [vmem:[%s292 + $0x140] sm:$0xff]
          %v334 = vld [vmem:[%s292 + $0x148] sm:$0xff]
          %v335 = vld [vmem:[%s292 + $0x150] sm:$0xff]
          %v336 = vld [vmem:[%s292 + $0x158] sm:$0xff]
          %v337 = vld [vmem:[%s292 + $0x160] sm:$0xff]
          %v338 = vld [vmem:[%s292 + $0x168] sm:$0xff]
          %v339 = vld [vmem:[%s292 + $0x170] sm:$0xff]
          %v340 = vld [vmem:[%s292 + $0x178] sm:$0xff]
          %v341 = vld [vmem:[%s292 + $0x180] sm:$0xff]
          %v342 = vld [vmem:[%s292 + $0x188] sm:$0xff]
          %v343 = vld [vmem:[%s292 + $0x190] sm:$0xff]
          %v344 = vld [vmem:[%s292 + $0x198] sm:$0xff]
          %v345 = vld [vmem:[%s292 + $0x1a0] sm:$0xff]
          %v346 = vld [vmem:[%s292 + $0x1a8] sm:$0xff]
          %v347 = vld [vmem:[%s292 + $0x1b0] sm:$0xff]
          %v348 = vld [vmem:[%s292 + $0x1b8] sm:$0xff]
          %v349 = vld [vmem:[%s292 + $0x1c0] sm:$0xff]
          %v350 = vld [vmem:[%s292 + $0x1c8] sm:$0xff]
          %v351 = vld [vmem:[%s292 + $0x1d0] sm:$0xff]
          %v352 = vld [vmem:[%s292 + $0x1d8] sm:$0xff]
          %v353 = vld [vmem:[%s292 + $0x1e0] sm:$0xff]
          %v354 = vld [vmem:[%s292 + $0x1e8] sm:$0xff]
          %v355 = vld [vmem:[%s292 + $0x1f0] sm:$0xff]
          %v356 = vld [vmem:[%s292 + $0x1f8] sm:$0xff]
          %v357 = vld [vmem:[%s1] sm:$0xff]
          %v358 = vld [vmem:[%s1 + $0x8] sm:$0xff]
          %v359 = vld [vmem:[%s1 + $0x10] sm:$0xff]
          %v360 = vld [vmem:[%s1 + $0x18] sm:$0xff]
          %v361 = vld [vmem:[%s1 + $0x20] sm:$0xff]
          %v362 = vld [vmem:[%s1 + $0x28] sm:$0xff]
          %v363 = vld [vmem:[%s1 + $0x30] sm:$0xff]
          %v364 = vld [vmem:[%s1 + $0x38] sm:$0xff]
          %v365 = vld [vmem:[%s1 + $0x40] sm:$0xff]
          %v366 = vld [vmem:[%s1 + $0x48] sm:$0xff]
          %v367 = vld [vmem:[%s1 + $0x50] sm:$0xff]
          %v368 = vld [vmem:[%s1 + $0x58] sm:$0xff]
          %v369 = vld [vmem:[%s1 + $0x60] sm:$0xff]
          %v370 = vld [vmem:[%s1 + $0x68] sm:$0xff]
          %v371 = vld [vmem:[%s1 + $0x70] sm:$0xff]
          %v372 = vld [vmem:[%s1 + $0x78] sm:$0xff]
          %v373 = vld [vmem:[%s1 + $0x80] sm:$0xff]
          %v374 = vld [vmem:[%s1 + $0x88] sm:$0xff]
          %v375 = vld [vmem:[%s1 + $0x90] sm:$0xff]
          %v376 = vld [vmem:[%s1 + $0x98] sm:$0x33]
          %v377 = vld [vmem:[#allocation2] sm:$0x3]
          %v379 = vlaneseq
          %v380 = vshrl.u32 %v379, 7
          %v381 = vsub.s32 0, %v380
          %v382 = vrot.slane %v377, %v381
          %v383 = vlaneseq
          %v384 = vshrl.u32 %v383, 7
          %v385 = vsub.s32 1, %v384
          %v386 = vrot.slane %v377, %v385
          %v453 = vunpack.c.l.b16 %v293
          %v454 = vunpack.c.h.b16 %v293
          %v455 = vunpack.c.l.b16 %v294
          %v456 = vunpack.c.h.b16 %v294
          %v457 = vunpack.c.l.b16 %v295
          %v458 = vunpack.c.h.b16 %v295
          %v459 = vunpack.c.l.b16 %v296
          %v460 = vunpack.c.h.b16 %v296
          %v461 = vunpack.c.l.b16 %v297
          %v462 = vunpack.c.h.b16 %v297
          %v463 = vunpack.c.l.b16 %v298
          %v464 = vunpack.c.h.b16 %v298
          %v465 = vunpack.c.l.b16 %v299
          %v466 = vunpack.c.h.b16 %v299
          %v467 = vunpack.c.l.b16 %v300
          %v468 = vunpack.c.h.b16 %v300
          %v469 = vunpack.c.l.b16 %v301
          %v470 = vunpack.c.h.b16 %v301
          %v471 = vunpack.c.l.b16 %v302
          %v472 = vunpack.c.h.b16 %v302
          %v473 = vunpack.c.l.b16 %v303
          %v474 = vunpack.c.h.b16 %v303
          %v475 = vunpack.c.l.b16 %v304
          %v476 = vunpack.c.h.b16 %v304
          %v477 = vunpack.c.l.b16 %v305
          %v478 = vunpack.c.h.b16 %v305
          %v479 = vunpack.c.l.b16 %v306
          %v480 = vunpack.c.h.b16 %v306
          %v481 = vunpack.c.l.b16 %v307
          %v482 = vunpack.c.h.b16 %v307
          %v483 = vunpack.c.l.b16 %v308
          %v484 = vunpack.c.h.b16 %v308
          %v485 = vunpack.c.l.b16 %v309
          %v486 = vunpack.c.h.b16 %v309
          %v487 = vunpack.c.l.b16 %v310
          %v488 = vunpack.c.h.b16 %v310
          %v489 = vunpack.c.l.b16 %v311
          %v490 = vunpack.c.h.b16 %v311
          %v491 = vunpack.c.l.b16 %v312
          %v492 = vunpack.c.h.b16 %v312
          %v493 = vunpack.c.l.b16 %v313
          %v494 = vunpack.c.h.b16 %v313
          %v495 = vunpack.c.l.b16 %v314
          %v496 = vunpack.c.h.b16 %v314
          %v497 = vunpack.c.l.b16 %v315
          %v498 = vunpack.c.h.b16 %v315
          %v499 = vunpack.c.l.b16 %v316
          %v500 = vunpack.c.h.b16 %v316
          %v501 = vunpack.c.l.b16 %v317
          %v502 = vunpack.c.h.b16 %v317
          %v503 = vunpack.c.l.b16 %v318
          %v504 = vunpack.c.h.b16 %v318
          %v505 = vunpack.c.l.b16 %v319
          %v506 = vunpack.c.h.b16 %v319
          %v507 = vunpack.c.l.b16 %v320
          %v508 = vunpack.c.h.b16 %v320
          %v509 = vunpack.c.l.b16 %v321
          %v510 = vunpack.c.h.b16 %v321
          %v511 = vunpack.c.l.b16 %v322
          %v512 = vunpack.c.h.b16 %v322
          %v513 = vunpack.c.l.b16 %v323
          %v514 = vunpack.c.h.b16 %v323
          %v515 = vunpack.c.l.b16 %v324
          %v516 = vunpack.c.h.b16 %v324
          %v517 = vunpack.c.l.b16 %v325
          %v518 = vunpack.c.h.b16 %v325
          %v519 = vunpack.c.l.b16 %v326
          %v520 = vunpack.c.h.b16 %v326
          %v521 = vunpack.c.l.b16 %v327
          %v522 = vunpack.c.h.b16 %v327
          %v523 = vunpack.c.l.b16 %v328
          %v524 = vunpack.c.h.b16 %v328
          %v525 = vunpack.c.l.b16 %v329
          %v526 = vunpack.c.h.b16 %v329
          %v527 = vunpack.c.l.b16 %v330
          %v528 = vunpack.c.h.b16 %v330
          %v529 = vunpack.c.l.b16 %v331
          %v530 = vunpack.c.h.b16 %v331
          %v531 = vunpack.c.l.b16 %v332
          %v532 = vunpack.c.h.b16 %v332
          %v533 = vunpack.c.l.b16 %v333
          %v534 = vunpack.c.h.b16 %v333
          %v535 = vunpack.c.l.b16 %v334
          %v536 = vunpack.c.h.b16 %v334
          %v537 = vunpack.c.l.b16 %v335
          %v538 = vunpack.c.h.b16 %v335
          %v539 = vunpack.c.l.b16 %v336
          %v540 = vunpack.c.h.b16 %v336
          %v541 = vunpack.c.l.b16 %v337
          %v542 = vunpack.c.h.b16 %v337
          %v543 = vunpack.c.l.b16 %v338
          %v544 = vunpack.c.h.b16 %v338
          %v545 = vunpack.c.l.b16 %v339
          %v546 = vunpack.c.h.b16 %v339
          %v547 = vunpack.c.l.b16 %v340
          %v548 = vunpack.c.h.b16 %v340
          %v549 = vunpack.c.l.b16 %v341
          %v550 = vunpack.c.h.b16 %v341
          %v551 = vunpack.c.l.b16 %v342
          %v552 = vunpack.c.h.b16 %v342
          %v553 = vunpack.c.l.b16 %v343
          %v554 = vunpack.c.h.b16 %v343
          %v555 = vunpack.c.l.b16 %v344
          %v556 = vunpack.c.h.b16 %v344
          %v557 = vunpack.c.l.b16 %v345
          %v558 = vunpack.c.h.b16 %v345
          %v559 = vunpack.c.l.b16 %v346
          %v560 = vunpack.c.h.b16 %v346
          %v561 = vunpack.c.l.b16 %v347
          %v562 = vunpack.c.h.b16 %v347
          %v563 = vunpack.c.l.b16 %v348
          %v564 = vunpack.c.h.b16 %v348
          %v565 = vunpack.c.l.b16 %v349
          %v566 = vunpack.c.h.b16 %v349
          %v567 = vunpack.c.l.b16 %v350
          %v568 = vunpack.c.h.b16 %v350
          %v569 = vunpack.c.l.b16 %v351
          %v570 = vunpack.c.h.b16 %v351
          %v571 = vunpack.c.l.b16 %v352
          %v572 = vunpack.c.h.b16 %v352
          %v573 = vunpack.c.l.b16 %v353
          %v574 = vunpack.c.h.b16 %v353
          %v575 = vunpack.c.l.b16 %v354
          %v576 = vunpack.c.h.b16 %v354
          %v577 = vunpack.c.l.b16 %v355
          %v578 = vunpack.c.h.b16 %v355
          %v579 = vunpack.c.l.b16 %v356
          %v580 = vunpack.c.h.b16 %v356
          %v581 = vpack.c.b16 %v455, %v453
          %v582 = vpack.c.b16 %v456, %v454
          %v583 = vpack.c.b16 %v459, %v457
          %v584 = vpack.c.b16 %v460, %v458
          %v585 = vpack.c.b16 %v463, %v461
          %v586 = vpack.c.b16 %v464, %v462
          %v587 = vpack.c.b16 %v467, %v465
          %v588 = vpack.c.b16 %v468, %v466
          %v589 = vpack.c.b16 %v471, %v469
          %v590 = vpack.c.b16 %v472, %v470
          %v591 = vpack.c.b16 %v475, %v473
          %v592 = vpack.c.b16 %v476, %v474
          %v593 = vpack.c.b16 %v479, %v477
          %v594 = vpack.c.b16 %v480, %v478
          %v595 = vpack.c.b16 %v483, %v481
          %v596 = vpack.c.b16 %v484, %v482
          %v597 = vpack.c.b16 %v487, %v485
          %v598 = vpack.c.b16 %v488, %v486
          %v599 = vpack.c.b16 %v491, %v489
          %v600 = vpack.c.b16 %v492, %v490
          %v601 = vpack.c.b16 %v495, %v493
          %v602 = vpack.c.b16 %v496, %v494
          %v603 = vpack.c.b16 %v499, %v497
          %v604 = vpack.c.b16 %v500, %v498
          %v605 = vpack.c.b16 %v503, %v501
          %v606 = vpack.c.b16 %v504, %v502
          %v607 = vpack.c.b16 %v507, %v505
          %v608 = vpack.c.b16 %v508, %v506
          %v609 = vpack.c.b16 %v511, %v509
          %v610 = vpack.c.b16 %v512, %v510
          %v611 = vpack.c.b16 %v515, %v513
          %v612 = vpack.c.b16 %v516, %v514
          %v613 = vpack.c.b16 %v519, %v517
          %v614 = vpack.c.b16 %v520, %v518
          %v615 = vpack.c.b16 %v523, %v521
          %v616 = vpack.c.b16 %v524, %v522
          %v617 = vpack.c.b16 %v527, %v525
          %v618 = vpack.c.b16 %v528, %v526
          %v619 = vpack.c.b16 %v531, %v529
          %v620 = vpack.c.b16 %v532, %v530
          %v621 = vpack.c.b16 %v535, %v533
          %v622 = vpack.c.b16 %v536, %v534
          %v623 = vpack.c.b16 %v539, %v537
          %v624 = vpack.c.b16 %v540, %v538
          %v625 = vpack.c.b16 %v543, %v541
          %v626 = vpack.c.b16 %v544, %v542
          %v627 = vpack.c.b16 %v547, %v545
          %v628 = vpack.c.b16 %v548, %v546
          %v629 = vpack.c.b16 %v551, %v549
          %v630 = vpack.c.b16 %v552, %v550
          %v631 = vpack.c.b16 %v555, %v553
          %v632 = vpack.c.b16 %v556, %v554
          %v633 = vpack.c.b16 %v559, %v557
          %v634 = vpack.c.b16 %v560, %v558
          %v635 = vpack.c.b16 %v563, %v561
          %v636 = vpack.c.b16 %v564, %v562
          %v637 = vpack.c.b16 %v567, %v565
          %v638 = vpack.c.b16 %v568, %v566
          %v639 = vpack.c.b16 %v571, %v569
          %v640 = vpack.c.b16 %v572, %v570
          %v641 = vpack.c.b16 %v575, %v573
          %v642 = vpack.c.b16 %v576, %v574
          %v643 = vpack.c.b16 %v579, %v577
          %v644 = vpack.c.b16 %v580, %v578
          %v697 = vunpack.c.l.b16 %v357
          %v698 = vunpack.c.h.b16 %v357
          %v699 = vunpack.c.l.b16 %v358
          %v700 = vunpack.c.h.b16 %v358
          %v701 = vunpack.c.l.b16 %v359
          %v702 = vunpack.c.h.b16 %v359
          %v703 = vunpack.c.l.b16 %v360
          %v704 = vunpack.c.h.b16 %v360
          %v705 = vunpack.c.l.b16 %v361
          %v706 = vunpack.c.h.b16 %v361
          %v707 = vunpack.c.l.b16 %v362
          %v708 = vunpack.c.h.b16 %v362
          %v709 = vunpack.c.l.b16 %v363
          %v710 = vunpack.c.h.b16 %v363
          %v711 = vunpack.c.l.b16 %v364
          %v712 = vunpack.c.h.b16 %v364
          %v713 = vunpack.c.l.b16 %v365
          %v714 = vunpack.c.h.b16 %v365
          %v715 = vunpack.c.l.b16 %v366
          %v716 = vunpack.c.h.b16 %v366
          %v717 = vunpack.c.l.b16 %v367
          %v718 = vunpack.c.h.b16 %v367
          %v719 = vunpack.c.l.b16 %v368
          %v720 = vunpack.c.h.b16 %v368
          %v721 = vunpack.c.l.b16 %v369
          %v722 = vunpack.c.h.b16 %v369
          %v723 = vunpack.c.l.b16 %v370
          %v724 = vunpack.c.h.b16 %v370
          %v725 = vunpack.c.l.b16 %v371
          %v726 = vunpack.c.h.b16 %v371
          %v727 = vunpack.c.l.b16 %v372
          %v728 = vunpack.c.h.b16 %v372
          %v729 = vunpack.c.l.b16 %v373
          %v730 = vunpack.c.h.b16 %v373
          %v731 = vunpack.c.l.b16 %v374
          %v732 = vunpack.c.h.b16 %v374
          %v733 = vunpack.c.l.b16 %v375
          %v734 = vunpack.c.h.b16 %v375
          %v735 = vunpack.c.l.b16 %v376
          %v736 = vunpack.c.h.b16 %v376
          %v737 = vpack.c.b16 %v699, %v697
          %v738 = vpack.c.b16 %v700, %v698
          %v739 = vpack.c.b16 %v703, %v701
          %v740 = vpack.c.b16 %v704, %v702
          %v741 = vpack.c.b16 %v707, %v705
          %v742 = vpack.c.b16 %v708, %v706
          %v743 = vpack.c.b16 %v711, %v709
          %v744 = vpack.c.b16 %v712, %v710
          %v745 = vpack.c.b16 %v715, %v713
          %v746 = vpack.c.b16 %v716, %v714
          %v747 = vpack.c.b16 %v719, %v717
          %v748 = vpack.c.b16 %v720, %v718
          %v749 = vpack.c.b16 %v723, %v721
          %v750 = vpack.c.b16 %v724, %v722
          %v751 = vpack.c.b16 %v727, %v725
          %v752 = vpack.c.b16 %v728, %v726
          %v753 = vpack.c.b16 %v731, %v729
          %v754 = vpack.c.b16 %v732, %v730
          %v755 = vpack.c.b16 %v735, %v733
          %v756 = vpack.c.b16 %v736, %v734
          %vm775 = vcmask 228352
          %v777 = vsel %vm775, %v582, 0
          %v780 = vsel %vm775, %v584, 0
          %v783 = vsel %vm775, %v586, 0
          %v786 = vsel %vm775, %v588, 0
          %v789 = vsel %vm775, %v590, 0
          %v792 = vsel %vm775, %v592, 0
          %v795 = vsel %vm775, %v594, 0
          %v798 = vsel %vm775, %v596, 0
          %v801 = vsel %vm775, %v598, 0
          %v804 = vsel %vm775, %v600, 0
          %v807 = vsel %vm775, %v602, 0
          %v810 = vsel %vm775, %v604, 0
          %v813 = vsel %vm775, %v606, 0
          %v816 = vsel %vm775, %v608, 0
          %v819 = vsel %vm775, %v610, 0
          %v822 = vsel %vm775, %v612, 0
          %v825 = vsel %vm775, %v614, 0
          %v828 = vsel %vm775, %v616, 0
          %v831 = vsel %vm775, %v618, 0
          %v834 = vsel %vm775, %v620, 0
          %v837 = vsel %vm775, %v622, 0
          %v840 = vsel %vm775, %v624, 0
          %v843 = vsel %vm775, %v626, 0
          %v846 = vsel %vm775, %v628, 0
          %v849 = vsel %vm775, %v630, 0
          %v852 = vsel %vm775, %v632, 0
          %v855 = vsel %vm775, %v634, 0
          %v858 = vsel %vm775, %v636, 0
          %v861 = vsel %vm775, %v638, 0
          %v864 = vsel %vm775, %v640, 0
          %v867 = vsel %vm775, %v642, 0
          %v870 = vsel %vm775, %v644, 0
          %vm872 = vcmask 1045504
          %v874 = vsel %vm872, %v755, 0
          %v877 = vsel %vm872, %v756, 0
          %879 = vmatprep.subr.bf16.mxu0 %v738
          %880 = vmatpush1.bf16.msra.mxu0 %v737
          %881 = vmatprep.subr.bf16.mxu0 %v740
          %882 = vmatpush1.bf16.msra.mxu0 %v739
          %883 = vmatprep.subr.bf16.mxu0 %v742
          %884 = vmatpush1.bf16.msra.mxu0 %v741
          %885 = vmatprep.subr.bf16.mxu0 %v744
          %886 = vmatpush1.bf16.msra.mxu0 %v743
          %887 = vmatprep.subr.bf16.mxu0 %v746
          %888 = vmatpush1.bf16.msra.mxu0 %v745
          %889 = vmatprep.subr.bf16.mxu0 %v748
          %890 = vmatpush1.bf16.msra.mxu0 %v747
          %891 = vmatprep.subr.bf16.mxu0 %v750
          %892 = vmatpush1.bf16.msra.mxu0 %v749
          %893 = vmatprep.subr.bf16.mxu0 %v752
          %894 = vmatpush1.bf16.msra.mxu0 %v751
          %895 = vmatprep.subr.bf16.mxu0 %v754
          %896 = vmatpush1.bf16.msra.mxu0 %v753
          %897 = vmatprep.subr.bf16.mxu0 %v877
          %898 = vmatpush1.bf16.msra.mxu0 %v874
          %899 = vmatprep.subr.bf16.mxu0 0
          %900 = vmatpush1.bf16.msra.mxu0 0
          %901 = vmatprep.subr.bf16.mxu0 0
          %902 = vmatpush1.bf16.msra.mxu0 0
          %903 = vmatprep.subr.bf16.mxu0 0
          %904 = vmatpush1.bf16.msra.mxu0 0
          %905 = vmatprep.subr.bf16.mxu0 0
          %906 = vmatpush1.bf16.msra.mxu0 0
          %907 = vmatprep.subr.bf16.mxu0 0
          %908 = vmatpush1.bf16.msra.mxu0 0
          %909 = vmatprep.subr.bf16.mxu0 0
          %910 = vmatpush1.bf16.msra.mxu0 0
          %911 = vmatprep.mubr.bf16.mxu0 %v777
          %912 = vmatmul.mubr.bf16.gmra.mrb[0].mxu0 %v581
          %v913 = vpop.f32.mrb[0].mxu0
          %v914 = vadd.f32 %v382, %v913
          %v915 = vpop.f32.mrb[0].mxu0
          %v916 = vadd.f32 %v386, %v915
          %v917 = vpop.f32.mrb[0].mxu0
          %v918 = vadd.f32 %v382, %v917
          %v919 = vpop.f32.mrb[0].mxu0
          %v920 = vadd.f32 %v386, %v919
          %921 = vmatprep.mubr.bf16.mxu0 %v780
          %922 = vmatmul.mubr.bf16.gmra.mrb[0].mxu0 %v583
          %v923 = vpop.f32.mrb[0].mxu0
          %v924 = vadd.f32 %v382, %v923
          %v925 = vpop.f32.mrb[0].mxu0
          %v926 = vadd.f32 %v386, %v925
          %v927 = vpop.f32.mrb[0].mxu0
          %v928 = vadd.f32 %v382, %v927
          %v929 = vpop.f32.mrb[0].mxu0
          %v930 = vadd.f32 %v386, %v929
          %931 = vmatprep.mubr.bf16.mxu0 %v783
          %932 = vmatmul.mubr.bf16.gmra.mrb[0].mxu0 %v585
          %v933 = vpop.f32.mrb[0].mxu0
          %v934 = vadd.f32 %v382, %v933
          %v935 = vpop.f32.mrb[0].mxu0
          %v936 = vadd.f32 %v386, %v935
          %v937 = vpop.f32.mrb[0].mxu0
          %v938 = vadd.f32 %v382, %v937
          %v939 = vpop.f32.mrb[0].mxu0
          %v940 = vadd.f32 %v386, %v939
          %941 = vmatprep.mubr.bf16.mxu0 %v786
          %942 = vmatmul.mubr.bf16.gmra.mrb[0].mxu0 %v587
          %v943 = vpop.f32.mrb[0].mxu0
          %v944 = vadd.f32 %v382, %v943
          %v945 = vpop.f32.mrb[0].mxu0
          %v946 = vadd.f32 %v386, %v945
          %v947 = vpop.f32.mrb[0].mxu0
          %v948 = vadd.f32 %v382, %v947
          %v949 = vpop.f32.mrb[0].mxu0
          %v950 = vadd.f32 %v386, %v949
          %951 = vmatprep.mubr.bf16.mxu0 %v789
          %952 = vmatmul.mubr.bf16.gmra.mrb[0].mxu0 %v589
          %v953 = vpop.f32.mrb[0].mxu0
          %v954 = vadd.f32 %v382, %v953
          %v955 = vpop.f32.mrb[0].mxu0
          %v956 = vadd.f32 %v386, %v955
          %v957 = vpop.f32.mrb[0].mxu0
          %v958 = vadd.f32 %v382, %v957
          %v959 = vpop.f32.mrb[0].mxu0
          %v960 = vadd.f32 %v386, %v959
          %961 = vmatprep.mubr.bf16.mxu0 %v792
          %962 = vmatmul.mubr.bf16.gmra.mrb[0].mxu0 %v591
          %v963 = vpop.f32.mrb[0].mxu0
          %v964 = vadd.f32 %v382, %v963
          %v965 = vpop.f32.mrb[0].mxu0
          %v966 = vadd.f32 %v386, %v965
          %v967 = vpop.f32.mrb[0].mxu0
          %v968 = vadd.f32 %v382, %v967
          %v969 = vpop.f32.mrb[0].mxu0
          %v970 = vadd.f32 %v386, %v969
          %971 = vmatprep.mubr.bf16.mxu0 %v795
          %972 = vmatmul.mubr.bf16.gmra.mrb[0].mxu0 %v593
          %v973 = vpop.f32.mrb[0].mxu0
          %v974 = vadd.f32 %v382, %v973
          %v975 = vpop.f32.mrb[0].mxu0
          %v976 = vadd.f32 %v386, %v975
          %v977 = vpop.f32.mrb[0].mxu0
          %v978 = vadd.f32 %v382, %v977
          %v979 = vpop.f32.mrb[0].mxu0
          %v980 = vadd.f32 %v386, %v979
          %981 = vmatprep.mubr.bf16.mxu0 %v798
          %982 = vmatmul.mubr.bf16.gmra.mrb[0].mxu0 %v595
          %v983 = vpop.f32.mrb[0].mxu0
          %v984 = vadd.f32 %v382, %v983
          %v985 = vpop.f32.mrb[0].mxu0
          %v986 = vadd.f32 %v386, %v985
          %v987 = vpop.f32.mrb[0].mxu0
          %v988 = vadd.f32 %v382, %v987
          %v989 = vpop.f32.mrb[0].mxu0
          %v990 = vadd.f32 %v386, %v989
          %991 = vmatprep.mubr.bf16.mxu0 %v801
          %992 = vmatmul.mubr.bf16.gmra.mrb[0].mxu0 %v597
          %v993 = vpop.f32.mrb[0].mxu0
          %v994 = vadd.f32 %v382, %v993
          %v995 = vpop.f32.mrb[0].mxu0
          %v996 = vadd.f32 %v386, %v995
          %v997 = vpop.f32.mrb[0].mxu0
          %v998 = vadd.f32 %v382, %v997
          %v999 = vpop.f32.mrb[0].mxu0
          %v1000 = vadd.f32 %v386, %v999
          %1001 = vmatprep.mubr.bf16.mxu0 %v804
          %1002 = vmatmul.mubr.bf16.gmra.mrb[0].mxu0 %v599
          %v1003 = vpop.f32.mrb[0].mxu0
          %v1004 = vadd.f32 %v382, %v1003
          %v1005 = vpop.f32.mrb[0].mxu0
          %v1006 = vadd.f32 %v386, %v1005
          %v1007 = vpop.f32.mrb[0].mxu0
          %v1008 = vadd.f32 %v382, %v1007
          %v1009 = vpop.f32.mrb[0].mxu0
          %v1010 = vadd.f32 %v386, %v1009
          %1011 = vmatprep.mubr.bf16.mxu0 %v807
          %1012 = vmatmul.mubr.bf16.gmra.mrb[0].mxu0 %v601
          %v1013 = vpop.f32.mrb[0].mxu0
          %v1014 = vadd.f32 %v382, %v1013
          %v1015 = vpop.f32.mrb[0].mxu0
          %v1016 = vadd.f32 %v386, %v1015
          %v1017 = vpop.f32.mrb[0].mxu0
          %v1018 = vadd.f32 %v382, %v1017
          %v1019 = vpop.f32.mrb[0].mxu0
          %v1020 = vadd.f32 %v386, %v1019
          %1021 = vmatprep.mubr.bf16.mxu0 %v810
          %1022 = vmatmul.mubr.bf16.gmra.mrb[0].mxu0 %v603
          %v1023 = vpop.f32.mrb[0].mxu0
          %v1024 = vadd.f32 %v382, %v1023
          %v1025 = vpop.f32.mrb[0].mxu0
          %v1026 = vadd.f32 %v386, %v1025
          %v1027 = vpop.f32.mrb[0].mxu0
          %v1028 = vadd.f32 %v382, %v1027
          %v1029 = vpop.f32.mrb[0].mxu0
          %v1030 = vadd.f32 %v386, %v1029
          %1031 = vmatprep.mubr.bf16.mxu0 %v813
          %1032 = vmatmul.mubr.bf16.gmra.mrb[0].mxu0 %v605
          %v1033 = vpop.f32.mrb[0].mxu0
          %v1034 = vadd.f32 %v382, %v1033
          %v1035 = vpop.f32.mrb[0].mxu0
          %v1036 = vadd.f32 %v386, %v1035
          %v1037 = vpop.f32.mrb[0].mxu0
          %v1038 = vadd.f32 %v382, %v1037
          %v1039 = vpop.f32.mrb[0].mxu0
          %v1040 = vadd.f32 %v386, %v1039
          %1041 = vmatprep.mubr.bf16.mxu0 %v816
          %1042 = vmatmul.mubr.bf16.gmra.mrb[0].mxu0 %v607
          %v1043 = vpop.f32.mrb[0].mxu0
          %v1044 = vadd.f32 %v382, %v1043
          %v1045 = vpop.f32.mrb[0].mxu0
          %v1046 = vadd.f32 %v386, %v1045
          %v1047 = vpop.f32.mrb[0].mxu0
          %v1048 = vadd.f32 %v382, %v1047
          %v1049 = vpop.f32.mrb[0].mxu0
          %v1050 = vadd.f32 %v386, %v1049
          %1051 = vmatprep.mubr.bf16.mxu0 %v819
          %1052 = vmatmul.mubr.bf16.gmra.mrb[0].mxu0 %v609
          %v1053 = vpop.f32.mrb[0].mxu0
          %v1054 = vadd.f32 %v382, %v1053
          %v1055 = vpop.f32.mrb[0].mxu0
          %v1056 = vadd.f32 %v386, %v1055
          %v1057 = vpop.f32.mrb[0].mxu0
          %v1058 = vadd.f32 %v382, %v1057
          %v1059 = vpop.f32.mrb[0].mxu0
          %v1060 = vadd.f32 %v386, %v1059
          %1061 = vmatprep.mubr.bf16.mxu0 %v822
          %1062 = vmatmul.mubr.bf16.gmra.mrb[0].mxu0 %v611
          %v1063 = vpop.f32.mrb[0].mxu0
          %v1064 = vadd.f32 %v382, %v1063
          %v1065 = vpop.f32.mrb[0].mxu0
          %v1066 = vadd.f32 %v386, %v1065
          %v1067 = vpop.f32.mrb[0].mxu0
          %v1068 = vadd.f32 %v382, %v1067
          %v1069 = vpop.f32.mrb[0].mxu0
          %v1070 = vadd.f32 %v386, %v1069
          %1071 = vmatprep.mubr.bf16.mxu0 %v825
          %1072 = vmatmul.mubr.bf16.gmra.mrb[0].mxu0 %v613
          %v1073 = vpop.f32.mrb[0].mxu0
          %v1074 = vadd.f32 %v382, %v1073
          %v1075 = vpop.f32.mrb[0].mxu0
          %v1076 = vadd.f32 %v386, %v1075
          %v1077 = vpop.f32.mrb[0].mxu0
          %v1078 = vadd.f32 %v382, %v1077
          %v1079 = vpop.f32.mrb[0].mxu0
          %v1080 = vadd.f32 %v386, %v1079
          %1081 = vmatprep.mubr.bf16.mxu0 %v828
          %1082 = vmatmul.mubr.bf16.gmra.mrb[0].mxu0 %v615
          %v1083 = vpop.f32.mrb[0].mxu0
          %v1084 = vadd.f32 %v382, %v1083
          %v1085 = vpop.f32.mrb[0].mxu0
          %v1086 = vadd.f32 %v386, %v1085
          %v1087 = vpop.f32.mrb[0].mxu0
          %v1088 = vadd.f32 %v382, %v1087
          %v1089 = vpop.f32.mrb[0].mxu0
          %v1090 = vadd.f32 %v386, %v1089
          %1091 = vmatprep.mubr.bf16.mxu0 %v831
          %1092 = vmatmul.mubr.bf16.gmra.mrb[0].mxu0 %v617
          %v1093 = vpop.f32.mrb[0].mxu0
          %v1094 = vadd.f32 %v382, %v1093
          %v1095 = vpop.f32.mrb[0].mxu0
          %v1096 = vadd.f32 %v386, %v1095
          %v1097 = vpop.f32.mrb[0].mxu0
          %v1098 = vadd.f32 %v382, %v1097
          %v1099 = vpop.f32.mrb[0].mxu0
          %v1100 = vadd.f32 %v386, %v1099
          %1101 = vmatprep.mubr.bf16.mxu0 %v834
          %1102 = vmatmul.mubr.bf16.gmra.mrb[0].mxu0 %v619
          %v1103 = vpop.f32.mrb[0].mxu0
          %v1104 = vadd.f32 %v382, %v1103
          %v1105 = vpop.f32.mrb[0].mxu0
          %v1106 = vadd.f32 %v386, %v1105
          %v1107 = vpop.f32.mrb[0].mxu0
          %v1108 = vadd.f32 %v382, %v1107
          %v1109 = vpop.f32.mrb[0].mxu0
          %v1110 = vadd.f32 %v386, %v1109
          %1111 = vmatprep.mubr.bf16.mxu0 %v837
          %1112 = vmatmul.mubr.bf16.gmra.mrb[0].mxu0 %v621
          %v1113 = vpop.f32.mrb[0].mxu0
          %v1114 = vadd.f32 %v382, %v1113
          %v1115 = vpop.f32.mrb[0].mxu0
          %v1116 = vadd.f32 %v386, %v1115
          %v1117 = vpop.f32.mrb[0].mxu0
          %v1118 = vadd.f32 %v382, %v1117
          %v1119 = vpop.f32.mrb[0].mxu0
          %v1120 = vadd.f32 %v386, %v1119
          %1121 = vmatprep.mubr.bf16.mxu0 %v840
          %1122 = vmatmul.mubr.bf16.gmra.mrb[0].mxu0 %v623
          %v1123 = vpop.f32.mrb[0].mxu0
          %v1124 = vadd.f32 %v382, %v1123
          %v1125 = vpop.f32.mrb[0].mxu0
          %v1126 = vadd.f32 %v386, %v1125
          %v1127 = vpop.f32.mrb[0].mxu0
          %v1128 = vadd.f32 %v382, %v1127
          %v1129 = vpop.f32.mrb[0].mxu0
          %v1130 = vadd.f32 %v386, %v1129
          %1131 = vmatprep.mubr.bf16.mxu0 %v843
          %1132 = vmatmul.mubr.bf16.gmra.mrb[0].mxu0 %v625
          %v1133 = vpop.f32.mrb[0].mxu0
          %v1134 = vadd.f32 %v382, %v1133
          %v1135 = vpop.f32.mrb[0].mxu0
          %v1136 = vadd.f32 %v386, %v1135
          %v1137 = vpop.f32.mrb[0].mxu0
          %v1138 = vadd.f32 %v382, %v1137
          %v1139 = vpop.f32.mrb[0].mxu0
          %v1140 = vadd.f32 %v386, %v1139
          %1141 = vmatprep.mubr.bf16.mxu0 %v846
          %1142 = vmatmul.mubr.bf16.gmra.mrb[0].mxu0 %v627
          %v1143 = vpop.f32.mrb[0].mxu0
          %v1144 = vadd.f32 %v382, %v1143
          %v1145 = vpop.f32.mrb[0].mxu0
          %v1146 = vadd.f32 %v386, %v1145
          %v1147 = vpop.f32.mrb[0].mxu0
          %v1148 = vadd.f32 %v382, %v1147
          %v1149 = vpop.f32.mrb[0].mxu0
          %v1150 = vadd.f32 %v386, %v1149
          %1151 = vmatprep.mubr.bf16.mxu0 %v849
          %1152 = vmatmul.mubr.bf16.gmra.mrb[0].mxu0 %v629
          %v1153 = vpop.f32.mrb[0].mxu0
          %v1154 = vadd.f32 %v382, %v1153
          %v1155 = vpop.f32.mrb[0].mxu0
          %v1156 = vadd.f32 %v386, %v1155
          %v1157 = vpop.f32.mrb[0].mxu0
          %v1158 = vadd.f32 %v382, %v1157
          %v1159 = vpop.f32.mrb[0].mxu0
          %v1160 = vadd.f32 %v386, %v1159
          %1161 = vmatprep.mubr.bf16.mxu0 %v852
          %1162 = vmatmul.mubr.bf16.gmra.mrb[0].mxu0 %v631
          %v1163 = vpop.f32.mrb[0].mxu0
          %v1164 = vadd.f32 %v382, %v1163
          %v1165 = vpop.f32.mrb[0].mxu0
          %v1166 = vadd.f32 %v386, %v1165
          %v1167 = vpop.f32.mrb[0].mxu0
          %v1168 = vadd.f32 %v382, %v1167
          %v1169 = vpop.f32.mrb[0].mxu0
          %v1170 = vadd.f32 %v386, %v1169
          %1171 = vmatprep.mubr.bf16.mxu0 %v855
          %1172 = vmatmul.mubr.bf16.gmra.mrb[0].mxu0 %v633
          %v1173 = vpop.f32.mrb[0].mxu0
          %v1174 = vadd.f32 %v382, %v1173
          %v1175 = vpop.f32.mrb[0].mxu0
          %v1176 = vadd.f32 %v386, %v1175
          %v1177 = vpop.f32.mrb[0].mxu0
          %v1178 = vadd.f32 %v382, %v1177
          %v1179 = vpop.f32.mrb[0].mxu0
          %v1180 = vadd.f32 %v386, %v1179
          %1181 = vmatprep.mubr.bf16.mxu0 %v858
          %1182 = vmatmul.mubr.bf16.gmra.mrb[0].mxu0 %v635
          %v1183 = vpop.f32.mrb[0].mxu0
          %v1184 = vadd.f32 %v382, %v1183
          %v1185 = vpop.f32.mrb[0].mxu0
          %v1186 = vadd.f32 %v386, %v1185
          %v1187 = vpop.f32.mrb[0].mxu0
          %v1188 = vadd.f32 %v382, %v1187
          %v1189 = vpop.f32.mrb[0].mxu0
          %v1190 = vadd.f32 %v386, %v1189
          %1191 = vmatprep.mubr.bf16.mxu0 %v861
          %1192 = vmatmul.mubr.bf16.gmra.mrb[0].mxu0 %v637
          %v1193 = vpop.f32.mrb[0].mxu0
          %v1194 = vadd.f32 %v382, %v1193
          %v1195 = vpop.f32.mrb[0].mxu0
          %v1196 = vadd.f32 %v386, %v1195
          %v1197 = vpop.f32.mrb[0].mxu0
          %v1198 = vadd.f32 %v382, %v1197
          %v1199 = vpop.f32.mrb[0].mxu0
          %v1200 = vadd.f32 %v386, %v1199
          %1201 = vmatprep.mubr.bf16.mxu0 %v864
          %1202 = vmatmul.mubr.bf16.gmra.mrb[0].mxu0 %v639
          %v1203 = vpop.f32.mrb[0].mxu0
          %v1204 = vadd.f32 %v382, %v1203
          %v1205 = vpop.f32.mrb[0].mxu0
          %v1206 = vadd.f32 %v386, %v1205
          %v1207 = vpop.f32.mrb[0].mxu0
          %v1208 = vadd.f32 %v382, %v1207
          %v1209 = vpop.f32.mrb[0].mxu0
          %v1210 = vadd.f32 %v386, %v1209
          %1211 = vmatprep.mubr.bf16.mxu0 %v867
          %1212 = vmatmul.mubr.bf16.gmra.mrb[0].mxu0 %v641
          %v1213 = vpop.f32.mrb[0].mxu0
          %v1214 = vadd.f32 %v382, %v1213
          %v1215 = vpop.f32.mrb[0].mxu0
          %v1216 = vadd.f32 %v386, %v1215
          %v1217 = vpop.f32.mrb[0].mxu0
          %v1218 = vadd.f32 %v382, %v1217
          %v1219 = vpop.f32.mrb[0].mxu0
          %v1220 = vadd.f32 %v386, %v1219
          %1221 = vmatprep.mubr.bf16.mxu0 %v870
          %1222 = vmatmul.mubr.bf16.gmra.mrb[0].mxu0 %v643
          %v1223 = vpop.f32.mrb[0].mxu0
          %v1224 = vadd.f32 %v382, %v1223
          %v1225 = vpop.f32.mrb[0].mxu0
          %v1226 = vadd.f32 %v386, %v1225
          %v1227 = vpop.f32.mrb[0].mxu0
          %v1228 = vadd.f32 %v382, %v1227
          %v1229 = vpop.f32.mrb[0].mxu0
          %v1230 = vadd.f32 %v386, %v1229
          %1231 = vdwg.mxu0
          %v1232 = vtanh.pop %v914
          %v1233 = vtanh.pop %v916
          %v1234 = vtanh.pop %v918
          %v1235 = vtanh.pop %v920
          %v1236 = vtanh.pop %v924
          %v1237 = vtanh.pop %v926
          %v1238 = vtanh.pop %v928
          %v1239 = vtanh.pop %v930
          %v1240 = vtanh.pop %v934
          %v1241 = vtanh.pop %v936
          %v1242 = vtanh.pop %v938
          %v1243 = vtanh.pop %v940
          %v1244 = vtanh.pop %v944
          %v1245 = vtanh.pop %v946
          %v1246 = vtanh.pop %v948
          %v1247 = vtanh.pop %v950
          %v1248 = vtanh.pop %v954
          %v1249 = vtanh.pop %v956
          %v1250 = vtanh.pop %v958
          %v1251 = vtanh.pop %v960
          %v1252 = vtanh.pop %v964
          %v1253 = vtanh.pop %v966
          %v1254 = vtanh.pop %v968
          %v1255 = vtanh.pop %v970
          %v1256 = vtanh.pop %v974
          %v1257 = vtanh.pop %v976
          %v1258 = vtanh.pop %v978
          %v1259 = vtanh.pop %v980
          %v1260 = vtanh.pop %v984
          %v1261 = vtanh.pop %v986
          %v1262 = vtanh.pop %v988
          %v1263 = vtanh.pop %v990
          %v1264 = vtanh.pop %v994
          %v1265 = vtanh.pop %v996
          %v1266 = vtanh.pop %v998
          %v1267 = vtanh.pop %v1000
          %v1268 = vtanh.pop %v1004
          %v1269 = vtanh.pop %v1006
          %v1270 = vtanh.pop %v1008
          %v1271 = vtanh.pop %v1010
          %v1272 = vtanh.pop %v1014
          %v1273 = vtanh.pop %v1016
          %v1274 = vtanh.pop %v1018
          %v1275 = vtanh.pop %v1020
          %v1276 = vtanh.pop %v1024
          %v1277 = vtanh.pop %v1026
          %v1278 = vtanh.pop %v1028
          %v1279 = vtanh.pop %v1030
          %v1280 = vtanh.pop %v1034
          %v1281 = vtanh.pop %v1036
          %v1282 = vtanh.pop %v1038
          %v1283 = vtanh.pop %v1040
          %v1284 = vtanh.pop %v1044
          %v1285 = vtanh.pop %v1046
          %v1286 = vtanh.pop %v1048
          %v1287 = vtanh.pop %v1050
          %v1288 = vtanh.pop %v1054
          %v1289 = vtanh.pop %v1056
          %v1290 = vtanh.pop %v1058
          %v1291 = vtanh.pop %v1060
          %v1292 = vtanh.pop %v1064
          %v1293 = vtanh.pop %v1066
          %v1294 = vtanh.pop %v1068
          %v1295 = vtanh.pop %v1070
          %v1296 = vtanh.pop %v1074
          %v1297 = vtanh.pop %v1076
          %v1298 = vtanh.pop %v1078
          %v1299 = vtanh.pop %v1080
          %v1300 = vtanh.pop %v1084
          %v1301 = vtanh.pop %v1086
          %v1302 = vtanh.pop %v1088
          %v1303 = vtanh.pop %v1090
          %v1304 = vtanh.pop %v1094
          %v1305 = vtanh.pop %v1096
          %v1306 = vtanh.pop %v1098
          %v1307 = vtanh.pop %v1100
          %v1308 = vtanh.pop %v1104
          %v1309 = vtanh.pop %v1106
          %v1310 = vtanh.pop %v1108
          %v1311 = vtanh.pop %v1110
          %v1312 = vtanh.pop %v1114
          %v1313 = vtanh.pop %v1116
          %v1314 = vtanh.pop %v1118
          %v1315 = vtanh.pop %v1120
          %v1316 = vtanh.pop %v1124
          %v1317 = vtanh.pop %v1126
          %v1318 = vtanh.pop %v1128
          %v1319 = vtanh.pop %v1130
          %v1320 = vtanh.pop %v1134
          %v1321 = vtanh.pop %v1136
          %v1322 = vtanh.pop %v1138
          %v1323 = vtanh.pop %v1140
          %v1324 = vtanh.pop %v1144
          %v1325 = vtanh.pop %v1146
          %v1326 = vtanh.pop %v1148
          %v1327 = vtanh.pop %v1150
          %v1328 = vtanh.pop %v1154
          %v1329 = vtanh.pop %v1156
          %v1330 = vtanh.pop %v1158
          %v1331 = vtanh.pop %v1160
          %v1332 = vtanh.pop %v1164
          %v1333 = vtanh.pop %v1166
          %v1334 = vtanh.pop %v1168
          %v1335 = vtanh.pop %v1170
          %v1336 = vtanh.pop %v1174
          %v1337 = vtanh.pop %v1176
          %v1338 = vtanh.pop %v1178
          %v1339 = vtanh.pop %v1180
          %v1340 = vtanh.pop %v1184
          %v1341 = vtanh.pop %v1186
          %v1342 = vtanh.pop %v1188
          %v1343 = vtanh.pop %v1190
          %v1344 = vtanh.pop %v1194
          %v1345 = vtanh.pop %v1196
          %v1346 = vtanh.pop %v1198
          %v1347 = vtanh.pop %v1200
          %v1348 = vtanh.pop %v1204
          %v1349 = vtanh.pop %v1206
          %v1350 = vtanh.pop %v1208
          %v1351 = vtanh.pop %v1210
          %v1352 = vtanh.pop %v1214
          %v1353 = vtanh.pop %v1216
          %v1354 = vtanh.pop %v1218
          %v1355 = vtanh.pop %v1220
          %v1356 = vtanh.pop %v1224
          %v1357 = vtanh.pop %v1226
          %v1358 = vtanh.pop %v1228
          %v1359 = vtanh.pop %v1230
          %v1360 = vpack.c.bf16 %v1234, %v1232
          %v1361 = vpack.c.bf16 %v1235, %v1233
          %v1362 = vpack.c.bf16 %v1238, %v1236
          %v1363 = vpack.c.bf16 %v1239, %v1237
          %v1364 = vpack.c.bf16 %v1242, %v1240
          %v1365 = vpack.c.bf16 %v1243, %v1241
          %v1366 = vpack.c.bf16 %v1246, %v1244
          %v1367 = vpack.c.bf16 %v1247, %v1245
          %v1368 = vpack.c.bf16 %v1250, %v1248
          %v1369 = vpack.c.bf16 %v1251, %v1249
          %v1370 = vpack.c.bf16 %v1254, %v1252
          %v1371 = vpack.c.bf16 %v1255, %v1253
          %v1372 = vpack.c.bf16 %v1258, %v1256
          %v1373 = vpack.c.bf16 %v1259, %v1257
          %v1374 = vpack.c.bf16 %v1262, %v1260
          %v1375 = vpack.c.bf16 %v1263, %v1261
          %v1376 = vpack.c.bf16 %v1266, %v1264
          %v1377 = vpack.c.bf16 %v1267, %v1265
          %v1378 = vpack.c.bf16 %v1270, %v1268
          %v1379 = vpack.c.bf16 %v1271, %v1269
          %v1380 = vpack.c.bf16 %v1274, %v1272
          %v1381 = vpack.c.bf16 %v1275, %v1273
          %v1382 = vpack.c.bf16 %v1278, %v1276
          %v1383 = vpack.c.bf16 %v1279, %v1277
          %v1384 = vpack.c.bf16 %v1282, %v1280
          %v1385 = vpack.c.bf16 %v1283, %v1281
          %v1386 = vpack.c.bf16 %v1286, %v1284
          %v1387 = vpack.c.bf16 %v1287, %v1285
          %v1388 = vpack.c.bf16 %v1290, %v1288
          %v1389 = vpack.c.bf16 %v1291, %v1289
          %v1390 = vpack.c.bf16 %v1294, %v1292
          %v1391 = vpack.c.bf16 %v1295, %v1293
          %v1392 = vpack.c.bf16 %v1298, %v1296
          %v1393 = vpack.c.bf16 %v1299, %v1297
          %v1394 = vpack.c.bf16 %v1302, %v1300
          %v1395 = vpack.c.bf16 %v1303, %v1301
          %v1396 = vpack.c.bf16 %v1306, %v1304
          %v1397 = vpack.c.bf16 %v1307, %v1305
          %v1398 = vpack.c.bf16 %v1310, %v1308
          %v1399 = vpack.c.bf16 %v1311, %v1309
          %v1400 = vpack.c.bf16 %v1314, %v1312
          %v1401 = vpack.c.bf16 %v1315, %v1313
          %v1402 = vpack.c.bf16 %v1318, %v1316
          %v1403 = vpack.c.bf16 %v1319, %v1317
          %v1404 = vpack.c.bf16 %v1322, %v1320
          %v1405 = vpack.c.bf16 %v1323, %v1321
          %v1406 = vpack.c.bf16 %v1326, %v1324
          %v1407 = vpack.c.bf16 %v1327, %v1325
          %v1408 = vpack.c.bf16 %v1330, %v1328
          %v1409 = vpack.c.bf16 %v1331, %v1329
          %v1410 = vpack.c.bf16 %v1334, %v1332
          %v1411 = vpack.c.bf16 %v1335, %v1333
          %v1412 = vpack.c.bf16 %v1338, %v1336
          %v1413 = vpack.c.bf16 %v1339, %v1337
          %v1414 = vpack.c.bf16 %v1342, %v1340
          %v1415 = vpack.c.bf16 %v1343, %v1341
          %v1416 = vpack.c.bf16 %v1346, %v1344
          %v1417 = vpack.c.bf16 %v1347, %v1345
          %v1418 = vpack.c.bf16 %v1350, %v1348
          %v1419 = vpack.c.bf16 %v1351, %v1349
          %v1420 = vpack.c.bf16 %v1354, %v1352
          %v1421 = vpack.c.bf16 %v1355, %v1353
          %v1422 = vpack.c.bf16 %v1358, %v1356
          %v1423 = vpack.c.bf16 %v1359, %v1357
          %v1424 = vld [vmem:[%s3] sm:$0xf]
          %v1425 = vld [vmem:[%s3 + $0x4] sm:$0xf]
          %v1426 = vld [vmem:[%s3 + $0x8] sm:$0xf]
          %v1427 = vld [vmem:[%s3 + $0xc] sm:$0xf]
          %v1428 = vld [vmem:[%s3 + $0x10] sm:$0xf]
          %v1429 = vld [vmem:[%s3 + $0x14] sm:$0xf]
          %v1430 = vld [vmem:[%s3 + $0x18] sm:$0xf]
          %v1431 = vld [vmem:[%s3 + $0x1c] sm:$0xf]
          %v1432 = vld [vmem:[%s3 + $0x20] sm:$0xf]
          %v1433 = vld [vmem:[%s3 + $0x24] sm:$0xf]
          %v1434 = vld [vmem:[%s3 + $0x28] sm:$0xf]
          %v1435 = vld [vmem:[%s3 + $0x2c] sm:$0xf]
          %v1436 = vld [vmem:[%s3 + $0x30] sm:$0xf]
          %v1437 = vld [vmem:[%s3 + $0x34] sm:$0xf]
          %v1438 = vld [vmem:[%s3 + $0x38] sm:$0xf]
          %v1439 = vld [vmem:[%s3 + $0x3c] sm:$0xf]
          %v1440 = vld [vmem:[%s3 + $0x40] sm:$0xf]
          %v1441 = vld [vmem:[%s3 + $0x44] sm:$0xf]
          %v1442 = vld [vmem:[#allocation4] sm:$0x1]
          %v1444 = vlaneseq
          %v1445 = vshrl.u32 %v1444, 7
          %v1446 = vsub.s32 0, %v1445
          %v1447 = vrot.slane %v1442, %v1446
          %v1467 = vunpack.c.l.b16 %v1424
          %v1468 = vunpack.c.l.b16 %v1425
          %v1469 = vunpack.c.l.b16 %v1426
          %v1470 = vunpack.c.l.b16 %v1427
          %v1471 = vunpack.c.l.b16 %v1428
          %v1472 = vunpack.c.l.b16 %v1429
          %v1473 = vunpack.c.l.b16 %v1430
          %v1474 = vunpack.c.l.b16 %v1431
          %v1475 = vunpack.c.l.b16 %v1432
          %v1476 = vunpack.c.l.b16 %v1433
          %v1477 = vunpack.c.l.b16 %v1434
          %v1478 = vunpack.c.l.b16 %v1435
          %v1479 = vunpack.c.l.b16 %v1436
          %v1480 = vunpack.c.l.b16 %v1437
          %v1481 = vunpack.c.l.b16 %v1438
          %v1482 = vunpack.c.l.b16 %v1439
          %v1483 = vunpack.c.l.b16 %v1440
          %v1484 = vunpack.c.l.b16 %v1441
          %v1485 = vpack.c.b16 %v1468, %v1467
          %v1486 = vpack.c.b16 %v1470, %v1469
          %v1487 = vpack.c.b16 %v1472, %v1471
          %v1488 = vpack.c.b16 %v1474, %v1473
          %v1489 = vpack.c.b16 %v1476, %v1475
          %v1490 = vpack.c.b16 %v1478, %v1477
          %v1491 = vpack.c.b16 %v1480, %v1479
          %v1492 = vpack.c.b16 %v1482, %v1481
          %v1493 = vpack.c.b16 %v1484, %v1483
          %vm1503 = vcmask 130048
          %v1505 = vsel %vm1503, %v1361, 0
          %v1508 = vsel %vm1503, %v1363, 0
          %v1511 = vsel %vm1503, %v1365, 0
          %v1514 = vsel %vm1503, %v1367, 0
          %v1517 = vsel %vm1503, %v1369, 0
          %v1520 = vsel %vm1503, %v1371, 0
          %v1523 = vsel %vm1503, %v1373, 0
          %v1526 = vsel %vm1503, %v1375, 0
          %v1529 = vsel %vm1503, %v1377, 0
          %v1532 = vsel %vm1503, %v1379, 0
          %v1535 = vsel %vm1503, %v1381, 0
          %v1538 = vsel %vm1503, %v1383, 0
          %v1541 = vsel %vm1503, %v1385, 0
          %v1544 = vsel %vm1503, %v1387, 0
          %v1547 = vsel %vm1503, %v1389, 0
          %v1550 = vsel %vm1503, %v1391, 0
          %v1553 = vsel %vm1503, %v1393, 0
          %v1556 = vsel %vm1503, %v1395, 0
          %v1559 = vsel %vm1503, %v1397, 0
          %v1562 = vsel %vm1503, %v1399, 0
          %v1565 = vsel %vm1503, %v1401, 0
          %v1568 = vsel %vm1503, %v1403, 0
          %v1571 = vsel %vm1503, %v1405, 0
          %v1574 = vsel %vm1503, %v1407, 0
          %v1577 = vsel %vm1503, %v1409, 0
          %v1580 = vsel %vm1503, %v1411, 0
          %v1583 = vsel %vm1503, %v1413, 0
          %v1586 = vsel %vm1503, %v1415, 0
          %v1589 = vsel %vm1503, %v1417, 0
          %v1592 = vsel %vm1503, %v1419, 0
          %v1595 = vsel %vm1503, %v1421, 0
          %v1598 = vsel %vm1503, %v1423, 0
          %1600 = vmatprep.subr.bf16.mxu0 0
          %1601 = vmatpush1.bf16.msra.mxu0 %v1485
          %1602 = vmatprep.subr.bf16.mxu0 0
          %1603 = vmatpush1.bf16.msra.mxu0 %v1486
          %1604 = vmatprep.subr.bf16.mxu0 0
          %1605 = vmatpush1.bf16.msra.mxu0 %v1487
          %1606 = vmatprep.subr.bf16.mxu0 0
          %1607 = vmatpush1.bf16.msra.mxu0 %v1488
          %1608 = vmatprep.subr.bf16.mxu0 0
          %1609 = vmatpush1.bf16.msra.mxu0 %v1489
          %1610 = vmatprep.subr.bf16.mxu0 0
          %1611 = vmatpush1.bf16.msra.mxu0 %v1490
          %1612 = vmatprep.subr.bf16.mxu0 0
          %1613 = vmatpush1.bf16.msra.mxu0 %v1491
          %1614 = vmatprep.subr.bf16.mxu0 0
          %1615 = vmatpush1.bf16.msra.mxu0 %v1492
          %1616 = vmatprep.subr.bf16.mxu0 0
          %1617 = vmatpush1.bf16.msra.mxu0 %v1493
          %1618 = vmatprep.subr.bf16.mxu0 0
          %1619 = vmatpush1.bf16.msra.mxu0 0
          %1620 = vmatprep.subr.bf16.mxu0 0
          %1621 = vmatpush1.bf16.msra.mxu0 0
          %1622 = vmatprep.subr.bf16.mxu0 0
          %1623 = vmatpush1.bf16.msra.mxu0 0
          %1624 = vmatprep.subr.bf16.mxu0 0
          %1625 = vmatpush1.bf16.msra.mxu0 0
          %1626 = vmatprep.subr.bf16.mxu0 0
          %1627 = vmatpush1.bf16.msra.mxu0 0
          %1628 = vmatprep.subr.bf16.mxu0 0
          %1629 = vmatpush1.bf16.msra.mxu0 0
          %1630 = vmatprep.subr.bf16.mxu0 0
          %1631 = vmatpush1.bf16.msra.mxu0 0
          %1632 = vmatprep.mubr.bf16.mxu0 %v1505
          %1633 = vmatmul.mubr.bf16.gmra.mrb[0].mxu0 %v1360
          %v1634 = vpop.f32.mrb[0].mxu0
          %v1635 = vadd.f32 %v1447, %v1634
          %v1636 = vpop.f32.mrb[0].mxu0
          %v1637 = vpop.f32.mrb[0].mxu0
          %v1638 = vadd.f32 %v1447, %v1637
          %v1639 = vpop.f32.mrb[0].mxu0
          %1640 = vmatprep.mubr.bf16.mxu0 %v1508
          %1641 = vmatmul.mubr.bf16.gmra.mrb[0].mxu0 %v1362
          %v1642 = vpop.f32.mrb[0].mxu0
          %v1643 = vadd.f32 %v1447, %v1642
          %v1644 = vpop.f32.mrb[0].mxu0
          %v1645 = vpop.f32.mrb[0].mxu0
          %v1646 = vadd.f32 %v1447, %v1645
          %v1647 = vpop.f32.mrb[0].mxu0
          %1648 = vmatprep.mubr.bf16.mxu0 %v1511
          %1649 = vmatmul.mubr.bf16.gmra.mrb[0].mxu0 %v1364
          %v1650 = vpop.f32.mrb[0].mxu0
          %v1651 = vadd.f32 %v1447, %v1650
          %v1652 = vpop.f32.mrb[0].mxu0
          %v1653 = vpop.f32.mrb[0].mxu0
          %v1654 = vadd.f32 %v1447, %v1653
          %v1655 = vpop.f32.mrb[0].mxu0
          %1656 = vmatprep.mubr.bf16.mxu0 %v1514
          %1657 = vmatmul.mubr.bf16.gmra.mrb[0].mxu0 %v1366
          %v1658 = vpop.f32.mrb[0].mxu0
          %v1659 = vadd.f32 %v1447, %v1658
          %v1660 = vpop.f32.mrb[0].mxu0
          %v1661 = vpop.f32.mrb[0].mxu0
          %v1662 = vadd.f32 %v1447, %v1661
          %v1663 = vpop.f32.mrb[0].mxu0
          %1664 = vmatprep.mubr.bf16.mxu0 %v1517
          %1665 = vmatmul.mubr.bf16.gmra.mrb[0].mxu0 %v1368
          %v1666 = vpop.f32.mrb[0].mxu0
          %v1667 = vadd.f32 %v1447, %v1666
          %v1668 = vpop.f32.mrb[0].mxu0
          %v1669 = vpop.f32.mrb[0].mxu0
          %v1670 = vadd.f32 %v1447, %v1669
          %v1671 = vpop.f32.mrb[0].mxu0
          %1672 = vmatprep.mubr.bf16.mxu0 %v1520
          %1673 = vmatmul.mubr.bf16.gmra.mrb[0].mxu0 %v1370
          %v1674 = vpop.f32.mrb[0].mxu0
          %v1675 = vadd.f32 %v1447, %v1674
          %v1676 = vpop.f32.mrb[0].mxu0
          %v1677 = vpop.f32.mrb[0].mxu0
          %v1678 = vadd.f32 %v1447, %v1677
          %v1679 = vpop.f32.mrb[0].mxu0
          %1680 = vmatprep.mubr.bf16.mxu0 %v1523
          %1681 = vmatmul.mubr.bf16.gmra.mrb[0].mxu0 %v1372
          %v1682 = vpop.f32.mrb[0].mxu0
          %v1683 = vadd.f32 %v1447, %v1682
          %v1684 = vpop.f32.mrb[0].mxu0
          %v1685 = vpop.f32.mrb[0].mxu0
          %v1686 = vadd.f32 %v1447, %v1685
          %v1687 = vpop.f32.mrb[0].mxu0
          %1688 = vmatprep.mubr.bf16.mxu0 %v1526
          %1689 = vmatmul.mubr.bf16.gmra.mrb[0].mxu0 %v1374
          %v1690 = vpop.f32.mrb[0].mxu0
          %v1691 = vadd.f32 %v1447, %v1690
          %v1692 = vpop.f32.mrb[0].mxu0
          %v1693 = vpop.f32.mrb[0].mxu0
          %v1694 = vadd.f32 %v1447, %v1693
          %v1695 = vpop.f32.mrb[0].mxu0
          %1696 = vmatprep.mubr.bf16.mxu0 %v1529
          %1697 = vmatmul.mubr.bf16.gmra.mrb[0].mxu0 %v1376
          %v1698 = vpop.f32.mrb[0].mxu0
          %v1699 = vadd.f32 %v1447, %v1698
          %v1700 = vpop.f32.mrb[0].mxu0
          %v1701 = vpop.f32.mrb[0].mxu0
          %v1702 = vadd.f32 %v1447, %v1701
          %v1703 = vpop.f32.mrb[0].mxu0
          %1704 = vmatprep.mubr.bf16.mxu0 %v1532
          %1705 = vmatmul.mubr.bf16.gmra.mrb[0].mxu0 %v1378
          %v1706 = vpop.f32.mrb[0].mxu0
          %v1707 = vadd.f32 %v1447, %v1706
          %v1708 = vpop.f32.mrb[0].mxu0
          %v1709 = vpop.f32.mrb[0].mxu0
          %v1710 = vadd.f32 %v1447, %v1709
          %v1711 = vpop.f32.mrb[0].mxu0
          %1712 = vmatprep.mubr.bf16.mxu0 %v1535
          %1713 = vmatmul.mubr.bf16.gmra.mrb[0].mxu0 %v1380
          %v1714 = vpop.f32.mrb[0].mxu0
          %v1715 = vadd.f32 %v1447, %v1714
          %v1716 = vpop.f32.mrb[0].mxu0
          %v1717 = vpop.f32.mrb[0].mxu0
          %v1718 = vadd.f32 %v1447, %v1717
          %v1719 = vpop.f32.mrb[0].mxu0
          %1720 = vmatprep.mubr.bf16.mxu0 %v1538
          %1721 = vmatmul.mubr.bf16.gmra.mrb[0].mxu0 %v1382
          %v1722 = vpop.f32.mrb[0].mxu0
          %v1723 = vadd.f32 %v1447, %v1722
          %v1724 = vpop.f32.mrb[0].mxu0
          %v1725 = vpop.f32.mrb[0].mxu0
          %v1726 = vadd.f32 %v1447, %v1725
          %v1727 = vpop.f32.mrb[0].mxu0
          %1728 = vmatprep.mubr.bf16.mxu0 %v1541
          %1729 = vmatmul.mubr.bf16.gmra.mrb[0].mxu0 %v1384
          %v1730 = vpop.f32.mrb[0].mxu0
          %v1731 = vadd.f32 %v1447, %v1730
          %v1732 = vpop.f32.mrb[0].mxu0
          %v1733 = vpop.f32.mrb[0].mxu0
          %v1734 = vadd.f32 %v1447, %v1733
          %v1735 = vpop.f32.mrb[0].mxu0
          %1736 = vmatprep.mubr.bf16.mxu0 %v1544
          %1737 = vmatmul.mubr.bf16.gmra.mrb[0].mxu0 %v1386
          %v1738 = vpop.f32.mrb[0].mxu0
          %v1739 = vadd.f32 %v1447, %v1738
          %v1740 = vpop.f32.mrb[0].mxu0
          %v1741 = vpop.f32.mrb[0].mxu0
          %v1742 = vadd.f32 %v1447, %v1741
          %v1743 = vpop.f32.mrb[0].mxu0
          %1744 = vmatprep.mubr.bf16.mxu0 %v1547
          %1745 = vmatmul.mubr.bf16.gmra.mrb[0].mxu0 %v1388
          %v1746 = vpop.f32.mrb[0].mxu0
          %v1747 = vadd.f32 %v1447, %v1746
          %v1748 = vpop.f32.mrb[0].mxu0
          %v1749 = vpop.f32.mrb[0].mxu0
          %v1750 = vadd.f32 %v1447, %v1749
          %v1751 = vpop.f32.mrb[0].mxu0
          %1752 = vmatprep.mubr.bf16.mxu0 %v1550
          %1753 = vmatmul.mubr.bf16.gmra.mrb[0].mxu0 %v1390
          %v1754 = vpop.f32.mrb[0].mxu0
          %v1755 = vadd.f32 %v1447, %v1754
          %v1756 = vpop.f32.mrb[0].mxu0
          %v1757 = vpop.f32.mrb[0].mxu0
          %v1758 = vadd.f32 %v1447, %v1757
          %v1759 = vpop.f32.mrb[0].mxu0
          %1760 = vmatprep.mubr.bf16.mxu0 %v1553
          %1761 = vmatmul.mubr.bf16.gmra.mrb[0].mxu0 %v1392
          %v1762 = vpop.f32.mrb[0].mxu0
          %v1763 = vadd.f32 %v1447, %v1762
          %v1764 = vpop.f32.mrb[0].mxu0
          %v1765 = vpop.f32.mrb[0].mxu0
          %v1766 = vadd.f32 %v1447, %v1765
          %v1767 = vpop.f32.mrb[0].mxu0
          %1768 = vmatprep.mubr.bf16.mxu0 %v1556
          %1769 = vmatmul.mubr.bf16.gmra.mrb[0].mxu0 %v1394
          %v1770 = vpop.f32.mrb[0].mxu0
          %v1771 = vadd.f32 %v1447, %v1770
          %v1772 = vpop.f32.mrb[0].mxu0
          %v1773 = vpop.f32.mrb[0].mxu0
          %v1774 = vadd.f32 %v1447, %v1773
          %v1775 = vpop.f32.mrb[0].mxu0
          %1776 = vmatprep.mubr.bf16.mxu0 %v1559
          %1777 = vmatmul.mubr.bf16.gmra.mrb[0].mxu0 %v1396
          %v1778 = vpop.f32.mrb[0].mxu0
          %v1779 = vadd.f32 %v1447, %v1778
          %v1780 = vpop.f32.mrb[0].mxu0
          %v1781 = vpop.f32.mrb[0].mxu0
          %v1782 = vadd.f32 %v1447, %v1781
          %v1783 = vpop.f32.mrb[0].mxu0
          %1784 = vmatprep.mubr.bf16.mxu0 %v1562
          %1785 = vmatmul.mubr.bf16.gmra.mrb[0].mxu0 %v1398
          %v1786 = vpop.f32.mrb[0].mxu0
          %v1787 = vadd.f32 %v1447, %v1786
          %v1788 = vpop.f32.mrb[0].mxu0
          %v1789 = vpop.f32.mrb[0].mxu0
          %v1790 = vadd.f32 %v1447, %v1789
          %v1791 = vpop.f32.mrb[0].mxu0
          %1792 = vmatprep.mubr.bf16.mxu0 %v1565
          %1793 = vmatmul.mubr.bf16.gmra.mrb[0].mxu0 %v1400
          %v1794 = vpop.f32.mrb[0].mxu0
          %v1795 = vadd.f32 %v1447, %v1794
          %v1796 = vpop.f32.mrb[0].mxu0
          %v1797 = vpop.f32.mrb[0].mxu0
          %v1798 = vadd.f32 %v1447, %v1797
          %v1799 = vpop.f32.mrb[0].mxu0
          %1800 = vmatprep.mubr.bf16.mxu0 %v1568
          %1801 = vmatmul.mubr.bf16.gmra.mrb[0].mxu0 %v1402
          %v1802 = vpop.f32.mrb[0].mxu0
          %v1803 = vadd.f32 %v1447, %v1802
          %v1804 = vpop.f32.mrb[0].mxu0
          %v1805 = vpop.f32.mrb[0].mxu0
          %v1806 = vadd.f32 %v1447, %v1805
          %v1807 = vpop.f32.mrb[0].mxu0
          %1808 = vmatprep.mubr.bf16.mxu0 %v1571
          %1809 = vmatmul.mubr.bf16.gmra.mrb[0].mxu0 %v1404
          %v1810 = vpop.f32.mrb[0].mxu0
          %v1811 = vadd.f32 %v1447, %v1810
          %v1812 = vpop.f32.mrb[0].mxu0
          %v1813 = vpop.f32.mrb[0].mxu0
          %v1814 = vadd.f32 %v1447, %v1813
          %v1815 = vpop.f32.mrb[0].mxu0
          %1816 = vmatprep.mubr.bf16.mxu0 %v1574
          %1817 = vmatmul.mubr.bf16.gmra.mrb[0].mxu0 %v1406
          %v1818 = vpop.f32.mrb[0].mxu0
          %v1819 = vadd.f32 %v1447, %v1818
          %v1820 = vpop.f32.mrb[0].mxu0
          %v1821 = vpop.f32.mrb[0].mxu0
          %v1822 = vadd.f32 %v1447, %v1821
          %v1823 = vpop.f32.mrb[0].mxu0
          %1824 = vmatprep.mubr.bf16.mxu0 %v1577
          %1825 = vmatmul.mubr.bf16.gmra.mrb[0].mxu0 %v1408
          %v1826 = vpop.f32.mrb[0].mxu0
          %v1827 = vadd.f32 %v1447, %v1826
          %v1828 = vpop.f32.mrb[0].mxu0
          %v1829 = vpop.f32.mrb[0].mxu0
          %v1830 = vadd.f32 %v1447, %v1829
          %v1831 = vpop.f32.mrb[0].mxu0
          %1832 = vmatprep.mubr.bf16.mxu0 %v1580
          %1833 = vmatmul.mubr.bf16.gmra.mrb[0].mxu0 %v1410
          %v1834 = vpop.f32.mrb[0].mxu0
          %v1835 = vadd.f32 %v1447, %v1834
          %v1836 = vpop.f32.mrb[0].mxu0
          %v1837 = vpop.f32.mrb[0].mxu0
          %v1838 = vadd.f32 %v1447, %v1837
          %v1839 = vpop.f32.mrb[0].mxu0
          %1840 = vmatprep.mubr.bf16.mxu0 %v1583
          %1841 = vmatmul.mubr.bf16.gmra.mrb[0].mxu0 %v1412
          %v1842 = vpop.f32.mrb[0].mxu0
          %v1843 = vadd.f32 %v1447, %v1842
          %v1844 = vpop.f32.mrb[0].mxu0
          %v1845 = vpop.f32.mrb[0].mxu0
          %v1846 = vadd.f32 %v1447, %v1845
          %v1847 = vpop.f32.mrb[0].mxu0
          %1848 = vmatprep.mubr.bf16.mxu0 %v1586
          %1849 = vmatmul.mubr.bf16.gmra.mrb[0].mxu0 %v1414
          %v1850 = vpop.f32.mrb[0].mxu0
          %v1851 = vadd.f32 %v1447, %v1850
          %v1852 = vpop.f32.mrb[0].mxu0
          %v1853 = vpop.f32.mrb[0].mxu0
          %v1854 = vadd.f32 %v1447, %v1853
          %v1855 = vpop.f32.mrb[0].mxu0
          %1856 = vmatprep.mubr.bf16.mxu0 %v1589
          %1857 = vmatmul.mubr.bf16.gmra.mrb[0].mxu0 %v1416
          %v1858 = vpop.f32.mrb[0].mxu0
          %v1859 = vadd.f32 %v1447, %v1858
          %v1860 = vpop.f32.mrb[0].mxu0
          %v1861 = vpop.f32.mrb[0].mxu0
          %v1862 = vadd.f32 %v1447, %v1861
          %v1863 = vpop.f32.mrb[0].mxu0
          %1864 = vmatprep.mubr.bf16.mxu0 %v1592
          %1865 = vmatmul.mubr.bf16.gmra.mrb[0].mxu0 %v1418
          %v1866 = vpop.f32.mrb[0].mxu0
          %v1867 = vadd.f32 %v1447, %v1866
          %v1868 = vpop.f32.mrb[0].mxu0
          %v1869 = vpop.f32.mrb[0].mxu0
          %v1870 = vadd.f32 %v1447, %v1869
          %v1871 = vpop.f32.mrb[0].mxu0
          %1872 = vmatprep.mubr.bf16.mxu0 %v1595
          %1873 = vmatmul.mubr.bf16.gmra.mrb[0].mxu0 %v1420
          %v1874 = vpop.f32.mrb[0].mxu0
          %v1875 = vadd.f32 %v1447, %v1874
          %v1876 = vpop.f32.mrb[0].mxu0
          %v1877 = vpop.f32.mrb[0].mxu0
          %v1878 = vadd.f32 %v1447, %v1877
          %v1879 = vpop.f32.mrb[0].mxu0
          %1880 = vmatprep.mubr.bf16.mxu0 %v1598
          %1881 = vmatmul.mubr.bf16.gmra.mrb[0].mxu0 %v1422
          %v1882 = vpop.f32.mrb[0].mxu0
          %v1883 = vadd.f32 %v1447, %v1882
          %v1884 = vpop.f32.mrb[0].mxu0
          %v1885 = vpop.f32.mrb[0].mxu0
          %v1886 = vadd.f32 %v1447, %v1885
          %v1887 = vpop.f32.mrb[0].mxu0
          %1888 = vdwg.mxu0
          %v1889 = vtanh.pop %v1635
          %v1890 = vtanh.pop %v1638
          %v1891 = vtanh.pop %v1643
          %v1892 = vtanh.pop %v1646
          %v1893 = vtanh.pop %v1651
          %v1894 = vtanh.pop %v1654
          %v1895 = vtanh.pop %v1659
          %v1896 = vtanh.pop %v1662
          %v1897 = vtanh.pop %v1667
          %v1898 = vtanh.pop %v1670
          %v1899 = vtanh.pop %v1675
          %v1900 = vtanh.pop %v1678
          %v1901 = vtanh.pop %v1683
          %v1902 = vtanh.pop %v1686
          %v1903 = vtanh.pop %v1691
          %v1904 = vtanh.pop %v1694
          %v1905 = vtanh.pop %v1699
          %v1906 = vtanh.pop %v1702
          %v1907 = vtanh.pop %v1707
          %v1908 = vtanh.pop %v1710
          %v1909 = vtanh.pop %v1715
          %v1910 = vtanh.pop %v1718
          %v1911 = vtanh.pop %v1723
          %v1912 = vtanh.pop %v1726
          %v1913 = vtanh.pop %v1731
          %v1914 = vtanh.pop %v1734
          %v1915 = vtanh.pop %v1739
          %v1916 = vtanh.pop %v1742
          %v1917 = vtanh.pop %v1747
          %v1918 = vtanh.pop %v1750
          %v1919 = vtanh.pop %v1755
          %v1920 = vtanh.pop %v1758
          %v1921 = vtanh.pop %v1763
          %v1922 = vtanh.pop %v1766
          %v1923 = vtanh.pop %v1771
          %v1924 = vtanh.pop %v1774
          %v1925 = vtanh.pop %v1779
          %v1926 = vtanh.pop %v1782
          %v1927 = vtanh.pop %v1787
          %v1928 = vtanh.pop %v1790
          %v1929 = vtanh.pop %v1795
          %v1930 = vtanh.pop %v1798
          %v1931 = vtanh.pop %v1803
          %v1932 = vtanh.pop %v1806
          %v1933 = vtanh.pop %v1811
          %v1934 = vtanh.pop %v1814
          %v1935 = vtanh.pop %v1819
          %v1936 = vtanh.pop %v1822
          %v1937 = vtanh.pop %v1827
          %v1938 = vtanh.pop %v1830
          %v1939 = vtanh.pop %v1835
          %v1940 = vtanh.pop %v1838
          %v1941 = vtanh.pop %v1843
          %v1942 = vtanh.pop %v1846
          %v1943 = vtanh.pop %v1851
          %v1944 = vtanh.pop %v1854
          %v1945 = vtanh.pop %v1859
          %v1946 = vtanh.pop %v1862
          %v1947 = vtanh.pop %v1867
          %v1948 = vtanh.pop %v1870
          %v1949 = vtanh.pop %v1875
          %v1950 = vtanh.pop %v1878
          %v1951 = vtanh.pop %v1883
          %v1952 = vtanh.pop %v1886
          %2017 = vrot.lane.b32.xlu0 %v1889, 116
          %v2018 = vpop.permute.xlu0 %2017
          %2019 = vrot.lane.b32.xlu0 %v1890, 116
          %v2020 = vpop.permute.xlu0 %2019
          %2021 = vrot.lane.b32.xlu0 %v1891, 116
          %v2022 = vpop.permute.xlu0 %2021
          %2023 = vrot.lane.b32.xlu0 %v1892, 116
          %v2024 = vpop.permute.xlu0 %2023
          %2025 = vrot.lane.b32.xlu0 %v1893, 116
          %v2026 = vpop.permute.xlu0 %2025
          %2027 = vrot.lane.b32.xlu0 %v1894, 116
          %v2028 = vpop.permute.xlu0 %2027
          %2029 = vrot.lane.b32.xlu0 %v1895, 116
          %v2030 = vpop.permute.xlu0 %2029
          %2031 = vrot.lane.b32.xlu0 %v1896, 116
          %v2032 = vpop.permute.xlu0 %2031
          %2033 = vrot.lane.b32.xlu0 %v1897, 116
          %v2034 = vpop.permute.xlu0 %2033
          %2035 = vrot.lane.b32.xlu0 %v1898, 116
          %v2036 = vpop.permute.xlu0 %2035
          %2037 = vrot.lane.b32.xlu0 %v1899, 116
          %v2038 = vpop.permute.xlu0 %2037
          %2039 = vrot.lane.b32.xlu0 %v1900, 116
          %v2040 = vpop.permute.xlu0 %2039
          %2041 = vrot.lane.b32.xlu0 %v1901, 116
          %v2042 = vpop.permute.xlu0 %2041
          %2043 = vrot.lane.b32.xlu0 %v1902, 116
          %v2044 = vpop.permute.xlu0 %2043
          %2045 = vrot.lane.b32.xlu0 %v1903, 116
          %v2046 = vpop.permute.xlu0 %2045
          %2047 = vrot.lane.b32.xlu0 %v1904, 116
          %v2048 = vpop.permute.xlu0 %2047
          %2049 = vrot.lane.b32.xlu0 %v1905, 116
          %v2050 = vpop.permute.xlu0 %2049
          %2051 = vrot.lane.b32.xlu0 %v1906, 116
          %v2052 = vpop.permute.xlu0 %2051
          %2053 = vrot.lane.b32.xlu0 %v1907, 116
          %v2054 = vpop.permute.xlu0 %2053
          %2055 = vrot.lane.b32.xlu0 %v1908, 116
          %v2056 = vpop.permute.xlu0 %2055
          %2057 = vrot.lane.b32.xlu0 %v1909, 116
          %v2058 = vpop.permute.xlu0 %2057
          %2059 = vrot.lane.b32.xlu0 %v1910, 116
          %v2060 = vpop.permute.xlu0 %2059
          %2061 = vrot.lane.b32.xlu0 %v1911, 116
          %v2062 = vpop.permute.xlu0 %2061
          %2063 = vrot.lane.b32.xlu0 %v1912, 116
          %v2064 = vpop.permute.xlu0 %2063
          %2065 = vrot.lane.b32.xlu0 %v1913, 116
          %v2066 = vpop.permute.xlu0 %2065
          %2067 = vrot.lane.b32.xlu0 %v1914, 116
          %v2068 = vpop.permute.xlu0 %2067
          %2069 = vrot.lane.b32.xlu0 %v1915, 116
          %v2070 = vpop.permute.xlu0 %2069
          %2071 = vrot.lane.b32.xlu0 %v1916, 116
          %v2072 = vpop.permute.xlu0 %2071
          %2073 = vrot.lane.b32.xlu0 %v1917, 116
          %v2074 = vpop.permute.xlu0 %2073
          %2075 = vrot.lane.b32.xlu0 %v1918, 116
          %v2076 = vpop.permute.xlu0 %2075
          %2077 = vrot.lane.b32.xlu0 %v1919, 116
          %v2078 = vpop.permute.xlu0 %2077
          %2079 = vrot.lane.b32.xlu0 %v1920, 116
          %v2080 = vpop.permute.xlu0 %2079
          %2081 = vrot.lane.b32.xlu0 %v1921, 116
          %v2082 = vpop.permute.xlu0 %2081
          %2083 = vrot.lane.b32.xlu0 %v1922, 116
          %v2084 = vpop.permute.xlu0 %2083
          %2085 = vrot.lane.b32.xlu0 %v1923, 116
          %v2086 = vpop.permute.xlu0 %2085
          %2087 = vrot.lane.b32.xlu0 %v1924, 116
          %v2088 = vpop.permute.xlu0 %2087
          %2089 = vrot.lane.b32.xlu0 %v1925, 116
          %v2090 = vpop.permute.xlu0 %2089
          %2091 = vrot.lane.b32.xlu0 %v1926, 116
          %v2092 = vpop.permute.xlu0 %2091
          %2093 = vrot.lane.b32.xlu0 %v1927, 116
          %v2094 = vpop.permute.xlu0 %2093
          %2095 = vrot.lane.b32.xlu0 %v1928, 116
          %v2096 = vpop.permute.xlu0 %2095
          %2097 = vrot.lane.b32.xlu0 %v1929, 116
          %v2098 = vpop.permute.xlu0 %2097
          %2099 = vrot.lane.b32.xlu0 %v1930, 116
          %v2100 = vpop.permute.xlu0 %2099
          %2101 = vrot.lane.b32.xlu0 %v1931, 116
          %v2102 = vpop.permute.xlu0 %2101
          %2103 = vrot.lane.b32.xlu0 %v1932, 116
          %v2104 = vpop.permute.xlu0 %2103
          %2105 = vrot.lane.b32.xlu0 %v1933, 116
          %v2106 = vpop.permute.xlu0 %2105
          %2107 = vrot.lane.b32.xlu0 %v1934, 116
          %v2108 = vpop.permute.xlu0 %2107
          %2109 = vrot.lane.b32.xlu0 %v1935, 116
          %v2110 = vpop.permute.xlu0 %2109
          %2111 = vrot.lane.b32.xlu0 %v1936, 116
          %v2112 = vpop.permute.xlu0 %2111
          %2113 = vrot.lane.b32.xlu0 %v1937, 116
          %v2114 = vpop.permute.xlu0 %2113
          %2115 = vrot.lane.b32.xlu0 %v1938, 116
          %v2116 = vpop.permute.xlu0 %2115
          %2117 = vrot.lane.b32.xlu0 %v1939, 116
          %v2118 = vpop.permute.xlu0 %2117
          %2119 = vrot.lane.b32.xlu0 %v1940, 116
          %v2120 = vpop.permute.xlu0 %2119
          %2121 = vrot.lane.b32.xlu0 %v1941, 116
          %v2122 = vpop.permute.xlu0 %2121
          %2123 = vrot.lane.b32.xlu0 %v1942, 116
          %v2124 = vpop.permute.xlu0 %2123
          %2125 = vrot.lane.b32.xlu0 %v1943, 116
          %v2126 = vpop.permute.xlu0 %2125
          %2127 = vrot.lane.b32.xlu0 %v1944, 116
          %v2128 = vpop.permute.xlu0 %2127
          %2129 = vrot.lane.b32.xlu0 %v1945, 116
          %v2130 = vpop.permute.xlu0 %2129
          %2131 = vrot.lane.b32.xlu0 %v1946, 116
          %v2132 = vpop.permute.xlu0 %2131
          %2133 = vrot.lane.b32.xlu0 %v1947, 116
          %v2134 = vpop.permute.xlu0 %2133
          %2135 = vrot.lane.b32.xlu0 %v1948, 116
          %v2136 = vpop.permute.xlu0 %2135
          %2137 = vrot.lane.b32.xlu0 %v1949, 116
          %v2138 = vpop.permute.xlu0 %2137
          %2139 = vrot.lane.b32.xlu0 %v1950, 116
          %v2140 = vpop.permute.xlu0 %2139
          %2141 = vrot.lane.b32.xlu0 %v1951, 116
          %v2142 = vpop.permute.xlu0 %2141
          %2143 = vrot.lane.b32.xlu0 %v1952, 116
          %v2144 = vpop.permute.xlu0 %2143
          %v2209 = vadd.f32 %v1889, %v2018
          %v2210 = vadd.f32 %v1890, %v2020
          %v2211 = vadd.f32 %v1891, %v2022
          %v2212 = vadd.f32 %v1892, %v2024
          %v2213 = vadd.f32 %v1893, %v2026
          %v2214 = vadd.f32 %v1894, %v2028
          %v2215 = vadd.f32 %v1895, %v2030
          %v2216 = vadd.f32 %v1896, %v2032
          %v2217 = vadd.f32 %v1897, %v2034
          %v2218 = vadd.f32 %v1898, %v2036
          %v2219 = vadd.f32 %v1899, %v2038
          %v2220 = vadd.f32 %v1900, %v2040
          %v2221 = vadd.f32 %v1901, %v2042
          %v2222 = vadd.f32 %v1902, %v2044
          %v2223 = vadd.f32 %v1903, %v2046
          %v2224 = vadd.f32 %v1904, %v2048
          %v2225 = vadd.f32 %v1905, %v2050
          %v2226 = vadd.f32 %v1906, %v2052
          %v2227 = vadd.f32 %v1907, %v2054
          %v2228 = vadd.f32 %v1908, %v2056
          %v2229 = vadd.f32 %v1909, %v2058
          %v2230 = vadd.f32 %v1910, %v2060
          %v2231 = vadd.f32 %v1911, %v2062
          %v2232 = vadd.f32 %v1912, %v2064
          %v2233 = vadd.f32 %v1913, %v2066
          %v2234 = vadd.f32 %v1914, %v2068
          %v2235 = vadd.f32 %v1915, %v2070
          %v2236 = vadd.f32 %v1916, %v2072
          %v2237 = vadd.f32 %v1917, %v2074
          %v2238 = vadd.f32 %v1918, %v2076
          %v2239 = vadd.f32 %v1919, %v2078
          %v2240 = vadd.f32 %v1920, %v2080
          %v2241 = vadd.f32 %v1921, %v2082
          %v2242 = vadd.f32 %v1922, %v2084
          %v2243 = vadd.f32 %v1923, %v2086
          %v2244 = vadd.f32 %v1924, %v2088
          %v2245 = vadd.f32 %v1925, %v2090
          %v2246 = vadd.f32 %v1926, %v2092
          %v2247 = vadd.f32 %v1927, %v2094
          %v2248 = vadd.f32 %v1928, %v2096
          %v2249 = vadd.f32 %v1929, %v2098
          %v2250 = vadd.f32 %v1930, %v2100
          %v2251 = vadd.f32 %v1931, %v2102
          %v2252 = vadd.f32 %v1932, %v2104
          %v2253 = vadd.f32 %v1933, %v2106
          %v2254 = vadd.f32 %v1934, %v2108
          %v2255 = vadd.f32 %v1935, %v2110
          %v2256 = vadd.f32 %v1936, %v2112
          %v2257 = vadd.f32 %v1937, %v2114
          %v2258 = vadd.f32 %v1938, %v2116
          %v2259 = vadd.f32 %v1939, %v2118
          %v2260 = vadd.f32 %v1940, %v2120
          %v2261 = vadd.f32 %v1941, %v2122
          %v2262 = vadd.f32 %v1942, %v2124
          %v2263 = vadd.f32 %v1943, %v2126
          %v2264 = vadd.f32 %v1944, %v2128
          %v2265 = vadd.f32 %v1945, %v2130
          %v2266 = vadd.f32 %v1946, %v2132
          %v2267 = vadd.f32 %v1947, %v2134
          %v2268 = vadd.f32 %v1948, %v2136
          %v2269 = vadd.f32 %v1949, %v2138
          %v2270 = vadd.f32 %v1950, %v2140
          %v2271 = vadd.f32 %v1951, %v2142
          %v2272 = vadd.f32 %v1952, %v2144
          %v2273 = vmul.f32 %v2209, 0.5
          %v2274 = vmul.f32 %v2210, 0.5
          %v2275 = vmul.f32 %v2211, 0.5
          %v2276 = vmul.f32 %v2212, 0.5
          %v2277 = vmul.f32 %v2213, 0.5
          %v2278 = vmul.f32 %v2214, 0.5
          %v2279 = vmul.f32 %v2215, 0.5
          %v2280 = vmul.f32 %v2216, 0.5
          %v2281 = vmul.f32 %v2217, 0.5
          %v2282 = vmul.f32 %v2218, 0.5
          %v2283 = vmul.f32 %v2219, 0.5
          %v2284 = vmul.f32 %v2220, 0.5
          %v2285 = vmul.f32 %v2221, 0.5
          %v2286 = vmul.f32 %v2222, 0.5
          %v2287 = vmul.f32 %v2223, 0.5
          %v2288 = vmul.f32 %v2224, 0.5
          %v2289 = vmul.f32 %v2225, 0.5
          %v2290 = vmul.f32 %v2226, 0.5
          %v2291 = vmul.f32 %v2227, 0.5
          %v2292 = vmul.f32 %v2228, 0.5
          %v2293 = vmul.f32 %v2229, 0.5
          %v2294 = vmul.f32 %v2230, 0.5
          %v2295 = vmul.f32 %v2231, 0.5
          %v2296 = vmul.f32 %v2232, 0.5
          %v2297 = vmul.f32 %v2233, 0.5
          %v2298 = vmul.f32 %v2234, 0.5
          %v2299 = vmul.f32 %v2235, 0.5
          %v2300 = vmul.f32 %v2236, 0.5
          %v2301 = vmul.f32 %v2237, 0.5
          %v2302 = vmul.f32 %v2238, 0.5
          %v2303 = vmul.f32 %v2239, 0.5
          %v2304 = vmul.f32 %v2240, 0.5
          %v2305 = vmul.f32 %v2241, 0.5
          %v2306 = vmul.f32 %v2242, 0.5
          %v2307 = vmul.f32 %v2243, 0.5
          %v2308 = vmul.f32 %v2244, 0.5
          %v2309 = vmul.f32 %v2245, 0.5
          %v2310 = vmul.f32 %v2246, 0.5
          %v2311 = vmul.f32 %v2247, 0.5
          %v2312 = vmul.f32 %v2248, 0.5
          %v2313 = vmul.f32 %v2249, 0.5
          %v2314 = vmul.f32 %v2250, 0.5
          %v2315 = vmul.f32 %v2251, 0.5
          %v2316 = vmul.f32 %v2252, 0.5
          %v2317 = vmul.f32 %v2253, 0.5
          %v2318 = vmul.f32 %v2254, 0.5
          %v2319 = vmul.f32 %v2255, 0.5
          %v2320 = vmul.f32 %v2256, 0.5
          %v2321 = vmul.f32 %v2257, 0.5
          %v2322 = vmul.f32 %v2258, 0.5
          %v2323 = vmul.f32 %v2259, 0.5
          %v2324 = vmul.f32 %v2260, 0.5
          %v2325 = vmul.f32 %v2261, 0.5
          %v2326 = vmul.f32 %v2262, 0.5
          %v2327 = vmul.f32 %v2263, 0.5
          %v2328 = vmul.f32 %v2264, 0.5
          %v2329 = vmul.f32 %v2265, 0.5
          %v2330 = vmul.f32 %v2266, 0.5
          %v2331 = vmul.f32 %v2267, 0.5
          %v2332 = vmul.f32 %v2268, 0.5
          %v2333 = vmul.f32 %v2269, 0.5
          %v2334 = vmul.f32 %v2270, 0.5
          %v2335 = vmul.f32 %v2271, 0.5
          %v2336 = vmul.f32 %v2272, 0.5
          %s2337 = scalar_lea.vmem %s257, %s287 [#allocation6]
          %vm2338 = vcmask 97280
          %2339 = vst.msk [vmem:[%s2337] sm:$0xff] %vm2338, %v2273
          %2340 = vst.msk [vmem:[%s2337 + $0x8] sm:$0xff] %vm2338, %v2274
          %2341 = vst.msk [vmem:[%s2337 + $0x10] sm:$0xff] %vm2338, %v2275
          %2342 = vst.msk [vmem:[%s2337 + $0x18] sm:$0xff] %vm2338, %v2276
          %2343 = vst.msk [vmem:[%s2337 + $0x20] sm:$0xff] %vm2338, %v2277
          %2344 = vst.msk [vmem:[%s2337 + $0x28] sm:$0xff] %vm2338, %v2278
          %2345 = vst.msk [vmem:[%s2337 + $0x30] sm:$0xff] %vm2338, %v2279
          %2346 = vst.msk [vmem:[%s2337 + $0x38] sm:$0xff] %vm2338, %v2280
          %2347 = vst.msk [vmem:[%s2337 + $0x40] sm:$0xff] %vm2338, %v2281
          %2348 = vst.msk [vmem:[%s2337 + $0x48] sm:$0xff] %vm2338, %v2282
          %2349 = vst.msk [vmem:[%s2337 + $0x50] sm:$0xff] %vm2338, %v2283
          %2350 = vst.msk [vmem:[%s2337 + $0x58] sm:$0xff] %vm2338, %v2284
          %2351 = vst.msk [vmem:[%s2337 + $0x60] sm:$0xff] %vm2338, %v2285
          %2352 = vst.msk [vmem:[%s2337 + $0x68] sm:$0xff] %vm2338, %v2286
          %2353 = vst.msk [vmem:[%s2337 + $0x70] sm:$0xff] %vm2338, %v2287
          %2354 = vst.msk [vmem:[%s2337 + $0x78] sm:$0xff] %vm2338, %v2288
          %2355 = vst.msk [vmem:[%s2337 + $0x80] sm:$0xff] %vm2338, %v2289
          %2356 = vst.msk [vmem:[%s2337 + $0x88] sm:$0xff] %vm2338, %v2290
          %2357 = vst.msk [vmem:[%s2337 + $0x90] sm:$0xff] %vm2338, %v2291
          %2358 = vst.msk [vmem:[%s2337 + $0x98] sm:$0xff] %vm2338, %v2292
          %2359 = vst.msk [vmem:[%s2337 + $0xa0] sm:$0xff] %vm2338, %v2293
          %2360 = vst.msk [vmem:[%s2337 + $0xa8] sm:$0xff] %vm2338, %v2294
          %2361 = vst.msk [vmem:[%s2337 + $0xb0] sm:$0xff] %vm2338, %v2295
          %2362 = vst.msk [vmem:[%s2337 + $0xb8] sm:$0xff] %vm2338, %v2296
          %2363 = vst.msk [vmem:[%s2337 + $0xc0] sm:$0xff] %vm2338, %v2297
          %2364 = vst.msk [vmem:[%s2337 + $0xc8] sm:$0xff] %vm2338, %v2298
          %2365 = vst.msk [vmem:[%s2337 + $0xd0] sm:$0xff] %vm2338, %v2299
          %2366 = vst.msk [vmem:[%s2337 + $0xd8] sm:$0xff] %vm2338, %v2300
          %2367 = vst.msk [vmem:[%s2337 + $0xe0] sm:$0xff] %vm2338, %v2301
          %2368 = vst.msk [vmem:[%s2337 + $0xe8] sm:$0xff] %vm2338, %v2302
          %2369 = vst.msk [vmem:[%s2337 + $0xf0] sm:$0xff] %vm2338, %v2303
          %2370 = vst.msk [vmem:[%s2337 + $0xf8] sm:$0xff] %vm2338, %v2304
          %2371 = vst.msk [vmem:[%s2337 + $0x100] sm:$0xff] %vm2338, %v2305
          %2372 = vst.msk [vmem:[%s2337 + $0x108] sm:$0xff] %vm2338, %v2306
          %2373 = vst.msk [vmem:[%s2337 + $0x110] sm:$0xff] %vm2338, %v2307
          %2374 = vst.msk [vmem:[%s2337 + $0x118] sm:$0xff] %vm2338, %v2308
          %2375 = vst.msk [vmem:[%s2337 + $0x120] sm:$0xff] %vm2338, %v2309
          %2376 = vst.msk [vmem:[%s2337 + $0x128] sm:$0xff] %vm2338, %v2310
          %2377 = vst.msk [vmem:[%s2337 + $0x130] sm:$0xff] %vm2338, %v2311
          %2378 = vst.msk [vmem:[%s2337 + $0x138] sm:$0xff] %vm2338, %v2312
          %2379 = vst.msk [vmem:[%s2337 + $0x140] sm:$0xff] %vm2338, %v2313
          %2380 = vst.msk [vmem:[%s2337 + $0x148] sm:$0xff] %vm2338, %v2314
          %2381 = vst.msk [vmem:[%s2337 + $0x150] sm:$0xff] %vm2338, %v2315
          %2382 = vst.msk [vmem:[%s2337 + $0x158] sm:$0xff] %vm2338, %v2316
          %2383 = vst.msk [vmem:[%s2337 + $0x160] sm:$0xff] %vm2338, %v2317
          %2384 = vst.msk [vmem:[%s2337 + $0x168] sm:$0xff] %vm2338, %v2318
          %2385 = vst.msk [vmem:[%s2337 + $0x170] sm:$0xff] %vm2338, %v2319
          %2386 = vst.msk [vmem:[%s2337 + $0x178] sm:$0xff] %vm2338, %v2320
          %2387 = vst.msk [vmem:[%s2337 + $0x180] sm:$0xff] %vm2338, %v2321
          %2388 = vst.msk [vmem:[%s2337 + $0x188] sm:$0xff] %vm2338, %v2322
          %2389 = vst.msk [vmem:[%s2337 + $0x190] sm:$0xff] %vm2338, %v2323
          %2390 = vst.msk [vmem:[%s2337 + $0x198] sm:$0xff] %vm2338, %v2324
          %2391 = vst.msk [vmem:[%s2337 + $0x1a0] sm:$0xff] %vm2338, %v2325
          %2392 = vst.msk [vmem:[%s2337 + $0x1a8] sm:$0xff] %vm2338, %v2326
          %2393 = vst.msk [vmem:[%s2337 + $0x1b0] sm:$0xff] %vm2338, %v2327
          %2394 = vst.msk [vmem:[%s2337 + $0x1b8] sm:$0xff] %vm2338, %v2328
          %2395 = vst.msk [vmem:[%s2337 + $0x1c0] sm:$0xff] %vm2338, %v2329
          %2396 = vst.msk [vmem:[%s2337 + $0x1c8] sm:$0xff] %vm2338, %v2330
          %2397 = vst.msk [vmem:[%s2337 + $0x1d0] sm:$0xff] %vm2338, %v2331
          %2398 = vst.msk [vmem:[%s2337 + $0x1d8] sm:$0xff] %vm2338, %v2332
          %2399 = vst.msk [vmem:[%s2337 + $0x1e0] sm:$0xff] %vm2338, %v2333
          %2400 = vst.msk [vmem:[%s2337 + $0x1e8] sm:$0xff] %vm2338, %v2334
          %2401 = vst.msk [vmem:[%s2337 + $0x1f0] sm:$0xff] %vm2338, %v2335
          %2402 = vst.msk [vmem:[%s2337 + $0x1f8] sm:$0xff] %vm2338, %v2336
          %2403 = vrot.lane.b32.xlu0 %v1889, 104
          %v2404 = vpop.permute.xlu0 %2403
          %2405 = vrot.lane.b32.xlu0 %v1890, 104
          %v2406 = vpop.permute.xlu0 %2405
          %2407 = vrot.lane.b32.xlu0 %v1891, 104
          %v2408 = vpop.permute.xlu0 %2407
          %2409 = vrot.lane.b32.xlu0 %v1892, 104
          %v2410 = vpop.permute.xlu0 %2409
          %2411 = vrot.lane.b32.xlu0 %v1893, 104
          %v2412 = vpop.permute.xlu0 %2411
          %2413 = vrot.lane.b32.xlu0 %v1894, 104
          %v2414 = vpop.permute.xlu0 %2413
          %2415 = vrot.lane.b32.xlu0 %v1895, 104
          %v2416 = vpop.permute.xlu0 %2415
          %2417 = vrot.lane.b32.xlu0 %v1896, 104
          %v2418 = vpop.permute.xlu0 %2417
          %2419 = vrot.lane.b32.xlu0 %v1897, 104
          %v2420 = vpop.permute.xlu0 %2419
          %2421 = vrot.lane.b32.xlu0 %v1898, 104
          %v2422 = vpop.permute.xlu0 %2421
          %2423 = vrot.lane.b32.xlu0 %v1899, 104
          %v2424 = vpop.permute.xlu0 %2423
          %2425 = vrot.lane.b32.xlu0 %v1900, 104
          %v2426 = vpop.permute.xlu0 %2425
          %2427 = vrot.lane.b32.xlu0 %v1901, 104
          %v2428 = vpop.permute.xlu0 %2427
          %2429 = vrot.lane.b32.xlu0 %v1902, 104
          %v2430 = vpop.permute.xlu0 %2429
          %2431 = vrot.lane.b32.xlu0 %v1903, 104
          %v2432 = vpop.permute.xlu0 %2431
          %2433 = vrot.lane.b32.xlu0 %v1904, 104
          %v2434 = vpop.permute.xlu0 %2433
          %2435 = vrot.lane.b32.xlu0 %v1905, 104
          %v2436 = vpop.permute.xlu0 %2435
          %2437 = vrot.lane.b32.xlu0 %v1906, 104
          %v2438 = vpop.permute.xlu0 %2437
          %2439 = vrot.lane.b32.xlu0 %v1907, 104
          %v2440 = vpop.permute.xlu0 %2439
          %2441 = vrot.lane.b32.xlu0 %v1908, 104
          %v2442 = vpop.permute.xlu0 %2441
          %2443 = vrot.lane.b32.xlu0 %v1909, 104
          %v2444 = vpop.permute.xlu0 %2443
          %2445 = vrot.lane.b32.xlu0 %v1910, 104
          %v2446 = vpop.permute.xlu0 %2445
          %2447 = vrot.lane.b32.xlu0 %v1911, 104
          %v2448 = vpop.permute.xlu0 %2447
          %2449 = vrot.lane.b32.xlu0 %v1912, 104
          %v2450 = vpop.permute.xlu0 %2449
          %2451 = vrot.lane.b32.xlu0 %v1913, 104
          %v2452 = vpop.permute.xlu0 %2451
          %2453 = vrot.lane.b32.xlu0 %v1914, 104
          %v2454 = vpop.permute.xlu0 %2453
          %2455 = vrot.lane.b32.xlu0 %v1915, 104
          %v2456 = vpop.permute.xlu0 %2455
          %2457 = vrot.lane.b32.xlu0 %v1916, 104
          %v2458 = vpop.permute.xlu0 %2457
          %2459 = vrot.lane.b32.xlu0 %v1917, 104
          %v2460 = vpop.permute.xlu0 %2459
          %2461 = vrot.lane.b32.xlu0 %v1918, 104
          %v2462 = vpop.permute.xlu0 %2461
          %2463 = vrot.lane.b32.xlu0 %v1919, 104
          %v2464 = vpop.permute.xlu0 %2463
          %2465 = vrot.lane.b32.xlu0 %v1920, 104
          %v2466 = vpop.permute.xlu0 %2465
          %2467 = vrot.lane.b32.xlu0 %v1921, 104
          %v2468 = vpop.permute.xlu0 %2467
          %2469 = vrot.lane.b32.xlu0 %v1922, 104
          %v2470 = vpop.permute.xlu0 %2469
          %2471 = vrot.lane.b32.xlu0 %v1923, 104
          %v2472 = vpop.permute.xlu0 %2471
          %2473 = vrot.lane.b32.xlu0 %v1924, 104
          %v2474 = vpop.permute.xlu0 %2473
          %2475 = vrot.lane.b32.xlu0 %v1925, 104
          %v2476 = vpop.permute.xlu0 %2475
          %2477 = vrot.lane.b32.xlu0 %v1926, 104
          %v2478 = vpop.permute.xlu0 %2477
          %2479 = vrot.lane.b32.xlu0 %v1927, 104
          %v2480 = vpop.permute.xlu0 %2479
          %2481 = vrot.lane.b32.xlu0 %v1928, 104
          %v2482 = vpop.permute.xlu0 %2481
          %2483 = vrot.lane.b32.xlu0 %v1929, 104
          %v2484 = vpop.permute.xlu0 %2483
          %2485 = vrot.lane.b32.xlu0 %v1930, 104
          %v2486 = vpop.permute.xlu0 %2485
          %2487 = vrot.lane.b32.xlu0 %v1931, 104
          %v2488 = vpop.permute.xlu0 %2487
          %2489 = vrot.lane.b32.xlu0 %v1932, 104
          %v2490 = vpop.permute.xlu0 %2489
          %2491 = vrot.lane.b32.xlu0 %v1933, 104
          %v2492 = vpop.permute.xlu0 %2491
          %2493 = vrot.lane.b32.xlu0 %v1934, 104
          %v2494 = vpop.permute.xlu0 %2493
          %2495 = vrot.lane.b32.xlu0 %v1935, 104
          %v2496 = vpop.permute.xlu0 %2495
          %2497 = vrot.lane.b32.xlu0 %v1936, 104
          %v2498 = vpop.permute.xlu0 %2497
          %2499 = vrot.lane.b32.xlu0 %v1937, 104
          %v2500 = vpop.permute.xlu0 %2499
          %2501 = vrot.lane.b32.xlu0 %v1938, 104
          %v2502 = vpop.permute.xlu0 %2501
          %2503 = vrot.lane.b32.xlu0 %v1939, 104
          %v2504 = vpop.permute.xlu0 %2503
          %2505 = vrot.lane.b32.xlu0 %v1940, 104
          %v2506 = vpop.permute.xlu0 %2505
          %2507 = vrot.lane.b32.xlu0 %v1941, 104
          %v2508 = vpop.permute.xlu0 %2507
          %2509 = vrot.lane.b32.xlu0 %v1942, 104
          %v2510 = vpop.permute.xlu0 %2509
          %2511 = vrot.lane.b32.xlu0 %v1943, 104
          %v2512 = vpop.permute.xlu0 %2511
          %2513 = vrot.lane.b32.xlu0 %v1944, 104
          %v2514 = vpop.permute.xlu0 %2513
          %2515 = vrot.lane.b32.xlu0 %v1945, 104
          %v2516 = vpop.permute.xlu0 %2515
          %2517 = vrot.lane.b32.xlu0 %v1946, 104
          %v2518 = vpop.permute.xlu0 %2517
          %2519 = vrot.lane.b32.xlu0 %v1947, 104
          %v2520 = vpop.permute.xlu0 %2519
          %2521 = vrot.lane.b32.xlu0 %v1948, 104
          %v2522 = vpop.permute.xlu0 %2521
          %2523 = vrot.lane.b32.xlu0 %v1949, 104
          %v2524 = vpop.permute.xlu0 %2523
          %2525 = vrot.lane.b32.xlu0 %v1950, 104
          %v2526 = vpop.permute.xlu0 %2525
          %2527 = vrot.lane.b32.xlu0 %v1951, 104
          %v2528 = vpop.permute.xlu0 %2527
          %2529 = vrot.lane.b32.xlu0 %v1952, 104
          %v2530 = vpop.permute.xlu0 %2529
          %s2595 = sadd.s32 %s287, 1024
          %s2596 = scalar_lea.vmem %s257, %s2595 [#allocation6]
          %2597 = vst.msk [vmem:[%s2596] sm:$0xff] %vm2338, %v2404
          %2598 = vst.msk [vmem:[%s2596 + $0x8] sm:$0xff] %vm2338, %v2406
          %2599 = vst.msk [vmem:[%s2596 + $0x10] sm:$0xff] %vm2338, %v2408
          %2600 = vst.msk [vmem:[%s2596 + $0x18] sm:$0xff] %vm2338, %v2410
          %2601 = vst.msk [vmem:[%s2596 + $0x20] sm:$0xff] %vm2338, %v2412
          %2602 = vst.msk [vmem:[%s2596 + $0x28] sm:$0xff] %vm2338, %v2414
          %2603 = vst.msk [vmem:[%s2596 + $0x30] sm:$0xff] %vm2338, %v2416
          %2604 = vst.msk [vmem:[%s2596 + $0x38] sm:$0xff] %vm2338, %v2418
          %2605 = vst.msk [vmem:[%s2596 + $0x40] sm:$0xff] %vm2338, %v2420
          %2606 = vst.msk [vmem:[%s2596 + $0x48] sm:$0xff] %vm2338, %v2422
          %2607 = vst.msk [vmem:[%s2596 + $0x50] sm:$0xff] %vm2338, %v2424
          %2608 = vst.msk [vmem:[%s2596 + $0x58] sm:$0xff] %vm2338, %v2426
          %2609 = vst.msk [vmem:[%s2596 + $0x60] sm:$0xff] %vm2338, %v2428
          %2610 = vst.msk [vmem:[%s2596 + $0x68] sm:$0xff] %vm2338, %v2430
          %2611 = vst.msk [vmem:[%s2596 + $0x70] sm:$0xff] %vm2338, %v2432
          %2612 = vst.msk [vmem:[%s2596 + $0x78] sm:$0xff] %vm2338, %v2434
          %2613 = vst.msk [vmem:[%s2596 + $0x80] sm:$0xff] %vm2338, %v2436
          %2614 = vst.msk [vmem:[%s2596 + $0x88] sm:$0xff] %vm2338, %v2438
          %2615 = vst.msk [vmem:[%s2596 + $0x90] sm:$0xff] %vm2338, %v2440
          %2616 = vst.msk [vmem:[%s2596 + $0x98] sm:$0xff] %vm2338, %v2442
          %2617 = vst.msk [vmem:[%s2596 + $0xa0] sm:$0xff] %vm2338, %v2444
          %2618 = vst.msk [vmem:[%s2596 + $0xa8] sm:$0xff] %vm2338, %v2446
          %2619 = vst.msk [vmem:[%s2596 + $0xb0] sm:$0xff] %vm2338, %v2448
          %2620 = vst.msk [vmem:[%s2596 + $0xb8] sm:$0xff] %vm2338, %v2450
          %2621 = vst.msk [vmem:[%s2596 + $0xc0] sm:$0xff] %vm2338, %v2452
          %2622 = vst.msk [vmem:[%s2596 + $0xc8] sm:$0xff] %vm2338, %v2454
          %2623 = vst.msk [vmem:[%s2596 + $0xd0] sm:$0xff] %vm2338, %v2456
          %2624 = vst.msk [vmem:[%s2596 + $0xd8] sm:$0xff] %vm2338, %v2458
          %2625 = vst.msk [vmem:[%s2596 + $0xe0] sm:$0xff] %vm2338, %v2460
          %2626 = vst.msk [vmem:[%s2596 + $0xe8] sm:$0xff] %vm2338, %v2462
          %2627 = vst.msk [vmem:[%s2596 + $0xf0] sm:$0xff] %vm2338, %v2464
          %2628 = vst.msk [vmem:[%s2596 + $0xf8] sm:$0xff] %vm2338, %v2466
          %2629 = vst.msk [vmem:[%s2596 + $0x100] sm:$0xff] %vm2338, %v2468
          %2630 = vst.msk [vmem:[%s2596 + $0x108] sm:$0xff] %vm2338, %v2470
          %2631 = vst.msk [vmem:[%s2596 + $0x110] sm:$0xff] %vm2338, %v2472
          %2632 = vst.msk [vmem:[%s2596 + $0x118] sm:$0xff] %vm2338, %v2474
          %2633 = vst.msk [vmem:[%s2596 + $0x120] sm:$0xff] %vm2338, %v2476
          %2634 = vst.msk [vmem:[%s2596 + $0x128] sm:$0xff] %vm2338, %v2478
          %2635 = vst.msk [vmem:[%s2596 + $0x130] sm:$0xff] %vm2338, %v2480
          %2636 = vst.msk [vmem:[%s2596 + $0x138] sm:$0xff] %vm2338, %v2482
          %2637 = vst.msk [vmem:[%s2596 + $0x140] sm:$0xff] %vm2338, %v2484
          %2638 = vst.msk [vmem:[%s2596 + $0x148] sm:$0xff] %vm2338, %v2486
          %2639 = vst.msk [vmem:[%s2596 + $0x150] sm:$0xff] %vm2338, %v2488
          %2640 = vst.msk [vmem:[%s2596 + $0x158] sm:$0xff] %vm2338, %v2490
          %2641 = vst.msk [vmem:[%s2596 + $0x160] sm:$0xff] %vm2338, %v2492
          %2642 = vst.msk [vmem:[%s2596 + $0x168] sm:$0xff] %vm2338, %v2494
          %2643 = vst.msk [vmem:[%s2596 + $0x170] sm:$0xff] %vm2338, %v2496
          %2644 = vst.msk [vmem:[%s2596 + $0x178] sm:$0xff] %vm2338, %v2498
          %2645 = vst.msk [vmem:[%s2596 + $0x180] sm:$0xff] %vm2338, %v2500
          %2646 = vst.msk [vmem:[%s2596 + $0x188] sm:$0xff] %vm2338, %v2502
          %2647 = vst.msk [vmem:[%s2596 + $0x190] sm:$0xff] %vm2338, %v2504
          %2648 = vst.msk [vmem:[%s2596 + $0x198] sm:$0xff] %vm2338, %v2506
          %2649 = vst.msk [vmem:[%s2596 + $0x1a0] sm:$0xff] %vm2338, %v2508
          %2650 = vst.msk [vmem:[%s2596 + $0x1a8] sm:$0xff] %vm2338, %v2510
          %2651 = vst.msk [vmem:[%s2596 + $0x1b0] sm:$0xff] %vm2338, %v2512
          %2652 = vst.msk [vmem:[%s2596 + $0x1b8] sm:$0xff] %vm2338, %v2514
          %2653 = vst.msk [vmem:[%s2596 + $0x1c0] sm:$0xff] %vm2338, %v2516
          %2654 = vst.msk [vmem:[%s2596 + $0x1c8] sm:$0xff] %vm2338, %v2518
          %2655 = vst.msk [vmem:[%s2596 + $0x1d0] sm:$0xff] %vm2338, %v2520
          %2656 = vst.msk [vmem:[%s2596 + $0x1d8] sm:$0xff] %vm2338, %v2522
          %2657 = vst.msk [vmem:[%s2596 + $0x1e0] sm:$0xff] %vm2338, %v2524
          %2658 = vst.msk [vmem:[%s2596 + $0x1e8] sm:$0xff] %vm2338, %v2526
          %2659 = vst.msk [vmem:[%s2596 + $0x1f0] sm:$0xff] %vm2338, %v2528
          %2660 = vst.msk [vmem:[%s2596 + $0x1f8] sm:$0xff] %vm2338, %v2530
          %2661 = vrot.lane.b32.xlu0 %v1889, 92
          %v2662 = vpop.permute.xlu0 %2661
          %2663 = vrot.lane.b32.xlu0 %v1890, 92
          %v2664 = vpop.permute.xlu0 %2663
          %2665 = vrot.lane.b32.xlu0 %v1891, 92
          %v2666 = vpop.permute.xlu0 %2665
          %2667 = vrot.lane.b32.xlu0 %v1892, 92
          %v2668 = vpop.permute.xlu0 %2667
          %2669 = vrot.lane.b32.xlu0 %v1893, 92
          %v2670 = vpop.permute.xlu0 %2669
          %2671 = vrot.lane.b32.xlu0 %v1894, 92
          %v2672 = vpop.permute.xlu0 %2671
          %2673 = vrot.lane.b32.xlu0 %v1895, 92
          %v2674 = vpop.permute.xlu0 %2673
          %2675 = vrot.lane.b32.xlu0 %v1896, 92
          %v2676 = vpop.permute.xlu0 %2675
          %2677 = vrot.lane.b32.xlu0 %v1897, 92
          %v2678 = vpop.permute.xlu0 %2677
          %2679 = vrot.lane.b32.xlu0 %v1898, 92
          %v2680 = vpop.permute.xlu0 %2679
          %2681 = vrot.lane.b32.xlu0 %v1899, 92
          %v2682 = vpop.permute.xlu0 %2681
          %2683 = vrot.lane.b32.xlu0 %v1900, 92
          %v2684 = vpop.permute.xlu0 %2683
          %2685 = vrot.lane.b32.xlu0 %v1901, 92
          %v2686 = vpop.permute.xlu0 %2685
          %2687 = vrot.lane.b32.xlu0 %v1902, 92
          %v2688 = vpop.permute.xlu0 %2687
          %2689 = vrot.lane.b32.xlu0 %v1903, 92
          %v2690 = vpop.permute.xlu0 %2689
          %2691 = vrot.lane.b32.xlu0 %v1904, 92
          %v2692 = vpop.permute.xlu0 %2691
          %2693 = vrot.lane.b32.xlu0 %v1905, 92
          %v2694 = vpop.permute.xlu0 %2693
          %2695 = vrot.lane.b32.xlu0 %v1906, 92
          %v2696 = vpop.permute.xlu0 %2695
          %2697 = vrot.lane.b32.xlu0 %v1907, 92
          %v2698 = vpop.permute.xlu0 %2697
          %2699 = vrot.lane.b32.xlu0 %v1908, 92
          %v2700 = vpop.permute.xlu0 %2699
          %2701 = vrot.lane.b32.xlu0 %v1909, 92
          %v2702 = vpop.permute.xlu0 %2701
          %2703 = vrot.lane.b32.xlu0 %v1910, 92
          %v2704 = vpop.permute.xlu0 %2703
          %2705 = vrot.lane.b32.xlu0 %v1911, 92
          %v2706 = vpop.permute.xlu0 %2705
          %2707 = vrot.lane.b32.xlu0 %v1912, 92
          %v2708 = vpop.permute.xlu0 %2707
          %2709 = vrot.lane.b32.xlu0 %v1913, 92
          %v2710 = vpop.permute.xlu0 %2709
          %2711 = vrot.lane.b32.xlu0 %v1914, 92
          %v2712 = vpop.permute.xlu0 %2711
          %2713 = vrot.lane.b32.xlu0 %v1915, 92
          %v2714 = vpop.permute.xlu0 %2713
          %2715 = vrot.lane.b32.xlu0 %v1916, 92
          %v2716 = vpop.permute.xlu0 %2715
          %2717 = vrot.lane.b32.xlu0 %v1917, 92
          %v2718 = vpop.permute.xlu0 %2717
          %2719 = vrot.lane.b32.xlu0 %v1918, 92
          %v2720 = vpop.permute.xlu0 %2719
          %2721 = vrot.lane.b32.xlu0 %v1919, 92
          %v2722 = vpop.permute.xlu0 %2721
          %2723 = vrot.lane.b32.xlu0 %v1920, 92
          %v2724 = vpop.permute.xlu0 %2723
          %2725 = vrot.lane.b32.xlu0 %v1921, 92
          %v2726 = vpop.permute.xlu0 %2725
          %2727 = vrot.lane.b32.xlu0 %v1922, 92
          %v2728 = vpop.permute.xlu0 %2727
          %2729 = vrot.lane.b32.xlu0 %v1923, 92
          %v2730 = vpop.permute.xlu0 %2729
          %2731 = vrot.lane.b32.xlu0 %v1924, 92
          %v2732 = vpop.permute.xlu0 %2731
          %2733 = vrot.lane.b32.xlu0 %v1925, 92
          %v2734 = vpop.permute.xlu0 %2733
          %2735 = vrot.lane.b32.xlu0 %v1926, 92
          %v2736 = vpop.permute.xlu0 %2735
          %2737 = vrot.lane.b32.xlu0 %v1927, 92
          %v2738 = vpop.permute.xlu0 %2737
          %2739 = vrot.lane.b32.xlu0 %v1928, 92
          %v2740 = vpop.permute.xlu0 %2739
          %2741 = vrot.lane.b32.xlu0 %v1929, 92
          %v2742 = vpop.permute.xlu0 %2741
          %2743 = vrot.lane.b32.xlu0 %v1930, 92
          %v2744 = vpop.permute.xlu0 %2743
          %2745 = vrot.lane.b32.xlu0 %v1931, 92
          %v2746 = vpop.permute.xlu0 %2745
          %2747 = vrot.lane.b32.xlu0 %v1932, 92
          %v2748 = vpop.permute.xlu0 %2747
          %2749 = vrot.lane.b32.xlu0 %v1933, 92
          %v2750 = vpop.permute.xlu0 %2749
          %2751 = vrot.lane.b32.xlu0 %v1934, 92
          %v2752 = vpop.permute.xlu0 %2751
          %2753 = vrot.lane.b32.xlu0 %v1935, 92
          %v2754 = vpop.permute.xlu0 %2753
          %2755 = vrot.lane.b32.xlu0 %v1936, 92
          %v2756 = vpop.permute.xlu0 %2755
          %2757 = vrot.lane.b32.xlu0 %v1937, 92
          %v2758 = vpop.permute.xlu0 %2757
          %2759 = vrot.lane.b32.xlu0 %v1938, 92
          %v2760 = vpop.permute.xlu0 %2759
          %2761 = vrot.lane.b32.xlu0 %v1939, 92
          %v2762 = vpop.permute.xlu0 %2761
          %2763 = vrot.lane.b32.xlu0 %v1940, 92
          %v2764 = vpop.permute.xlu0 %2763
          %2765 = vrot.lane.b32.xlu0 %v1941, 92
          %v2766 = vpop.permute.xlu0 %2765
          %2767 = vrot.lane.b32.xlu0 %v1942, 92
          %v2768 = vpop.permute.xlu0 %2767
          %2769 = vrot.lane.b32.xlu0 %v1943, 92
          %v2770 = vpop.permute.xlu0 %2769
          %2771 = vrot.lane.b32.xlu0 %v1944, 92
          %v2772 = vpop.permute.xlu0 %2771
          %2773 = vrot.lane.b32.xlu0 %v1945, 92
          %v2774 = vpop.permute.xlu0 %2773
          %2775 = vrot.lane.b32.xlu0 %v1946, 92
          %v2776 = vpop.permute.xlu0 %2775
          %2777 = vrot.lane.b32.xlu0 %v1947, 92
          %v2778 = vpop.permute.xlu0 %2777
          %2779 = vrot.lane.b32.xlu0 %v1948, 92
          %v2780 = vpop.permute.xlu0 %2779
          %2781 = vrot.lane.b32.xlu0 %v1949, 92
          %v2782 = vpop.permute.xlu0 %2781
          %2783 = vrot.lane.b32.xlu0 %v1950, 92
          %v2784 = vpop.permute.xlu0 %2783
          %2785 = vrot.lane.b32.xlu0 %v1951, 92
          %v2786 = vpop.permute.xlu0 %2785
          %2787 = vrot.lane.b32.xlu0 %v1952, 92
          %v2788 = vpop.permute.xlu0 %2787
          %s2853 = sadd.s32 %s287, 2048
          %s2854 = scalar_lea.vmem %s257, %s2853 [#allocation6]
          %2855 = vst.msk [vmem:[%s2854] sm:$0xff] %vm2338, %v2662
          %2856 = vst.msk [vmem:[%s2854 + $0x8] sm:$0xff] %vm2338, %v2664
          %2857 = vst.msk [vmem:[%s2854 + $0x10] sm:$0xff] %vm2338, %v2666
          %2858 = vst.msk [vmem:[%s2854 + $0x18] sm:$0xff] %vm2338, %v2668
          %2859 = vst.msk [vmem:[%s2854 + $0x20] sm:$0xff] %vm2338, %v2670
          %2860 = vst.msk [vmem:[%s2854 + $0x28] sm:$0xff] %vm2338, %v2672
          %2861 = vst.msk [vmem:[%s2854 + $0x30] sm:$0xff] %vm2338, %v2674
          %2862 = vst.msk [vmem:[%s2854 + $0x38] sm:$0xff] %vm2338, %v2676
          %2863 = vst.msk [vmem:[%s2854 + $0x40] sm:$0xff] %vm2338, %v2678
          %2864 = vst.msk [vmem:[%s2854 + $0x48] sm:$0xff] %vm2338, %v2680
          %2865 = vst.msk [vmem:[%s2854 + $0x50] sm:$0xff] %vm2338, %v2682
          %2866 = vst.msk [vmem:[%s2854 + $0x58] sm:$0xff] %vm2338, %v2684
          %2867 = vst.msk [vmem:[%s2854 + $0x60] sm:$0xff] %vm2338, %v2686
          %2868 = vst.msk [vmem:[%s2854 + $0x68] sm:$0xff] %vm2338, %v2688
          %2869 = vst.msk [vmem:[%s2854 + $0x70] sm:$0xff] %vm2338, %v2690
          %2870 = vst.msk [vmem:[%s2854 + $0x78] sm:$0xff] %vm2338, %v2692
          %2871 = vst.msk [vmem:[%s2854 + $0x80] sm:$0xff] %vm2338, %v2694
          %2872 = vst.msk [vmem:[%s2854 + $0x88] sm:$0xff] %vm2338, %v2696
          %2873 = vst.msk [vmem:[%s2854 + $0x90] sm:$0xff] %vm2338, %v2698
          %2874 = vst.msk [vmem:[%s2854 + $0x98] sm:$0xff] %vm2338, %v2700
          %2875 = vst.msk [vmem:[%s2854 + $0xa0] sm:$0xff] %vm2338, %v2702
          %2876 = vst.msk [vmem:[%s2854 + $0xa8] sm:$0xff] %vm2338, %v2704
          %2877 = vst.msk [vmem:[%s2854 + $0xb0] sm:$0xff] %vm2338, %v2706
          %2878 = vst.msk [vmem:[%s2854 + $0xb8] sm:$0xff] %vm2338, %v2708
          %2879 = vst.msk [vmem:[%s2854 + $0xc0] sm:$0xff] %vm2338, %v2710
          %2880 = vst.msk [vmem:[%s2854 + $0xc8] sm:$0xff] %vm2338, %v2712
          %2881 = vst.msk [vmem:[%s2854 + $0xd0] sm:$0xff] %vm2338, %v2714
          %2882 = vst.msk [vmem:[%s2854 + $0xd8] sm:$0xff] %vm2338, %v2716
          %2883 = vst.msk [vmem:[%s2854 + $0xe0] sm:$0xff] %vm2338, %v2718
          %2884 = vst.msk [vmem:[%s2854 + $0xe8] sm:$0xff] %vm2338, %v2720
          %2885 = vst.msk [vmem:[%s2854 + $0xf0] sm:$0xff] %vm2338, %v2722
          %2886 = vst.msk [vmem:[%s2854 + $0xf8] sm:$0xff] %vm2338, %v2724
          %2887 = vst.msk [vmem:[%s2854 + $0x100] sm:$0xff] %vm2338, %v2726
          %2888 = vst.msk [vmem:[%s2854 + $0x108] sm:$0xff] %vm2338, %v2728
          %2889 = vst.msk [vmem:[%s2854 + $0x110] sm:$0xff] %vm2338, %v2730
          %2890 = vst.msk [vmem:[%s2854 + $0x118] sm:$0xff] %vm2338, %v2732
          %2891 = vst.msk [vmem:[%s2854 + $0x120] sm:$0xff] %vm2338, %v2734
          %2892 = vst.msk [vmem:[%s2854 + $0x128] sm:$0xff] %vm2338, %v2736
          %2893 = vst.msk [vmem:[%s2854 + $0x130] sm:$0xff] %vm2338, %v2738
          %2894 = vst.msk [vmem:[%s2854 + $0x138] sm:$0xff] %vm2338, %v2740
          %2895 = vst.msk [vmem:[%s2854 + $0x140] sm:$0xff] %vm2338, %v2742
          %2896 = vst.msk [vmem:[%s2854 + $0x148] sm:$0xff] %vm2338, %v2744
          %2897 = vst.msk [vmem:[%s2854 + $0x150] sm:$0xff] %vm2338, %v2746
          %2898 = vst.msk [vmem:[%s2854 + $0x158] sm:$0xff] %vm2338, %v2748
          %2899 = vst.msk [vmem:[%s2854 + $0x160] sm:$0xff] %vm2338, %v2750
          %2900 = vst.msk [vmem:[%s2854 + $0x168] sm:$0xff] %vm2338, %v2752
          %2901 = vst.msk [vmem:[%s2854 + $0x170] sm:$0xff] %vm2338, %v2754
          %2902 = vst.msk [vmem:[%s2854 + $0x178] sm:$0xff] %vm2338, %v2756
          %2903 = vst.msk [vmem:[%s2854 + $0x180] sm:$0xff] %vm2338, %v2758
          %2904 = vst.msk [vmem:[%s2854 + $0x188] sm:$0xff] %vm2338, %v2760
          %2905 = vst.msk [vmem:[%s2854 + $0x190] sm:$0xff] %vm2338, %v2762
          %2906 = vst.msk [vmem:[%s2854 + $0x198] sm:$0xff] %vm2338, %v2764
          %2907 = vst.msk [vmem:[%s2854 + $0x1a0] sm:$0xff] %vm2338, %v2766
          %2908 = vst.msk [vmem:[%s2854 + $0x1a8] sm:$0xff] %vm2338, %v2768
          %2909 = vst.msk [vmem:[%s2854 + $0x1b0] sm:$0xff] %vm2338, %v2770
          %2910 = vst.msk [vmem:[%s2854 + $0x1b8] sm:$0xff] %vm2338, %v2772
          %2911 = vst.msk [vmem:[%s2854 + $0x1c0] sm:$0xff] %vm2338, %v2774
          %2912 = vst.msk [vmem:[%s2854 + $0x1c8] sm:$0xff] %vm2338, %v2776
          %2913 = vst.msk [vmem:[%s2854 + $0x1d0] sm:$0xff] %vm2338, %v2778
          %2914 = vst.msk [vmem:[%s2854 + $0x1d8] sm:$0xff] %vm2338, %v2780
          %2915 = vst.msk [vmem:[%s2854 + $0x1e0] sm:$0xff] %vm2338, %v2782
          %2916 = vst.msk [vmem:[%s2854 + $0x1e8] sm:$0xff] %vm2338, %v2784
          %2917 = vst.msk [vmem:[%s2854 + $0x1f0] sm:$0xff] %vm2338, %v2786
          %2918 = vst.msk [vmem:[%s2854 + $0x1f8] sm:$0xff] %vm2338, %v2788
          %2919 = vrot.lane.b32.xlu0 %v1889, 80
          %v2920 = vpop.permute.xlu0 %2919
          %2921 = vrot.lane.b32.xlu0 %v1890, 80
          %v2922 = vpop.permute.xlu0 %2921
          %2923 = vrot.lane.b32.xlu0 %v1891, 80
          %v2924 = vpop.permute.xlu0 %2923
          %2925 = vrot.lane.b32.xlu0 %v1892, 80
          %v2926 = vpop.permute.xlu0 %2925
          %2927 = vrot.lane.b32.xlu0 %v1893, 80
          %v2928 = vpop.permute.xlu0 %2927
          %2929 = vrot.lane.b32.xlu0 %v1894, 80
          %v2930 = vpop.permute.xlu0 %2929
          %2931 = vrot.lane.b32.xlu0 %v1895, 80
          %v2932 = vpop.permute.xlu0 %2931
          %2933 = vrot.lane.b32.xlu0 %v1896, 80
          %v2934 = vpop.permute.xlu0 %2933
          %2935 = vrot.lane.b32.xlu0 %v1897, 80
          %v2936 = vpop.permute.xlu0 %2935
          %2937 = vrot.lane.b32.xlu0 %v1898, 80
          %v2938 = vpop.permute.xlu0 %2937
          %2939 = vrot.lane.b32.xlu0 %v1899, 80
          %v2940 = vpop.permute.xlu0 %2939
          %2941 = vrot.lane.b32.xlu0 %v1900, 80
          %v2942 = vpop.permute.xlu0 %2941
          %2943 = vrot.lane.b32.xlu0 %v1901, 80
          %v2944 = vpop.permute.xlu0 %2943
          %2945 = vrot.lane.b32.xlu0 %v1902, 80
          %v2946 = vpop.permute.xlu0 %2945
          %2947 = vrot.lane.b32.xlu0 %v1903, 80
          %v2948 = vpop.permute.xlu0 %2947
          %2949 = vrot.lane.b32.xlu0 %v1904, 80
          %v2950 = vpop.permute.xlu0 %2949
          %2951 = vrot.lane.b32.xlu0 %v1905, 80
          %v2952 = vpop.permute.xlu0 %2951
          %2953 = vrot.lane.b32.xlu0 %v1906, 80
          %v2954 = vpop.permute.xlu0 %2953
          %2955 = vrot.lane.b32.xlu0 %v1907, 80
          %v2956 = vpop.permute.xlu0 %2955
          %2957 = vrot.lane.b32.xlu0 %v1908, 80
          %v2958 = vpop.permute.xlu0 %2957
          %2959 = vrot.lane.b32.xlu0 %v1909, 80
          %v2960 = vpop.permute.xlu0 %2959
          %2961 = vrot.lane.b32.xlu0 %v1910, 80
          %v2962 = vpop.permute.xlu0 %2961
          %2963 = vrot.lane.b32.xlu0 %v1911, 80
          %v2964 = vpop.permute.xlu0 %2963
          %2965 = vrot.lane.b32.xlu0 %v1912, 80
          %v2966 = vpop.permute.xlu0 %2965
          %2967 = vrot.lane.b32.xlu0 %v1913, 80
          %v2968 = vpop.permute.xlu0 %2967
          %2969 = vrot.lane.b32.xlu0 %v1914, 80
          %v2970 = vpop.permute.xlu0 %2969
          %2971 = vrot.lane.b32.xlu0 %v1915, 80
          %v2972 = vpop.permute.xlu0 %2971
          %2973 = vrot.lane.b32.xlu0 %v1916, 80
          %v2974 = vpop.permute.xlu0 %2973
          %2975 = vrot.lane.b32.xlu0 %v1917, 80
          %v2976 = vpop.permute.xlu0 %2975
          %2977 = vrot.lane.b32.xlu0 %v1918, 80
          %v2978 = vpop.permute.xlu0 %2977
          %2979 = vrot.lane.b32.xlu0 %v1919, 80
          %v2980 = vpop.permute.xlu0 %2979
          %2981 = vrot.lane.b32.xlu0 %v1920, 80
          %v2982 = vpop.permute.xlu0 %2981
          %2983 = vrot.lane.b32.xlu0 %v1921, 80
          %v2984 = vpop.permute.xlu0 %2983
          %2985 = vrot.lane.b32.xlu0 %v1922, 80
          %v2986 = vpop.permute.xlu0 %2985
          %2987 = vrot.lane.b32.xlu0 %v1923, 80
          %v2988 = vpop.permute.xlu0 %2987
          %2989 = vrot.lane.b32.xlu0 %v1924, 80
          %v2990 = vpop.permute.xlu0 %2989
          %2991 = vrot.lane.b32.xlu0 %v1925, 80
          %v2992 = vpop.permute.xlu0 %2991
          %2993 = vrot.lane.b32.xlu0 %v1926, 80
          %v2994 = vpop.permute.xlu0 %2993
          %2995 = vrot.lane.b32.xlu0 %v1927, 80
          %v2996 = vpop.permute.xlu0 %2995
          %2997 = vrot.lane.b32.xlu0 %v1928, 80
          %v2998 = vpop.permute.xlu0 %2997
          %2999 = vrot.lane.b32.xlu0 %v1929, 80
          %v3000 = vpop.permute.xlu0 %2999
          %3001 = vrot.lane.b32.xlu0 %v1930, 80
          %v3002 = vpop.permute.xlu0 %3001
          %3003 = vrot.lane.b32.xlu0 %v1931, 80
          %v3004 = vpop.permute.xlu0 %3003
          %3005 = vrot.lane.b32.xlu0 %v1932, 80
          %v3006 = vpop.permute.xlu0 %3005
          %3007 = vrot.lane.b32.xlu0 %v1933, 80
          %v3008 = vpop.permute.xlu0 %3007
          %3009 = vrot.lane.b32.xlu0 %v1934, 80
          %v3010 = vpop.permute.xlu0 %3009
          %3011 = vrot.lane.b32.xlu0 %v1935, 80
          %v3012 = vpop.permute.xlu0 %3011
          %3013 = vrot.lane.b32.xlu0 %v1936, 80
          %v3014 = vpop.permute.xlu0 %3013
          %3015 = vrot.lane.b32.xlu0 %v1937, 80
          %v3016 = vpop.permute.xlu0 %3015
          %3017 = vrot.lane.b32.xlu0 %v1938, 80
          %v3018 = vpop.permute.xlu0 %3017
          %3019 = vrot.lane.b32.xlu0 %v1939, 80
          %v3020 = vpop.permute.xlu0 %3019
          %3021 = vrot.lane.b32.xlu0 %v1940, 80
          %v3022 = vpop.permute.xlu0 %3021
          %3023 = vrot.lane.b32.xlu0 %v1941, 80
          %v3024 = vpop.permute.xlu0 %3023
          %3025 = vrot.lane.b32.xlu0 %v1942, 80
          %v3026 = vpop.permute.xlu0 %3025
          %3027 = vrot.lane.b32.xlu0 %v1943, 80
          %v3028 = vpop.permute.xlu0 %3027
          %3029 = vrot.lane.b32.xlu0 %v1944, 80
          %v3030 = vpop.permute.xlu0 %3029
          %3031 = vrot.lane.b32.xlu0 %v1945, 80
          %v3032 = vpop.permute.xlu0 %3031
          %3033 = vrot.lane.b32.xlu0 %v1946, 80
          %v3034 = vpop.permute.xlu0 %3033
          %3035 = vrot.lane.b32.xlu0 %v1947, 80
          %v3036 = vpop.permute.xlu0 %3035
          %3037 = vrot.lane.b32.xlu0 %v1948, 80
          %v3038 = vpop.permute.xlu0 %3037
          %3039 = vrot.lane.b32.xlu0 %v1949, 80
          %v3040 = vpop.permute.xlu0 %3039
          %3041 = vrot.lane.b32.xlu0 %v1950, 80
          %v3042 = vpop.permute.xlu0 %3041
          %3043 = vrot.lane.b32.xlu0 %v1951, 80
          %v3044 = vpop.permute.xlu0 %3043
          %3045 = vrot.lane.b32.xlu0 %v1952, 80
          %v3046 = vpop.permute.xlu0 %3045
          %s3111 = sadd.s32 %s287, 3072
          %s3112 = scalar_lea.vmem %s257, %s3111 [#allocation6]
          %3113 = vst.msk [vmem:[%s3112] sm:$0xff] %vm2338, %v2920
          %3114 = vst.msk [vmem:[%s3112 + $0x8] sm:$0xff] %vm2338, %v2922
          %3115 = vst.msk [vmem:[%s3112 + $0x10] sm:$0xff] %vm2338, %v2924
          %3116 = vst.msk [vmem:[%s3112 + $0x18] sm:$0xff] %vm2338, %v2926
          %3117 = vst.msk [vmem:[%s3112 + $0x20] sm:$0xff] %vm2338, %v2928
          %3118 = vst.msk [vmem:[%s3112 + $0x28] sm:$0xff] %vm2338, %v2930
          %3119 = vst.msk [vmem:[%s3112 + $0x30] sm:$0xff] %vm2338, %v2932
          %3120 = vst.msk [vmem:[%s3112 + $0x38] sm:$0xff] %vm2338, %v2934
          %3121 = vst.msk [vmem:[%s3112 + $0x40] sm:$0xff] %vm2338, %v2936
          %3122 = vst.msk [vmem:[%s3112 + $0x48] sm:$0xff] %vm2338, %v2938
          %3123 = vst.msk [vmem:[%s3112 + $0x50] sm:$0xff] %vm2338, %v2940
          %3124 = vst.msk [vmem:[%s3112 + $0x58] sm:$0xff] %vm2338, %v2942
          %3125 = vst.msk [vmem:[%s3112 + $0x60] sm:$0xff] %vm2338, %v2944
          %3126 = vst.msk [vmem:[%s3112 + $0x68] sm:$0xff] %vm2338, %v2946
          %3127 = vst.msk [vmem:[%s3112 + $0x70] sm:$0xff] %vm2338, %v2948
          %3128 = vst.msk [vmem:[%s3112 + $0x78] sm:$0xff] %vm2338, %v2950
          %3129 = vst.msk [vmem:[%s3112 + $0x80] sm:$0xff] %vm2338, %v2952
          %3130 = vst.msk [vmem:[%s3112 + $0x88] sm:$0xff] %vm2338, %v2954
          %3131 = vst.msk [vmem:[%s3112 + $0x90] sm:$0xff] %vm2338, %v2956
          %3132 = vst.msk [vmem:[%s3112 + $0x98] sm:$0xff] %vm2338, %v2958
          %3133 = vst.msk [vmem:[%s3112 + $0xa0] sm:$0xff] %vm2338, %v2960
          %3134 = vst.msk [vmem:[%s3112 + $0xa8] sm:$0xff] %vm2338, %v2962
          %3135 = vst.msk [vmem:[%s3112 + $0xb0] sm:$0xff] %vm2338, %v2964
          %3136 = vst.msk [vmem:[%s3112 + $0xb8] sm:$0xff] %vm2338, %v2966
          %3137 = vst.msk [vmem:[%s3112 + $0xc0] sm:$0xff] %vm2338, %v2968
          %3138 = vst.msk [vmem:[%s3112 + $0xc8] sm:$0xff] %vm2338, %v2970
          %3139 = vst.msk [vmem:[%s3112 + $0xd0] sm:$0xff] %vm2338, %v2972
          %3140 = vst.msk [vmem:[%s3112 + $0xd8] sm:$0xff] %vm2338, %v2974
          %3141 = vst.msk [vmem:[%s3112 + $0xe0] sm:$0xff] %vm2338, %v2976
          %3142 = vst.msk [vmem:[%s3112 + $0xe8] sm:$0xff] %vm2338, %v2978
          %3143 = vst.msk [vmem:[%s3112 + $0xf0] sm:$0xff] %vm2338, %v2980
          %3144 = vst.msk [vmem:[%s3112 + $0xf8] sm:$0xff] %vm2338, %v2982
          %3145 = vst.msk [vmem:[%s3112 + $0x100] sm:$0xff] %vm2338, %v2984
          %3146 = vst.msk [vmem:[%s3112 + $0x108] sm:$0xff] %vm2338, %v2986
          %3147 = vst.msk [vmem:[%s3112 + $0x110] sm:$0xff] %vm2338, %v2988
          %3148 = vst.msk [vmem:[%s3112 + $0x118] sm:$0xff] %vm2338, %v2990
          %3149 = vst.msk [vmem:[%s3112 + $0x120] sm:$0xff] %vm2338, %v2992
          %3150 = vst.msk [vmem:[%s3112 + $0x128] sm:$0xff] %vm2338, %v2994
          %3151 = vst.msk [vmem:[%s3112 + $0x130] sm:$0xff] %vm2338, %v2996
          %3152 = vst.msk [vmem:[%s3112 + $0x138] sm:$0xff] %vm2338, %v2998
          %3153 = vst.msk [vmem:[%s3112 + $0x140] sm:$0xff] %vm2338, %v3000
          %3154 = vst.msk [vmem:[%s3112 + $0x148] sm:$0xff] %vm2338, %v3002
          %3155 = vst.msk [vmem:[%s3112 + $0x150] sm:$0xff] %vm2338, %v3004
          %3156 = vst.msk [vmem:[%s3112 + $0x158] sm:$0xff] %vm2338, %v3006
          %3157 = vst.msk [vmem:[%s3112 + $0x160] sm:$0xff] %vm2338, %v3008
          %3158 = vst.msk [vmem:[%s3112 + $0x168] sm:$0xff] %vm2338, %v3010
          %3159 = vst.msk [vmem:[%s3112 + $0x170] sm:$0xff] %vm2338, %v3012
          %3160 = vst.msk [vmem:[%s3112 + $0x178] sm:$0xff] %vm2338, %v3014
          %3161 = vst.msk [vmem:[%s3112 + $0x180] sm:$0xff] %vm2338, %v3016
          %3162 = vst.msk [vmem:[%s3112 + $0x188] sm:$0xff] %vm2338, %v3018
          %3163 = vst.msk [vmem:[%s3112 + $0x190] sm:$0xff] %vm2338, %v3020
          %3164 = vst.msk [vmem:[%s3112 + $0x198] sm:$0xff] %vm2338, %v3022
          %3165 = vst.msk [vmem:[%s3112 + $0x1a0] sm:$0xff] %vm2338, %v3024
          %3166 = vst.msk [vmem:[%s3112 + $0x1a8] sm:$0xff] %vm2338, %v3026
          %3167 = vst.msk [vmem:[%s3112 + $0x1b0] sm:$0xff] %vm2338, %v3028
          %3168 = vst.msk [vmem:[%s3112 + $0x1b8] sm:$0xff] %vm2338, %v3030
          %3169 = vst.msk [vmem:[%s3112 + $0x1c0] sm:$0xff] %vm2338, %v3032
          %3170 = vst.msk [vmem:[%s3112 + $0x1c8] sm:$0xff] %vm2338, %v3034
          %3171 = vst.msk [vmem:[%s3112 + $0x1d0] sm:$0xff] %vm2338, %v3036
          %3172 = vst.msk [vmem:[%s3112 + $0x1d8] sm:$0xff] %vm2338, %v3038
          %3173 = vst.msk [vmem:[%s3112 + $0x1e0] sm:$0xff] %vm2338, %v3040
          %3174 = vst.msk [vmem:[%s3112 + $0x1e8] sm:$0xff] %vm2338, %v3042
          %3175 = vst.msk [vmem:[%s3112 + $0x1f0] sm:$0xff] %vm2338, %v3044
          %3176 = vst.msk [vmem:[%s3112 + $0x1f8] sm:$0xff] %vm2338, %v3046
        $region53: #{tpu_custom_call.1} parent=39 // loop_footer
          %s286 = sadd.s32 1, %s282
        $region54: #{tpu_custom_call.1} parent=39 // loop_footer_branch
          %281 = sbr.rel target = $region50
        $region55: #{tpu_custom_call.1} parent=39 // loop_exit
          _
        %s3177 = sand.u32 %s136, 1
        %s3178 = sand.u32 %s136, 1
        %s3179 = smul.addr %s3178, 4096
        %s3180 = scalar_lea.vmem [#allocation6], %s3179
        // Predicated region
        $region56: #{tpu_custom_call.1} parent=39 // pred_check
          %p3181 = pneg %p146
        $region57: #{tpu_custom_call.1} parent=39 // pred_check_branch
          %3183 = sbr.rel (%p3181) target = $region59
        $region58: #{tpu_custom_call.1} parent=39 // pred_region
          %s3184 = smul.u32 128, %s18
          %s3185 = ssub.s32 272, %s3184
          %p3186 = scmp.lt.s32.totalorder %s3185, 128
          %s3187 = scalar_select %p3186, %s3185, 128
          %s3188 = smul.u32 512, %s3187
          %p3189 = scmp.ne.s32.totalorder 0, %s3188
          %s3190 = smul.addr %s3184, 8
          %s3191 = scalar_lea.vmem %s5, %s3190
          // Predicated region
          $region60: #{tpu_custom_call.1} parent=58 // pred_check
            %p3192 = pneg %p3189
          $region61: #{tpu_custom_call.1} parent=58 // pred_check_branch
            %3194 = sbr.rel (%p3192) target = $region63
          $region62: #{tpu_custom_call.1} parent=58 // pred_region
            // Predicated region
            $region64: #{tpu_custom_call.1} parent=62 // pred_check
              _
            $region65: #{tpu_custom_call.1} parent=62 // pred_check_branch
              %3196 = sbr.rel (0) target = $region67
            $region66: #{tpu_custom_call.1} parent=62 // pred_region
              // Predicated region
              $region86: #{tpu_custom_call.1} parent=66 // pred_check
                _
              $region87: #{tpu_custom_call.1} parent=66 // pred_check_branch
                %3377 = sbr.rel (0) target = $region89
              $region88: #{tpu_custom_call.1} parent=66 // pred_region
                %s3378 = sshrl.u32 %s3187, 4
                // While loop
                $region90: #{tpu_custom_call.1} parent=88 // loop_pre_header
                  _
                $region91: #{tpu_custom_call.1} parent=88 // loop_header
                  %s3380 = sphi 0, %s3382
                  %p3381 = scmp.ge.s32.totalorder %s3380, %s3378
                  %s3385 = sphi 0, %s3518
                  %s3386 = sphi %s3180, %s3521
                  %s3387 = sphi %s3191, %s3522
                $region92: #{tpu_custom_call.1} parent=88 // loop_header_branch
                  %3384 = sbr.rel (%p3381) target = $region96
                $region93: #{tpu_custom_call.1} parent=88 // loop_body
                  %v3388 = vld [vmem:[%s3386] sm:$0xff]
                  %3389 = vst [vmem:[%s3387] sm:$0xff] %v3388
                  %v3390 = vld [vmem:[%s3386 + $0x8] sm:$0xff]
                  %3391 = vst [vmem:[%s3387 + $0x8] sm:$0xff] %v3390
                  %v3392 = vld [vmem:[%s3386 + $0x10] sm:$0xff]
                  %3393 = vst [vmem:[%s3387 + $0x10] sm:$0xff] %v3392
                  %v3394 = vld [vmem:[%s3386 + $0x18] sm:$0xff]
                  %3395 = vst [vmem:[%s3387 + $0x18] sm:$0xff] %v3394
                  %v3396 = vld [vmem:[%s3386 + $0x20] sm:$0xff]
                  %3397 = vst [vmem:[%s3387 + $0x20] sm:$0xff] %v3396
                  %v3398 = vld [vmem:[%s3386 + $0x28] sm:$0xff]
                  %3399 = vst [vmem:[%s3387 + $0x28] sm:$0xff] %v3398
                  %v3400 = vld [vmem:[%s3386 + $0x30] sm:$0xff]
                  %3401 = vst [vmem:[%s3387 + $0x30] sm:$0xff] %v3400
                  %v3402 = vld [vmem:[%s3386 + $0x38] sm:$0xff]
                  %3403 = vst [vmem:[%s3387 + $0x38] sm:$0xff] %v3402
                  %v3404 = vld [vmem:[%s3386 + $0x40] sm:$0xff]
                  %3405 = vst [vmem:[%s3387 + $0x40] sm:$0xff] %v3404
                  %v3406 = vld [vmem:[%s3386 + $0x48] sm:$0xff]
                  %3407 = vst [vmem:[%s3387 + $0x48] sm:$0xff] %v3406
                  %v3408 = vld [vmem:[%s3386 + $0x50] sm:$0xff]
                  %3409 = vst [vmem:[%s3387 + $0x50] sm:$0xff] %v3408
                  %v3410 = vld [vmem:[%s3386 + $0x58] sm:$0xff]
                  %3411 = vst [vmem:[%s3387 + $0x58] sm:$0xff] %v3410
                  %v3412 = vld [vmem:[%s3386 + $0x60] sm:$0xff]
                  %3413 = vst [vmem:[%s3387 + $0x60] sm:$0xff] %v3412
                  %v3414 = vld [vmem:[%s3386 + $0x68] sm:$0xff]
                  %3415 = vst [vmem:[%s3387 + $0x68] sm:$0xff] %v3414
                  %v3416 = vld [vmem:[%s3386 + $0x70] sm:$0xff]
                  %3417 = vst [vmem:[%s3387 + $0x70] sm:$0xff] %v3416
                  %v3418 = vld [vmem:[%s3386 + $0x78] sm:$0xff]
                  %3419 = vst [vmem:[%s3387 + $0x78] sm:$0xff] %v3418
                  %v3420 = vld [vmem:[%s3386 + $0x400] sm:$0xff]
                  %3421 = vst [vmem:[%s3387 + $0x880] sm:$0xff] %v3420
                  %v3422 = vld [vmem:[%s3386 + $0x408] sm:$0xff]
                  %3423 = vst [vmem:[%s3387 + $0x888] sm:$0xff] %v3422
                  %v3424 = vld [vmem:[%s3386 + $0x410] sm:$0xff]
                  %3425 = vst [vmem:[%s3387 + $0x890] sm:$0xff] %v3424
                  %v3426 = vld [vmem:[%s3386 + $0x418] sm:$0xff]
                  %3427 = vst [vmem:[%s3387 + $0x898] sm:$0xff] %v3426
                  %v3428 = vld [vmem:[%s3386 + $0x420] sm:$0xff]
                  %3429 = vst [vmem:[%s3387 + $0x8a0] sm:$0xff] %v3428
                  %v3430 = vld [vmem:[%s3386 + $0x428] sm:$0xff]
                  %3431 = vst [vmem:[%s3387 + $0x8a8] sm:$0xff] %v3430
                  %v3432 = vld [vmem:[%s3386 + $0x430] sm:$0xff]
                  %3433 = vst [vmem:[%s3387 + $0x8b0] sm:$0xff] %v3432
                  %v3434 = vld [vmem:[%s3386 + $0x438] sm:$0xff]
                  %3435 = vst [vmem:[%s3387 + $0x8b8] sm:$0xff] %v3434
                  %v3436 = vld [vmem:[%s3386 + $0x440] sm:$0xff]
                  %3437 = vst [vmem:[%s3387 + $0x8c0] sm:$0xff] %v3436
                  %v3438 = vld [vmem:[%s3386 + $0x448] sm:$0xff]
                  %3439 = vst [vmem:[%s3387 + $0x8c8] sm:$0xff] %v3438
                  %v3440 = vld [vmem:[%s3386 + $0x450] sm:$0xff]
                  %3441 = vst [vmem:[%s3387 + $0x8d0] sm:$0xff] %v3440
                  %v3442 = vld [vmem:[%s3386 + $0x458] sm:$0xff]
                  %3443 = vst [vmem:[%s3387 + $0x8d8] sm:$0xff] %v3442
                  %v3444 = vld [vmem:[%s3386 + $0x460] sm:$0xff]
                  %3445 = vst [vmem:[%s3387 + $0x8e0] sm:$0xff] %v3444
                  %v3446 = vld [vmem:[%s3386 + $0x468] sm:$0xff]
                  %3447 = vst [vmem:[%s3387 + $0x8e8] sm:$0xff] %v3446
                  %v3448 = vld [vmem:[%s3386 + $0x470] sm:$0xff]
                  %3449 = vst [vmem:[%s3387 + $0x8f0] sm:$0xff] %v3448
                  %v3450 = vld [vmem:[%s3386 + $0x478] sm:$0xff]
                  %3451 = vst [vmem:[%s3387 + $0x8f8] sm:$0xff] %v3450
                  %v3452 = vld [vmem:[%s3386 + $0x800] sm:$0xff]
                  %3453 = vst [vmem:[%s3387 + $0x1100] sm:$0xff] %v3452
                  %v3454 = vld [vmem:[%s3386 + $0x808] sm:$0xff]
                  %3455 = vst [vmem:[%s3387 + $0x1108] sm:$0xff] %v3454
                  %v3456 = vld [vmem:[%s3386 + $0x810] sm:$0xff]
                  %3457 = vst [vmem:[%s3387 + $0x1110] sm:$0xff] %v3456
                  %v3458 = vld [vmem:[%s3386 + $0x818] sm:$0xff]
                  %3459 = vst [vmem:[%s3387 + $0x1118] sm:$0xff] %v3458
                  %v3460 = vld [vmem:[%s3386 + $0x820] sm:$0xff]
                  %3461 = vst [vmem:[%s3387 + $0x1120] sm:$0xff] %v3460
                  %v3462 = vld [vmem:[%s3386 + $0x828] sm:$0xff]
                  %3463 = vst [vmem:[%s3387 + $0x1128] sm:$0xff] %v3462
                  %v3464 = vld [vmem:[%s3386 + $0x830] sm:$0xff]
                  %3465 = vst [vmem:[%s3387 + $0x1130] sm:$0xff] %v3464
                  %v3466 = vld [vmem:[%s3386 + $0x838] sm:$0xff]
                  %3467 = vst [vmem:[%s3387 + $0x1138] sm:$0xff] %v3466
                  %v3468 = vld [vmem:[%s3386 + $0x840] sm:$0xff]
                  %3469 = vst [vmem:[%s3387 + $0x1140] sm:$0xff] %v3468
                  %v3470 = vld [vmem:[%s3386 + $0x848] sm:$0xff]
                  %3471 = vst [vmem:[%s3387 + $0x1148] sm:$0xff] %v3470
                  %v3472 = vld [vmem:[%s3386 + $0x850] sm:$0xff]
                  %3473 = vst [vmem:[%s3387 + $0x1150] sm:$0xff] %v3472
                  %v3474 = vld [vmem:[%s3386 + $0x858] sm:$0xff]
                  %3475 = vst [vmem:[%s3387 + $0x1158] sm:$0xff] %v3474
                  %v3476 = vld [vmem:[%s3386 + $0x860] sm:$0xff]
                  %3477 = vst [vmem:[%s3387 + $0x1160] sm:$0xff] %v3476
                  %v3478 = vld [vmem:[%s3386 + $0x868] sm:$0xff]
                  %3479 = vst [vmem:[%s3387 + $0x1168] sm:$0xff] %v3478
                  %v3480 = vld [vmem:[%s3386 + $0x870] sm:$0xff]
                  %3481 = vst [vmem:[%s3387 + $0x1170] sm:$0xff] %v3480
                  %v3482 = vld [vmem:[%s3386 + $0x878] sm:$0xff]
                  %3483 = vst [vmem:[%s3387 + $0x1178] sm:$0xff] %v3482
                  %v3484 = vld [vmem:[%s3386 + $0xc00] sm:$0xff]
                  %3485 = vst [vmem:[%s3387 + $0x1980] sm:$0xff] %v3484
                  %v3486 = vld [vmem:[%s3386 + $0xc08] sm:$0xff]
                  %3487 = vst [vmem:[%s3387 + $0x1988] sm:$0xff] %v3486
                  %v3488 = vld [vmem:[%s3386 + $0xc10] sm:$0xff]
                  %3489 = vst [vmem:[%s3387 + $0x1990] sm:$0xff] %v3488
                  %v3490 = vld [vmem:[%s3386 + $0xc18] sm:$0xff]
                  %3491 = vst [vmem:[%s3387 + $0x1998] sm:$0xff] %v3490
                  %v3492 = vld [vmem:[%s3386 + $0xc20] sm:$0xff]
                  %3493 = vst [vmem:[%s3387 + $0x19a0] sm:$0xff] %v3492
                  %v3494 = vld [vmem:[%s3386 + $0xc28] sm:$0xff]
                  %3495 = vst [vmem:[%s3387 + $0x19a8] sm:$0xff] %v3494
                  %v3496 = vld [vmem:[%s3386 + $0xc30] sm:$0xff]
                  %3497 = vst [vmem:[%s3387 + $0x19b0] sm:$0xff] %v3496
                  %v3498 = vld [vmem:[%s3386 + $0xc38] sm:$0xff]
                  %3499 = vst [vmem:[%s3387 + $0x19b8] sm:$0xff] %v3498
                  %v3500 = vld [vmem:[%s3386 + $0xc40] sm:$0xff]
                  %3501 = vst [vmem:[%s3387 + $0x19c0] sm:$0xff] %v3500
                  %v3502 = vld [vmem:[%s3386 + $0xc48] sm:$0xff]
                  %3503 = vst [vmem:[%s3387 + $0x19c8] sm:$0xff] %v3502
                  %v3504 = vld [vmem:[%s3386 + $0xc50] sm:$0xff]
                  %3505 = vst [vmem:[%s3387 + $0x19d0] sm:$0xff] %v3504
                  %v3506 = vld [vmem:[%s3386 + $0xc58] sm:$0xff]
                  %3507 = vst [vmem:[%s3387 + $0x19d8] sm:$0xff] %v3506
                  %v3508 = vld [vmem:[%s3386 + $0xc60] sm:$0xff]
                  %3509 = vst [vmem:[%s3387 + $0x19e0] sm:$0xff] %v3508
                  %v3510 = vld [vmem:[%s3386 + $0xc68] sm:$0xff]
                  %3511 = vst [vmem:[%s3387 + $0x19e8] sm:$0xff] %v3510
                  %v3512 = vld [vmem:[%s3386 + $0xc70] sm:$0xff]
                  %3513 = vst [vmem:[%s3387 + $0x19f0] sm:$0xff] %v3512
                  %v3514 = vld [vmem:[%s3386 + $0xc78] sm:$0xff]
                  %3515 = vst [vmem:[%s3387 + $0x19f8] sm:$0xff] %v3514
                  %s3516 = sadd.s32 1, %s3385
                  %p3517 = scmp.ge.s32.totalorder %s3516, %s3378
                  %s3518 = scalar_select %p3517, 0, %s3516
                  %s3519 = smul.u32 %s3518, 128
                  %s3520 = smul.u32 %s3518, 128
                  %s3521 = scalar_lea.vmem %s3180, %s3519 [#allocation6]
                  %s3522 = scalar_lea.vmem %s3191, %s3520
                $region94: #{tpu_custom_call.1} parent=88 // loop_footer
                  %s3382 = sadd.s32 %s3380, 1
                $region95: #{tpu_custom_call.1} parent=88 // loop_footer_branch
                  %3379 = sbr.rel target = $region91
                $region96: #{tpu_custom_call.1} parent=88 // loop_exit
                  _
                %s3523 = sshrl.u32 %s3187, 4
                %s3524 = sand.u32 %s3187, 15
                %s3525 = smul.u32 %s3523, 16
                %s3526 = smul.u32 8, %s3525
                %s3527 = scalar_lea.vmem %s3180, %s3526 [#allocation6]
                %s3528 = smul.u32 8, %s3525
                %s3529 = scalar_lea.vmem %s3191, %s3528
                // While loop
                $region97: #{tpu_custom_call.1} parent=88 // loop_pre_header
                  _
                $region98: #{tpu_custom_call.1} parent=88 // loop_header
                  %s3531 = sphi 0, %s3533
                  %p3532 = scmp.ge.s32.totalorder %s3531, %s3524
                  %s3536 = sphi 0, %s3549
                  %s3537 = sphi %s3527, %s3552
                  %s3538 = sphi %s3529, %s3553
                $region99: #{tpu_custom_call.1} parent=88 // loop_header_branch
                  %3535 = sbr.rel (%p3532) target = $region103
                $region100: #{tpu_custom_call.1} parent=88 // loop_body
                  %v3539 = vld [vmem:[%s3537] sm:$0xff]
                  %3540 = vst [vmem:[%s3538] sm:$0xff] %v3539
                  %v3541 = vld [vmem:[%s3537 + $0x400] sm:$0xff]
                  %3542 = vst [vmem:[%s3538 + $0x880] sm:$0xff] %v3541
                  %v3543 = vld [vmem:[%s3537 + $0x800] sm:$0xff]
                  %3544 = vst [vmem:[%s3538 + $0x1100] sm:$0xff] %v3543
                  %v3545 = vld [vmem:[%s3537 + $0xc00] sm:$0xff]
                  %3546 = vst [vmem:[%s3538 + $0x1980] sm:$0xff] %v3545
                  %s3547 = sadd.s32 1, %s3536
                  %p3548 = scmp.ge.s32.totalorder %s3547, %s3524
                  %s3549 = scalar_select %p3548, 0, %s3547
                  %s3550 = smul.u32 %s3549, 8
                  %s3551 = smul.u32 %s3549, 8
                  %s3552 = scalar_lea.vmem %s3527, %s3550 [#allocation6]
                  %s3553 = scalar_lea.vmem %s3529, %s3551
                $region101: #{tpu_custom_call.1} parent=88 // loop_footer
                  %s3533 = sadd.s32 %s3531, 1
                $region102: #{tpu_custom_call.1} parent=88 // loop_footer_branch
                  %3530 = sbr.rel target = $region98
                $region103: #{tpu_custom_call.1} parent=88 // loop_exit
                  _
              $region89: #{tpu_custom_call.1} parent=66 // pred_fallthru
                _
              // Predicated region
              $region104: #{tpu_custom_call.1} parent=66 // pred_check
                _
              $region105: #{tpu_custom_call.1} parent=66 // pred_check_branch
                %3555 = sbr.rel target = $region107
              $region106: #{tpu_custom_call.1} parent=66 // pred_region
                _
              $region107: #{tpu_custom_call.1} parent=66 // pred_fallthru
                _
            $region67: #{tpu_custom_call.1} parent=62 // pred_fallthru
              _
            // Predicated region
            $region68: #{tpu_custom_call.1} parent=62 // pred_check
              _
            $region69: #{tpu_custom_call.1} parent=62 // pred_check_branch
              %3198 = sbr.rel target = $region71
            $region70: #{tpu_custom_call.1} parent=62 // pred_region
              %s3200 = sshrl.u32 %s3187, 4
              // While loop
              $region72: #{tpu_custom_call.1} parent=70 // loop_pre_header
                _
              $region73: #{tpu_custom_call.1} parent=70 // loop_header
                %s3202 = sphi 0, %s3204
                %p3203 = scmp.ge.s32.totalorder %s3202, %s3200
                %s3207 = sphi 0, %s3340
                %s3208 = sphi %s3180, %s3343
                %s3209 = sphi %s3191, %s3344
              $region74: #{tpu_custom_call.1} parent=70 // loop_header_branch
                %3206 = sbr.rel (%p3203) target = $region78
              $region75: #{tpu_custom_call.1} parent=70 // loop_body
                %v3210 = vld [vmem:[%s3208] sm:$0xff]
                %3211 = vst [vmem:[%s3209] sm:$0xff] %v3210
                %v3212 = vld [vmem:[%s3208 + $0x8] sm:$0xff]
                %3213 = vst [vmem:[%s3209 + $0x8] sm:$0xff] %v3212
                %v3214 = vld [vmem:[%s3208 + $0x10] sm:$0xff]
                %3215 = vst [vmem:[%s3209 + $0x10] sm:$0xff] %v3214
                %v3216 = vld [vmem:[%s3208 + $0x18] sm:$0xff]
                %3217 = vst [vmem:[%s3209 + $0x18] sm:$0xff] %v3216
                %v3218 = vld [vmem:[%s3208 + $0x20] sm:$0xff]
                %3219 = vst [vmem:[%s3209 + $0x20] sm:$0xff] %v3218
                %v3220 = vld [vmem:[%s3208 + $0x28] sm:$0xff]
                %3221 = vst [vmem:[%s3209 + $0x28] sm:$0xff] %v3220
                %v3222 = vld [vmem:[%s3208 + $0x30] sm:$0xff]
                %3223 = vst [vmem:[%s3209 + $0x30] sm:$0xff] %v3222
                %v3224 = vld [vmem:[%s3208 + $0x38] sm:$0xff]
                %3225 = vst [vmem:[%s3209 + $0x38] sm:$0xff] %v3224
                %v3226 = vld [vmem:[%s3208 + $0x40] sm:$0xff]
                %3227 = vst [vmem:[%s3209 + $0x40] sm:$0xff] %v3226
                %v3228 = vld [vmem:[%s3208 + $0x48] sm:$0xff]
                %3229 = vst [vmem:[%s3209 + $0x48] sm:$0xff] %v3228
                %v3230 = vld [vmem:[%s3208 + $0x50] sm:$0xff]
                %3231 = vst [vmem:[%s3209 + $0x50] sm:$0xff] %v3230
                %v3232 = vld [vmem:[%s3208 + $0x58] sm:$0xff]
                %3233 = vst [vmem:[%s3209 + $0x58] sm:$0xff] %v3232
                %v3234 = vld [vmem:[%s3208 + $0x60] sm:$0xff]
                %3235 = vst [vmem:[%s3209 + $0x60] sm:$0xff] %v3234
                %v3236 = vld [vmem:[%s3208 + $0x68] sm:$0xff]
                %3237 = vst [vmem:[%s3209 + $0x68] sm:$0xff] %v3236
                %v3238 = vld [vmem:[%s3208 + $0x70] sm:$0xff]
                %3239 = vst [vmem:[%s3209 + $0x70] sm:$0xff] %v3238
                %v3240 = vld [vmem:[%s3208 + $0x78] sm:$0xff]
                %3241 = vst [vmem:[%s3209 + $0x78] sm:$0xff] %v3240
                %v3242 = vld [vmem:[%s3208 + $0x400] sm:$0xff]
                %3243 = vst [vmem:[%s3209 + $0x880] sm:$0xff] %v3242
                %v3244 = vld [vmem:[%s3208 + $0x408] sm:$0xff]
                %3245 = vst [vmem:[%s3209 + $0x888] sm:$0xff] %v3244
                %v3246 = vld [vmem:[%s3208 + $0x410] sm:$0xff]
                %3247 = vst [vmem:[%s3209 + $0x890] sm:$0xff] %v3246
                %v3248 = vld [vmem:[%s3208 + $0x418] sm:$0xff]
                %3249 = vst [vmem:[%s3209 + $0x898] sm:$0xff] %v3248
                %v3250 = vld [vmem:[%s3208 + $0x420] sm:$0xff]
                %3251 = vst [vmem:[%s3209 + $0x8a0] sm:$0xff] %v3250
                %v3252 = vld [vmem:[%s3208 + $0x428] sm:$0xff]
                %3253 = vst [vmem:[%s3209 + $0x8a8] sm:$0xff] %v3252
                %v3254 = vld [vmem:[%s3208 + $0x430] sm:$0xff]
                %3255 = vst [vmem:[%s3209 + $0x8b0] sm:$0xff] %v3254
                %v3256 = vld [vmem:[%s3208 + $0x438] sm:$0xff]
                %3257 = vst [vmem:[%s3209 + $0x8b8] sm:$0xff] %v3256
                %v3258 = vld [vmem:[%s3208 + $0x440] sm:$0xff]
                %3259 = vst [vmem:[%s3209 + $0x8c0] sm:$0xff] %v3258
                %v3260 = vld [vmem:[%s3208 + $0x448] sm:$0xff]
                %3261 = vst [vmem:[%s3209 + $0x8c8] sm:$0xff] %v3260
                %v3262 = vld [vmem:[%s3208 + $0x450] sm:$0xff]
                %3263 = vst [vmem:[%s3209 + $0x8d0] sm:$0xff] %v3262
                %v3264 = vld [vmem:[%s3208 + $0x458] sm:$0xff]
                %3265 = vst [vmem:[%s3209 + $0x8d8] sm:$0xff] %v3264
                %v3266 = vld [vmem:[%s3208 + $0x460] sm:$0xff]
                %3267 = vst [vmem:[%s3209 + $0x8e0] sm:$0xff] %v3266
                %v3268 = vld [vmem:[%s3208 + $0x468] sm:$0xff]
                %3269 = vst [vmem:[%s3209 + $0x8e8] sm:$0xff] %v3268
                %v3270 = vld [vmem:[%s3208 + $0x470] sm:$0xff]
                %3271 = vst [vmem:[%s3209 + $0x8f0] sm:$0xff] %v3270
                %v3272 = vld [vmem:[%s3208 + $0x478] sm:$0xff]
                %3273 = vst [vmem:[%s3209 + $0x8f8] sm:$0xff] %v3272
                %v3274 = vld [vmem:[%s3208 + $0x800] sm:$0xff]
                %3275 = vst [vmem:[%s3209 + $0x1100] sm:$0xff] %v3274
                %v3276 = vld [vmem:[%s3208 + $0x808] sm:$0xff]
                %3277 = vst [vmem:[%s3209 + $0x1108] sm:$0xff] %v3276
                %v3278 = vld [vmem:[%s3208 + $0x810] sm:$0xff]
                %3279 = vst [vmem:[%s3209 + $0x1110] sm:$0xff] %v3278
                %v3280 = vld [vmem:[%s3208 + $0x818] sm:$0xff]
                %3281 = vst [vmem:[%s3209 + $0x1118] sm:$0xff] %v3280
                %v3282 = vld [vmem:[%s3208 + $0x820] sm:$0xff]
                %3283 = vst [vmem:[%s3209 + $0x1120] sm:$0xff] %v3282
                %v3284 = vld [vmem:[%s3208 + $0x828] sm:$0xff]
                %3285 = vst [vmem:[%s3209 + $0x1128] sm:$0xff] %v3284
                %v3286 = vld [vmem:[%s3208 + $0x830] sm:$0xff]
                %3287 = vst [vmem:[%s3209 + $0x1130] sm:$0xff] %v3286
                %v3288 = vld [vmem:[%s3208 + $0x838] sm:$0xff]
                %3289 = vst [vmem:[%s3209 + $0x1138] sm:$0xff] %v3288
                %v3290 = vld [vmem:[%s3208 + $0x840] sm:$0xff]
                %3291 = vst [vmem:[%s3209 + $0x1140] sm:$0xff] %v3290
                %v3292 = vld [vmem:[%s3208 + $0x848] sm:$0xff]
                %3293 = vst [vmem:[%s3209 + $0x1148] sm:$0xff] %v3292
                %v3294 = vld [vmem:[%s3208 + $0x850] sm:$0xff]
                %3295 = vst [vmem:[%s3209 + $0x1150] sm:$0xff] %v3294
                %v3296 = vld [vmem:[%s3208 + $0x858] sm:$0xff]
                %3297 = vst [vmem:[%s3209 + $0x1158] sm:$0xff] %v3296
                %v3298 = vld [vmem:[%s3208 + $0x860] sm:$0xff]
                %3299 = vst [vmem:[%s3209 + $0x1160] sm:$0xff] %v3298
                %v3300 = vld [vmem:[%s3208 + $0x868] sm:$0xff]
                %3301 = vst [vmem:[%s3209 + $0x1168] sm:$0xff] %v3300
                %v3302 = vld [vmem:[%s3208 + $0x870] sm:$0xff]
                %3303 = vst [vmem:[%s3209 + $0x1170] sm:$0xff] %v3302
                %v3304 = vld [vmem:[%s3208 + $0x878] sm:$0xff]
                %3305 = vst [vmem:[%s3209 + $0x1178] sm:$0xff] %v3304
                %v3306 = vld [vmem:[%s3208 + $0xc00] sm:$0xff]
                %3307 = vst [vmem:[%s3209 + $0x1980] sm:$0xff] %v3306
                %v3308 = vld [vmem:[%s3208 + $0xc08] sm:$0xff]
                %3309 = vst [vmem:[%s3209 + $0x1988] sm:$0xff] %v3308
                %v3310 = vld [vmem:[%s3208 + $0xc10] sm:$0xff]
                %3311 = vst [vmem:[%s3209 + $0x1990] sm:$0xff] %v3310
                %v3312 = vld [vmem:[%s3208 + $0xc18] sm:$0xff]
                %3313 = vst [vmem:[%s3209 + $0x1998] sm:$0xff] %v3312
                %v3314 = vld [vmem:[%s3208 + $0xc20] sm:$0xff]
                %3315 = vst [vmem:[%s3209 + $0x19a0] sm:$0xff] %v3314
                %v3316 = vld [vmem:[%s3208 + $0xc28] sm:$0xff]
                %3317 = vst [vmem:[%s3209 + $0x19a8] sm:$0xff] %v3316
                %v3318 = vld [vmem:[%s3208 + $0xc30] sm:$0xff]
                %3319 = vst [vmem:[%s3209 + $0x19b0] sm:$0xff] %v3318
                %v3320 = vld [vmem:[%s3208 + $0xc38] sm:$0xff]
                %3321 = vst [vmem:[%s3209 + $0x19b8] sm:$0xff] %v3320
                %v3322 = vld [vmem:[%s3208 + $0xc40] sm:$0xff]
                %3323 = vst [vmem:[%s3209 + $0x19c0] sm:$0xff] %v3322
                %v3324 = vld [vmem:[%s3208 + $0xc48] sm:$0xff]
                %3325 = vst [vmem:[%s3209 + $0x19c8] sm:$0xff] %v3324
                %v3326 = vld [vmem:[%s3208 + $0xc50] sm:$0xff]
                %3327 = vst [vmem:[%s3209 + $0x19d0] sm:$0xff] %v3326
                %v3328 = vld [vmem:[%s3208 + $0xc58] sm:$0xff]
                %3329 = vst [vmem:[%s3209 + $0x19d8] sm:$0xff] %v3328
                %v3330 = vld [vmem:[%s3208 + $0xc60] sm:$0xff]
                %3331 = vst [vmem:[%s3209 + $0x19e0] sm:$0xff] %v3330
                %v3332 = vld [vmem:[%s3208 + $0xc68] sm:$0xff]
                %3333 = vst [vmem:[%s3209 + $0x19e8] sm:$0xff] %v3332
                %v3334 = vld [vmem:[%s3208 + $0xc70] sm:$0xff]
                %3335 = vst [vmem:[%s3209 + $0x19f0] sm:$0xff] %v3334
                %v3336 = vld [vmem:[%s3208 + $0xc78] sm:$0xff]
                %3337 = vst [vmem:[%s3209 + $0x19f8] sm:$0xff] %v3336
                %s3338 = sadd.s32 1, %s3207
                %p3339 = scmp.ge.s32.totalorder %s3338, %s3200
                %s3340 = scalar_select %p3339, 0, %s3338
                %s3341 = smul.u32 %s3340, 128
                %s3342 = smul.u32 %s3340, 128
                %s3343 = scalar_lea.vmem %s3180, %s3341 [#allocation6]
                %s3344 = scalar_lea.vmem %s3191, %s3342
              $region76: #{tpu_custom_call.1} parent=70 // loop_footer
                %s3204 = sadd.s32 %s3202, 1
              $region77: #{tpu_custom_call.1} parent=70 // loop_footer_branch
                %3201 = sbr.rel target = $region73
              $region78: #{tpu_custom_call.1} parent=70 // loop_exit
                _
              %s3345 = sshrl.u32 %s3187, 4
              %s3346 = sand.u32 %s3187, 15
              %s3347 = smul.u32 %s3345, 16
              %s3348 = smul.u32 8, %s3347
              %s3349 = scalar_lea.vmem %s3180, %s3348 [#allocation6]
              %s3350 = smul.u32 8, %s3347
              %s3351 = scalar_lea.vmem %s3191, %s3350
              // While loop
              $region79: #{tpu_custom_call.1} parent=70 // loop_pre_header
                _
              $region80: #{tpu_custom_call.1} parent=70 // loop_header
                %s3353 = sphi 0, %s3355
                %p3354 = scmp.ge.s32.totalorder %s3353, %s3346
                %s3358 = sphi 0, %s3371
                %s3359 = sphi %s3349, %s3374
                %s3360 = sphi %s3351, %s3375
              $region81: #{tpu_custom_call.1} parent=70 // loop_header_branch
                %3357 = sbr.rel (%p3354) target = $region85
              $region82: #{tpu_custom_call.1} parent=70 // loop_body
                %v3361 = vld [vmem:[%s3359] sm:$0xff]
                %3362 = vst [vmem:[%s3360] sm:$0xff] %v3361
                %v3363 = vld [vmem:[%s3359 + $0x400] sm:$0xff]
                %3364 = vst [vmem:[%s3360 + $0x880] sm:$0xff] %v3363
                %v3365 = vld [vmem:[%s3359 + $0x800] sm:$0xff]
                %3366 = vst [vmem:[%s3360 + $0x1100] sm:$0xff] %v3365
                %v3367 = vld [vmem:[%s3359 + $0xc00] sm:$0xff]
                %3368 = vst [vmem:[%s3360 + $0x1980] sm:$0xff] %v3367
                %s3369 = sadd.s32 1, %s3358
                %p3370 = scmp.ge.s32.totalorder %s3369, %s3346
                %s3371 = scalar_select %p3370, 0, %s3369
                %s3372 = smul.u32 %s3371, 8
                %s3373 = smul.u32 %s3371, 8
                %s3374 = scalar_lea.vmem %s3349, %s3372 [#allocation6]
                %s3375 = scalar_lea.vmem %s3351, %s3373
              $region83: #{tpu_custom_call.1} parent=70 // loop_footer
                %s3355 = sadd.s32 %s3353, 1
              $region84: #{tpu_custom_call.1} parent=70 // loop_footer_branch
                %3352 = sbr.rel target = $region80
              $region85: #{tpu_custom_call.1} parent=70 // loop_exit
                _
            $region71: #{tpu_custom_call.1} parent=62 // pred_fallthru
              _
          $region63: #{tpu_custom_call.1} parent=58 // pred_fallthru
            _
          %3556 = vnop
        $region59: #{tpu_custom_call.1} parent=39 // pred_fallthru
          _
      $region40: #{tpu_custom_call.1} parent=5 // pred_fallthru
        _
      %p3557 = scmp.le.s32.totalorder 2, %s13
      // Predicated region
      $region108: #{tpu_custom_call.1} parent=5 // pred_check
        %p3558 = pneg %p3557
      $region109: #{tpu_custom_call.1} parent=5 // pred_check_branch
        %3560 = sbr.rel (%p3558) target = $region111
      $region110: #{tpu_custom_call.1} parent=5 // pred_region
        %s3561 = ssub.s32 %s13, 2
        // Predicated region
        $region112: #{tpu_custom_call.1} parent=110 // pred_check
          %p3562 = pneg %p152
        $region113: #{tpu_custom_call.1} parent=110 // pred_check_branch
          %3564 = sbr.rel (%p3562) target = $region115
        $region114: #{tpu_custom_call.1} parent=110 // pred_region
          %s3565 = sand.u32 %s137, 1
          %s3566 = sand.u32 %s137, 1
          %s3567 = smul.addr %s3566, 4096
          %s3568 = scalar_lea.vmem [#allocation6], %s3567
        $region115: #{tpu_custom_call.1} parent=110 // pred_fallthru
          _
      $region111: #{tpu_custom_call.1} parent=5 // pred_fallthru
        _
    $region6: #{tpu_custom_call.1} parent=1 // loop_footer
      %s17 = sadd.s32 1, %s13
    $region7: #{tpu_custom_call.1} parent=1 // loop_footer_branch
      %12 = sbr.rel target = $region3
    $region8: #{tpu_custom_call.1} parent=1 // loop_exit
      _
    %3569 = vsyncpa [#allocation3], 1
    %s3570 = scalar_lea.sflag [#allocation3], 1
    %3571 = vsyncpa %s3570, 1
    %3572 = vsyncpa [#allocation5], 1

</llo_original>
